<compile_context>
chip_gen: v7x
topology: tpu7x:2x2x1
jax: 0.10.0
libtpu: 0.0.40
codegen_flags: <defaults>
</compile_context>

<pallas_src>
import functools

import jax
import jax.numpy as jnp
from jax.experimental import pallas as pl


def _round_up(x, m):
    return (x + m - 1) // m * m


# ----------------------------- Pallas kernels ------------------------------ #

def _conv_bias_kernel(a_ref, w_ref, b_ref, o_ref, *, slope):
    """Single-block im2col matmul with fused bias (+ optional LeakyReLU)."""
    y = jnp.dot(a_ref[...], w_ref[...], preferred_element_type=jnp.float32)
    y = y + b_ref[...]
    if slope is not None:
        y = jnp.where(y >= 0.0, y, slope * y)
    o_ref[...] = y.astype(o_ref.dtype)


def _conv_bn_lrelu_kernel(a_ref, w_ref, g_ref, b_ref, o_ref, *,
                          inv_count, eps, slope):
    """Single-block im2col matmul with fused BatchNorm (batch stats) + LeakyReLU.

    The full M extent sits in the f32 matmul result, so per-channel batch
    statistics are computed from it directly.  Zero-padded M rows contribute
    exactly 0 to sum/sumsq (the conv has no bias); `inv_count` is 1/M over the
    valid rows only.  Padded channels have gamma == 0, so they normalize to 0.
    """
    y = jnp.dot(a_ref[...], w_ref[...], preferred_element_type=jnp.float32)
    mean = jnp.sum(y, axis=0, keepdims=True) * inv_count
    var = jnp.maximum(
        jnp.sum(y * y, axis=0, keepdims=True) * inv_count - mean * mean, 0.0)
    scale = g_ref[...] * jax.lax.rsqrt(var + eps)
    shift = b_ref[...] - mean * scale
    z = y * scale + shift
    o_ref[...] = jnp.where(z >= 0.0, z, slope * z).astype(o_ref.dtype)


def _conv_cout1_kernel(a_ref, w_ref, b_ref, o_ref):
    """Final conv (Cout == 1) as a VPU multiply + lane reduction (no MXU padding)."""
    a = a_ref[...].astype(jnp.float32)                       # (Mp, K)
    y = jnp.sum(a * w_ref[...], axis=1, keepdims=True)       # (Mp, 1)
    o_ref[...] = y + b_ref[...]


# ------------------------------ Layer wrappers ----------------------------- #

def _im2col(x_nhwc, kh, kw, stride, padding):
    """Zero-pad + tap slicing (XLA glue) -> (N*Ho*Wo, kh*kw*Cin) bf16 matrix."""
    # TODO(synk): im2col stays XLA glue; an in-kernel tap reduction would need
    # strided gathers on an NHWC VMEM slab whose tiny channel count is
    # layout-hostile for the (8,128) tiling.
    N, H, W, Cin = x_nhwc.shape
    Ho = (H + 2 * padding - kh) // stride + 1
    Wo = (W + 2 * padding - kw) // stride + 1
    xp = jnp.pad(x_nhwc.astype(jnp.bfloat16),
                 ((0, 0), (padding, padding), (padding, padding), (0, 0)))
    cols = [xp[:, i:i + stride * (Ho - 1) + 1:stride,
               j:j + stride * (Wo - 1) + 1:stride, :]
            for i in range(kh) for j in range(kw)]
    a = jnp.stack(cols, axis=3).reshape(N * Ho * Wo, kh * kw * Cin)
    return a, (N, Ho, Wo)


def _weight_matrix(w_oihw):
    # (Cout, Cin, kh, kw) -> (kh, kw, Cin, Cout) -> (kh*kw*Cin, Cout)
    Cout, Cin, kh, kw = w_oihw.shape
    return jnp.transpose(w_oihw, (2, 3, 1, 0)).reshape(kh * kw * Cin, Cout)


def conv_bias_layer(x_nhwc, w_oihw, bias, *, stride, padding, slope,
                    out_dtype=jnp.bfloat16):
    """Conv2d (+bias, optional LeakyReLU) as one grid-less Pallas MXU call."""
    Cout = w_oihw.shape[0]
    a, (N, Ho, Wo) = _im2col(x_nhwc, 4, 4, stride, padding)
    M, K = a.shape
    Mp = _round_up(M, 16)            # bf16 packed-sublane tile
    Cp = _round_up(Cout, 128)        # lane-dense output

    a_p = jnp.pad(a, ((0, Mp - M), (0, 0)))
    w_p = jnp.pad(_weight_matrix(w_oihw).astype(jnp.bfloat16),
                  ((0, 0), (0, Cp - Cout)))
    b = bias if bias is not None else jnp.zeros((Cout,), jnp.float32)
    b_p = jnp.pad(b.astype(jnp.float32), (0, Cp - Cout)).reshape(1, Cp)

    cost = pl.CostEstimate(
        flops=2 * Mp * K * Cp, transcendentals=0,
        bytes_accessed=a_p.size * 2 + w_p.size * 2 + b_p.size * 4
        + Mp * Cp * jnp.dtype(out_dtype).itemsize)
    out = pl.pallas_call(
        functools.partial(_conv_bias_kernel, slope=slope),
        out_shape=jax.ShapeDtypeStruct((Mp, Cp), out_dtype),
        cost_estimate=cost,
    )(a_p, w_p, b_p)
    return out[:M, :Cout].reshape(N, Ho, Wo, Cout)


def conv_bn_lrelu_layer(x_nhwc, w_oihw, gamma, beta, *, stride, padding,
                        slope=0.2, eps=1e-5, out_dtype=jnp.bfloat16):
    """Conv2d(bias=False) + BatchNorm2d (batch stats) + LeakyReLU, fully fused."""
    Cout = w_oihw.shape[0]
    a, (N, Ho, Wo) = _im2col(x_nhwc, 4, 4, stride, padding)
    M, K = a.shape
    Mp = _round_up(M, 16)
    Cp = _round_up(Cout, 128)

    a_p = jnp.pad(a, ((0, Mp - M), (0, 0)))
    w_p = jnp.pad(_weight_matrix(w_oihw).astype(jnp.bfloat16),
                  ((0, 0), (0, Cp - Cout)))
    g_p = jnp.pad(gamma.astype(jnp.float32), (0, Cp - Cout)).reshape(1, Cp)
    b_p = jnp.pad(beta.astype(jnp.float32), (0, Cp - Cout)).reshape(1, Cp)

    cost = pl.CostEstimate(
        flops=2 * Mp * K * Cp + 8 * Mp * Cp, transcendentals=Cp,
        bytes_accessed=a_p.size * 2 + w_p.size * 2 + 2 * Cp * 4
        + Mp * Cp * jnp.dtype(out_dtype).itemsize)
    out = pl.pallas_call(
        functools.partial(_conv_bn_lrelu_kernel, inv_count=1.0 / float(M),
                          eps=eps, slope=slope),
        out_shape=jax.ShapeDtypeStruct((Mp, Cp), out_dtype),
        cost_estimate=cost,
    )(a_p, w_p, g_p, b_p)
    return out[:M, :Cout].reshape(N, Ho, Wo, Cout)


def conv_cout1_layer(x_nhwc, w_oihw, bias, *, stride, padding):
    """Final Conv2d with a single output channel: VPU dot products, f32 output."""
    a, (N, Ho, Wo) = _im2col(x_nhwc, 4, 4, stride, padding)
    M, K = a.shape
    Mp = _round_up(M, 16)

    a_p = jnp.pad(a, ((0, Mp - M), (0, 0)))
    w_row = _weight_matrix(w_oihw).astype(jnp.float32).reshape(1, K)  # Cout == 1
    b_p = bias.astype(jnp.float32).reshape(1, 1)

    cost = pl.CostEstimate(
        flops=2 * Mp * K, transcendentals=0,
        bytes_accessed=a_p.size * 2 + w_row.size * 4 + Mp * 4)
    out = pl.pallas_call(
        _conv_cout1_kernel,
        out_shape=jax.ShapeDtypeStruct((Mp, 1), jnp.float32),
        cost_estimate=cost,
    )(a_p, w_row, b_p)
    return out[:M, :].reshape(N, Ho, Wo, 1)


# ------------------------------ Model assembly ----------------------------- #

def init_netd_params(key, in_channels, ndf=16, num_blocks=3):
    """Deterministic init matching PyTorch Conv2d/BatchNorm2d default shapes."""
    def conv_init(k, cout, cin, ksz, with_bias):
        fan_in = cin * ksz * ksz
        bound = 1.0 / (fan_in ** 0.5)
        kw_, kb_ = jax.random.split(k)
        w = jax.random.uniform(kw_, (cout, cin, ksz, ksz), jnp.float32, -bound, bound)
        b = (jax.random.uniform(kb_, (cout,), jnp.float32, -bound, bound)
             if with_bias else None)
        return w, b

    keys = jax.random.split(key, num_blocks + 2)
    params = {}
    params["conv0"] = conv_init(keys[0], ndf, in_channels, 4, True)
    n2 = 1
    for i in range(num_blocks):
        n1 = n2
        n2 = min(2 ** (i + 1), 8)
        params[f"conv{i + 1}"] = conv_init(keys[i + 1], n2 * ndf, n1 * ndf, 4, False)
        params[f"bn{i + 1}"] = (jnp.ones((n2 * ndf,), jnp.float32),   # gamma
                                jnp.zeros((n2 * ndf,), jnp.float32))  # beta
    params["conv_last"] = conv_init(keys[-1], 1, n2 * ndf, 4, True)
    return params


def netd_forward(params, x_nchw, num_blocks=3):
    x = jnp.transpose(x_nchw, (0, 2, 3, 1))                        # NCHW -> NHWC

    # Conv2d(in, ndf, 4, s=2, p=1, bias) + LeakyReLU(0.2): one fused call.
    w, b = params["conv0"]
    x = conv_bias_layer(x, w, b, stride=2, padding=1, slope=0.2)

    # [Conv2d(bias=False) + BatchNorm2d(batch stats) + LeakyReLU(0.2)]: one call each.
    for i in range(num_blocks):
        stride = min(num_blocks - i, 2)
        w, _ = params[f"conv{i + 1}"]
        gamma, beta = params[f"bn{i + 1}"]
        x = conv_bn_lrelu_layer(x, w, gamma, beta, stride=stride, padding=1)

    # Final Conv2d(n2*ndf, 1, 4, s=1, p=1, bias): VPU reduction kernel.
    w, b = params["conv_last"]
    x = conv_cout1_layer(x, w, b, stride=1, padding=1)

    return jnp.transpose(x, (0, 3, 1, 2))                          # NHWC -> NCHW


# ----------------------------------- Main ----------------------------------- #

if __name__ == "__main__":
    key = jax.random.PRNGKey(0)
    k_x, k_p = jax.random.split(key)

    in_channels, ndf, num_blocks = 4, 16, 3
    # Spatial 32 is the smallest power-of-two size that survives all 5 convs.
    x = jax.random.normal(k_x, (2, in_channels, 32, 32), jnp.float32)  # NCHW input

    params = init_netd_params(k_p, in_channels, ndf=ndf, num_blocks=num_blocks)

    fwd = jax.jit(netd_forward, static_argnames=("num_blocks",))
    out = fwd(params, x, num_blocks=num_blocks)
    out = jax.block_until_ready(out)

    # 32 -> 16 -> 8 -> 4 -> 3 -> 2 spatial; final conv has one output channel.
    assert out.shape == (2, 1, 2, 2), out.shape
    assert bool(jnp.all(jnp.isfinite(out)))
    print("KERNEL_OK")
</pallas_src>

<mosaic_0001>
module attributes {stable_mosaic.version = 11 : i64} {
  func.func @_conv_bias_kernel(%arg0: memref<512x64xbf16, #tpu.memory_space<vmem>>, %arg1: memref<64x128xbf16, #tpu.memory_space<vmem>>, %arg2: memref<1x128xf32, #tpu.memory_space<vmem>>, %arg3: memref<512x128xbf16, #tpu.memory_space<vmem>>) attributes {dimension_semantics = [], scalar_prefetch = 0 : i64, scratch_operands = 0 : i64, tpu.core_type = #tpu.core_type<tc>} {
    %c0 = arith.constant 0 : index
    %c0_0 = arith.constant 0 : index
    %0 = vector.load %arg0[%c0, %c0_0] : memref<512x64xbf16, #tpu.memory_space<vmem>>, vector<512x64xbf16>
    %c0_1 = arith.constant 0 : index
    %c0_2 = arith.constant 0 : index
    %1 = vector.load %arg1[%c0_1, %c0_2] : memref<64x128xbf16, #tpu.memory_space<vmem>>, vector<64x128xbf16>
    %cst = arith.constant dense<0.000000e+00> : vector<512x128xf32>
    %2 = tpu.matmul %0, %1, %cst {dimension_numbers = #tpu.dot_dimension_numbers<[1], [0], [0], [1], [0, 0, 1, 1], [], []>} : vector<512x64xbf16>, vector<64x128xbf16>, vector<512x128xf32> -> vector<512x128xf32>
    %c0_3 = arith.constant 0 : index
    %c0_4 = arith.constant 0 : index
    %3 = vector.load %arg2[%c0_3, %c0_4] : memref<1x128xf32, #tpu.memory_space<vmem>>, vector<1x128xf32>
    %4 = vector.broadcast %3 : vector<1x128xf32> to vector<512x128xf32>
    %5 = arith.addf %2, %4 : vector<512x128xf32>
    %cst_5 = arith.constant 0.000000e+00 : f32
    %6 = vector.broadcast %cst_5 : f32 to vector<512x128xf32>
    %7 = arith.cmpf oge, %5, %6 : vector<512x128xf32>
    %cst_6 = arith.constant 2.000000e-01 : f32
    %8 = vector.broadcast %cst_6 : f32 to vector<512x128xf32>
    %9 = arith.mulf %8, %5 : vector<512x128xf32>
    %10 = arith.select %7, %5, %9 : vector<512x128xi1>, vector<512x128xf32>
    %11 = arith.truncf %10 : vector<512x128xf32> to vector<512x128xbf16>
    %c0_7 = arith.constant 0 : index
    %c0_8 = arith.constant 0 : index
    %12 = vector.load %arg3[%c0_7, %c0_8] : memref<512x128xbf16, #tpu.memory_space<vmem>>, vector<512x128xbf16>
    tpu.vector_store %arg3[%c0_7, %c0_8], %11 {strides = array<i32>} : memref<512x128xbf16, #tpu.memory_space<vmem>>, vector<512x128xbf16>,
    return
  }
}

module attributes {stable_mosaic.version = 11 : i64} {
  func.func @_conv_bn_lrelu_kernel(%arg0: memref<128x256xbf16, #tpu.memory_space<vmem>>, %arg1: memref<256x128xbf16, #tpu.memory_space<vmem>>, %arg2: memref<1x128xf32, #tpu.memory_space<vmem>>, %arg3: memref<1x128xf32, #tpu.memory_space<vmem>>, %arg4: memref<128x128xbf16, #tpu.memory_space<vmem>>) attributes {dimension_semantics = [], scalar_prefetch = 0 : i64, scratch_operands = 0 : i64, tpu.core_type = #tpu.core_type<tc>} {
    %c0 = arith.constant 0 : index
    %c0_0 = arith.constant 0 : index
    %0 = vector.load %arg0[%c0, %c0_0] : memref<128x256xbf16, #tpu.memory_space<vmem>>, vector<128x256xbf16>
    %c0_1 = arith.constant 0 : index
    %c0_2 = arith.constant 0 : index
    %1 = vector.load %arg1[%c0_1, %c0_2] : memref<256x128xbf16, #tpu.memory_space<vmem>>, vector<256x128xbf16>
    %cst = arith.constant dense<0.000000e+00> : vector<128x128xf32>
    %2 = tpu.matmul %0, %1, %cst {dimension_numbers = #tpu.dot_dimension_numbers<[1], [0], [0], [1], [0, 0, 1, 1], [], []>} : vector<128x256xbf16>, vector<256x128xbf16>, vector<128x128xf32> -> vector<128x128xf32>
    %cst_3 = arith.constant dense<0.000000e+00> : vector<128xf32>
    %3 = vector.multi_reduction <add>, %2, %cst_3 [0] : vector<128x128xf32> to vector<128xf32>
    %4 = vector.shape_cast %3 : vector<128xf32> to vector<1x128xf32>
    %cst_4 = arith.constant 7.812500e-03 : f32
    %5 = vector.broadcast %cst_4 : f32 to vector<1x128xf32>
    %6 = arith.mulf %4, %5 : vector<1x128xf32>
    %7 = arith.mulf %2, %2 : vector<128x128xf32>
    %cst_5 = arith.constant dense<0.000000e+00> : vector<128xf32>
    %8 = vector.multi_reduction <add>, %7, %cst_5 [0] : vector<128x128xf32> to vector<128xf32>
    %9 = vector.shape_cast %8 : vector<128xf32> to vector<1x128xf32>
    %cst_6 = arith.constant 7.812500e-03 : f32
    %10 = vector.broadcast %cst_6 : f32 to vector<1x128xf32>
    %11 = arith.mulf %9, %10 : vector<1x128xf32>
    %12 = arith.mulf %6, %6 : vector<1x128xf32>
    %13 = arith.subf %11, %12 : vector<1x128xf32>
    %cst_7 = arith.constant 0.000000e+00 : f32
    %14 = vector.broadcast %cst_7 : f32 to vector<1x128xf32>
    %15 = arith.maximumf %13, %14 : vector<1x128xf32>
    %c0_8 = arith.constant 0 : index
    %c0_9 = arith.constant 0 : index
    %16 = vector.load %arg2[%c0_8, %c0_9] : memref<1x128xf32, #tpu.memory_space<vmem>>, vector<1x128xf32>
    %cst_10 = arith.constant 9.99999974E-6 : f32
    %17 = vector.broadcast %cst_10 : f32 to vector<1x128xf32>
    %18 = arith.addf %15, %17 : vector<1x128xf32>
    %19 = math.rsqrt %18 : vector<1x128xf32>
    %20 = arith.mulf %16, %19 : vector<1x128xf32>
    %c0_11 = arith.constant 0 : index
    %c0_12 = arith.constant 0 : index
    %21 = vector.load %arg3[%c0_11, %c0_12] : memref<1x128xf32, #tpu.memory_space<vmem>>, vector<1x128xf32>
    %22 = arith.mulf %6, %20 : vector<1x128xf32>
    %23 = arith.subf %21, %22 : vector<1x128xf32>
    %24 = vector.broadcast %20 : vector<1x128xf32> to vector<128x128xf32>
    %25 = arith.mulf %2, %24 : vector<128x128xf32>
    %26 = vector.broadcast %23 : vector<1x128xf32> to vector<128x128xf32>
    %27 = arith.addf %25, %26 : vector<128x128xf32>
    %cst_13 = arith.constant 0.000000e+00 : f32
    %28 = vector.broadcast %cst_13 : f32 to vector<128x128xf32>
    %29 = arith.cmpf oge, %27, %28 : vector<128x128xf32>
    %cst_14 = arith.constant 2.000000e-01 : f32
    %30 = vector.broadcast %cst_14 : f32 to vector<128x128xf32>
    %31 = arith.mulf %30, %27 : vector<128x128xf32>
    %32 = arith.select %29, %27, %31 : vector<128x128xi1>, vector<128x128xf32>
    %33 = arith.truncf %32 : vector<128x128xf32> to vector<128x128xbf16>
    %c0_15 = arith.constant 0 : index
    %c0_16 = arith.constant 0 : index
    %34 = vector.load %arg4[%c0_15, %c0_16] : memref<128x128xbf16, #tpu.memory_space<vmem>>, vector<128x128xbf16>
    tpu.vector_store %arg4[%c0_15, %c0_16], %33 {strides = array<i32>} : memref<128x128xbf16, #tpu.memory_space<vmem>>, vector<128x128xbf16>,
    return
  }
}

module attributes {stable_mosaic.version = 11 : i64} {
  func.func @_conv_bn_lrelu_kernel(%arg0: memref<32x512xbf16, #tpu.memory_space<vmem>>, %arg1: memref<512x128xbf16, #tpu.memory_space<vmem>>, %arg2: memref<1x128xf32, #tpu.memory_space<vmem>>, %arg3: memref<1x128xf32, #tpu.memory_space<vmem>>, %arg4: memref<32x128xbf16, #tpu.memory_space<vmem>>) attributes {dimension_semantics = [], scalar_prefetch = 0 : i64, scratch_operands = 0 : i64, tpu.core_type = #tpu.core_type<tc>} {
    %c0 = arith.constant 0 : index
    %c0_0 = arith.constant 0 : index
    %0 = vector.load %arg0[%c0, %c0_0] : memref<32x512xbf16, #tpu.memory_space<vmem>>, vector<32x512xbf16>
    %c0_1 = arith.constant 0 : index
    %c0_2 = arith.constant 0 : index
    %1 = vector.load %arg1[%c0_1, %c0_2] : memref<512x128xbf16, #tpu.memory_space<vmem>>, vector<512x128xbf16>
    %cst = arith.constant dense<0.000000e+00> : vector<32x128xf32>
    %2 = tpu.matmul %0, %1, %cst {dimension_numbers = #tpu.dot_dimension_numbers<[1], [0], [0], [1], [0, 0, 1, 1], [], []>} : vector<32x512xbf16>, vector<512x128xbf16>, vector<32x128xf32> -> vector<32x128xf32>
    %cst_3 = arith.constant dense<0.000000e+00> : vector<128xf32>
    %3 = vector.multi_reduction <add>, %2, %cst_3 [0] : vector<32x128xf32> to vector<128xf32>
    %4 = vector.shape_cast %3 : vector<128xf32> to vector<1x128xf32>
    %cst_4 = arith.constant 3.125000e-02 : f32
    %5 = vector.broadcast %cst_4 : f32 to vector<1x128xf32>
    %6 = arith.mulf %4, %5 : vector<1x128xf32>
    %7 = arith.mulf %2, %2 : vector<32x128xf32>
    %cst_5 = arith.constant dense<0.000000e+00> : vector<128xf32>
    %8 = vector.multi_reduction <add>, %7, %cst_5 [0] : vector<32x128xf32> to vector<128xf32>
    %9 = vector.shape_cast %8 : vector<128xf32> to vector<1x128xf32>
    %cst_6 = arith.constant 3.125000e-02 : f32
    %10 = vector.broadcast %cst_6 : f32 to vector<1x128xf32>
    %11 = arith.mulf %9, %10 : vector<1x128xf32>
    %12 = arith.mulf %6, %6 : vector<1x128xf32>
    %13 = arith.subf %11, %12 : vector<1x128xf32>
    %cst_7 = arith.constant 0.000000e+00 : f32
    %14 = vector.broadcast %cst_7 : f32 to vector<1x128xf32>
    %15 = arith.maximumf %13, %14 : vector<1x128xf32>
    %c0_8 = arith.constant 0 : index
    %c0_9 = arith.constant 0 : index
    %16 = vector.load %arg2[%c0_8, %c0_9] : memref<1x128xf32, #tpu.memory_space<vmem>>, vector<1x128xf32>
    %cst_10 = arith.constant 9.99999974E-6 : f32
    %17 = vector.broadcast %cst_10 : f32 to vector<1x128xf32>
    %18 = arith.addf %15, %17 : vector<1x128xf32>
    %19 = math.rsqrt %18 : vector<1x128xf32>
    %20 = arith.mulf %16, %19 : vector<1x128xf32>
    %c0_11 = arith.constant 0 : index
    %c0_12 = arith.constant 0 : index
    %21 = vector.load %arg3[%c0_11, %c0_12] : memref<1x128xf32, #tpu.memory_space<vmem>>, vector<1x128xf32>
    %22 = arith.mulf %6, %20 : vector<1x128xf32>
    %23 = arith.subf %21, %22 : vector<1x128xf32>
    %24 = vector.broadcast %20 : vector<1x128xf32> to vector<32x128xf32>
    %25 = arith.mulf %2, %24 : vector<32x128xf32>
    %26 = vector.broadcast %23 : vector<1x128xf32> to vector<32x128xf32>
    %27 = arith.addf %25, %26 : vector<32x128xf32>
    %cst_13 = arith.constant 0.000000e+00 : f32
    %28 = vector.broadcast %cst_13 : f32 to vector<32x128xf32>
    %29 = arith.cmpf oge, %27, %28 : vector<32x128xf32>
    %cst_14 = arith.constant 2.000000e-01 : f32
    %30 = vector.broadcast %cst_14 : f32 to vector<32x128xf32>
    %31 = arith.mulf %30, %27 : vector<32x128xf32>
    %32 = arith.select %29, %27, %31 : vector<32x128xi1>, vector<32x128xf32>
    %33 = arith.truncf %32 : vector<32x128xf32> to vector<32x128xbf16>
    %c0_15 = arith.constant 0 : index
    %c0_16 = arith.constant 0 : index
    %34 = vector.load %arg4[%c0_15, %c0_16] : memref<32x128xbf16, #tpu.memory_space<vmem>>, vector<32x128xbf16>
    tpu.vector_store %arg4[%c0_15, %c0_16], %33 {strides = array<i32>} : memref<32x128xbf16, #tpu.memory_space<vmem>>, vector<32x128xbf16>,
    return
  }
}

module attributes {stable_mosaic.version = 11 : i64} {
  func.func @_conv_bn_lrelu_kernel(%arg0: memref<32x1024xbf16, #tpu.memory_space<vmem>>, %arg1: memref<1024x128xbf16, #tpu.memory_space<vmem>>, %arg2: memref<1x128xf32, #tpu.memory_space<vmem>>, %arg3: memref<1x128xf32, #tpu.memory_space<vmem>>, %arg4: memref<32x128xbf16, #tpu.memory_space<vmem>>) attributes {dimension_semantics = [], scalar_prefetch = 0 : i64, scratch_operands = 0 : i64, tpu.core_type = #tpu.core_type<tc>} {
    %c0 = arith.constant 0 : index
    %c0_0 = arith.constant 0 : index
    %0 = vector.load %arg0[%c0, %c0_0] : memref<32x1024xbf16, #tpu.memory_space<vmem>>, vector<32x1024xbf16>
    %c0_1 = arith.constant 0 : index
    %c0_2 = arith.constant 0 : index
    %1 = vector.load %arg1[%c0_1, %c0_2] : memref<1024x128xbf16, #tpu.memory_space<vmem>>, vector<1024x128xbf16>
    %cst = arith.constant dense<0.000000e+00> : vector<32x128xf32>
    %2 = tpu.matmul %0, %1, %cst {dimension_numbers = #tpu.dot_dimension_numbers<[1], [0], [0], [1], [0, 0, 1, 1], [], []>} : vector<32x1024xbf16>, vector<1024x128xbf16>, vector<32x128xf32> -> vector<32x128xf32>
    %cst_3 = arith.constant dense<0.000000e+00> : vector<128xf32>
    %3 = vector.multi_reduction <add>, %2, %cst_3 [0] : vector<32x128xf32> to vector<128xf32>
    %4 = vector.shape_cast %3 : vector<128xf32> to vector<1x128xf32>
    %cst_4 = arith.constant 0.055555556 : f32
    %5 = vector.broadcast %cst_4 : f32 to vector<1x128xf32>
    %6 = arith.mulf %4, %5 : vector<1x128xf32>
    %7 = arith.mulf %2, %2 : vector<32x128xf32>
    %cst_5 = arith.constant dense<0.000000e+00> : vector<128xf32>
    %8 = vector.multi_reduction <add>, %7, %cst_5 [0] : vector<32x128xf32> to vector<128xf32>
    %9 = vector.shape_cast %8 : vector<128xf32> to vector<1x128xf32>
    %cst_6 = arith.constant 0.055555556 : f32
    %10 = vector.broadcast %cst_6 : f32 to vector<1x128xf32>
    %11 = arith.mulf %9, %10 : vector<1x128xf32>
    %12 = arith.mulf %6, %6 : vector<1x128xf32>
    %13 = arith.subf %11, %12 : vector<1x128xf32>
    %cst_7 = arith.constant 0.000000e+00 : f32
    %14 = vector.broadcast %cst_7 : f32 to vector<1x128xf32>
    %15 = arith.maximumf %13, %14 : vector<1x128xf32>
    %c0_8 = arith.constant 0 : index
    %c0_9 = arith.constant 0 : index
    %16 = vector.load %arg2[%c0_8, %c0_9] : memref<1x128xf32, #tpu.memory_space<vmem>>, vector<1x128xf32>
    %cst_10 = arith.constant 9.99999974E-6 : f32
    %17 = vector.broadcast %cst_10 : f32 to vector<1x128xf32>
    %18 = arith.addf %15, %17 : vector<1x128xf32>
    %19 = math.rsqrt %18 : vector<1x128xf32>
    %20 = arith.mulf %16, %19 : vector<1x128xf32>
    %c0_11 = arith.constant 0 : index
    %c0_12 = arith.constant 0 : index
    %21 = vector.load %arg3[%c0_11, %c0_12] : memref<1x128xf32, #tpu.memory_space<vmem>>, vector<1x128xf32>
    %22 = arith.mulf %6, %20 : vector<1x128xf32>
    %23 = arith.subf %21, %22 : vector<1x128xf32>
    %24 = vector.broadcast %20 : vector<1x128xf32> to vector<32x128xf32>
    %25 = arith.mulf %2, %24 : vector<32x128xf32>
    %26 = vector.broadcast %23 : vector<1x128xf32> to vector<32x128xf32>
    %27 = arith.addf %25, %26 : vector<32x128xf32>
    %cst_13 = arith.constant 0.000000e+00 : f32
    %28 = vector.broadcast %cst_13 : f32 to vector<32x128xf32>
    %29 = arith.cmpf oge, %27, %28 : vector<32x128xf32>
    %cst_14 = arith.constant 2.000000e-01 : f32
    %30 = vector.broadcast %cst_14 : f32 to vector<32x128xf32>
    %31 = arith.mulf %30, %27 : vector<32x128xf32>
    %32 = arith.select %29, %27, %31 : vector<32x128xi1>, vector<32x128xf32>
    %33 = arith.truncf %32 : vector<32x128xf32> to vector<32x128xbf16>
    %c0_15 = arith.constant 0 : index
    %c0_16 = arith.constant 0 : index
    %34 = vector.load %arg4[%c0_15, %c0_16] : memref<32x128xbf16, #tpu.memory_space<vmem>>, vector<32x128xbf16>
    tpu.vector_store %arg4[%c0_15, %c0_16], %33 {strides = array<i32>} : memref<32x128xbf16, #tpu.memory_space<vmem>>, vector<32x128xbf16>,
    return
  }
}

module attributes {stable_mosaic.version = 11 : i64} {
  func.func @_conv_cout1_kernel(%arg0: memref<16x2048xbf16, #tpu.memory_space<vmem>>, %arg1: memref<1x2048xf32, #tpu.memory_space<vmem>>, %arg2: memref<1x1xf32, #tpu.memory_space<vmem>>, %arg3: memref<16x1xf32, #tpu.memory_space<vmem>>) attributes {dimension_semantics = [], scalar_prefetch = 0 : i64, scratch_operands = 0 : i64, tpu.core_type = #tpu.core_type<tc>} {
    %c0 = arith.constant 0 : index
    %c0_0 = arith.constant 0 : index
    %0 = vector.load %arg0[%c0, %c0_0] : memref<16x2048xbf16, #tpu.memory_space<vmem>>, vector<16x2048xbf16>
    %1 = arith.extf %0 : vector<16x2048xbf16> to vector<16x2048xf32>
    %c0_1 = arith.constant 0 : index
    %c0_2 = arith.constant 0 : index
    %2 = vector.load %arg1[%c0_1, %c0_2] : memref<1x2048xf32, #tpu.memory_space<vmem>>, vector<1x2048xf32>
    %3 = vector.broadcast %2 : vector<1x2048xf32> to vector<16x2048xf32>
    %4 = arith.mulf %1, %3 : vector<16x2048xf32>
    %cst = arith.constant dense<0.000000e+00> : vector<16xf32>
    %5 = vector.multi_reduction <add>, %4, %cst [1] : vector<16x2048xf32> to vector<16xf32>
    %6 = vector.shape_cast %5 : vector<16xf32> to vector<16x1xf32>
    %c0_3 = arith.constant 0 : index
    %c0_4 = arith.constant 0 : index
    %7 = vector.load %arg2[%c0_3, %c0_4] : memref<1x1xf32, #tpu.memory_space<vmem>>, vector<1x1xf32>
    %8 = vector.broadcast %7 : vector<1x1xf32> to vector<16x1xf32>
    %9 = arith.addf %6, %8 : vector<16x1xf32>
    %c0_5 = arith.constant 0 : index
    %c0_6 = arith.constant 0 : index
    %10 = vector.load %arg3[%c0_5, %c0_6] : memref<16x1xf32, #tpu.memory_space<vmem>>, vector<16x1xf32>
    tpu.vector_store %arg3[%c0_5, %c0_6], %9 {strides = array<i32>} : memref<16x1xf32, #tpu.memory_space<vmem>>, vector<16x1xf32>,
    return
  }
}

</mosaic_0001>

<llo_original>
// kernel: netd_forward.5
$region0: #{netd_forward.5}
  #allocation0 [shape = 'u32[]', space=smem, size = 0x4, offset = 0x4, fixed_abs, tag = 'smem constant byte address 0x4 - core index']
  #allocation1 [shape = 'u32[144,128]{1,0:T(1,128)}', space=vmem, size = 0x12000, scoped, tag = 'internal scratch']
  %s0 = inlined_call_operand.vmem [shape: bf16[512,64], index: 0, kind: input, shape index: {}]
  %s1 = inlined_call_operand.vmem [shape: bf16[64,128], index: 1, kind: input, shape index: {}]
  %s2 = inlined_call_operand.vmem [shape: f32[1,128], index: 2, kind: input, shape index: {}]
  %s3 = inlined_call_operand.vmem [shape: bf16[512,128], index: 3, kind: output, shape index: {}]
  %s4 = sld [smem:[#allocation0]]
  $region22: #{netd_forward.5} parent=0
    _
  %s6 = ssub.s32 1, %s4
  %s7 = scalar_select 0, %s6, %s4
  // Predicated region
  $region2: #{netd_forward.5} parent=0 // pred_check
    _
  $region3: #{netd_forward.5} parent=0 // pred_check_branch
    %9 = sbr.rel (0) target = $region5
  $region4: #{netd_forward.5} parent=0 // pred_region
    _
  $region5: #{netd_forward.5} parent=0 // pred_fallthru
    _
  // Predicated region
  $region6: #{netd_forward.5} parent=0 // pred_check
    _
  $region7: #{netd_forward.5} parent=0 // pred_check_branch
    %11 = sbr.rel (0) target = $region9
  $region8: #{netd_forward.5} parent=0 // pred_region
    _
  $region9: #{netd_forward.5} parent=0 // pred_fallthru
    _
  // Predicated region
  $region10: #{netd_forward.5} parent=0 // pred_check
    _
  $region11: #{netd_forward.5} parent=0 // pred_check_branch
    %13 = sbr.rel (0) target = $region13
  $region12: #{netd_forward.5} parent=0 // pred_region
    _
  $region13: #{netd_forward.5} parent=0 // pred_fallthru
    _
  %v15 = vld [vmem:[%s0] sm:$0xf]
  %v16 = vld [vmem:[%s0 + $0x4] sm:$0xf]
  %v17 = vld [vmem:[%s0 + $0x8] sm:$0xf]
  %v18 = vld [vmem:[%s0 + $0xc] sm:$0xf]
  %v19 = vld [vmem:[%s0 + $0x10] sm:$0xf]
  %v20 = vld [vmem:[%s0 + $0x14] sm:$0xf]
  %v21 = vld [vmem:[%s0 + $0x18] sm:$0xf]
  %v22 = vld [vmem:[%s0 + $0x1c] sm:$0xf]
  %v23 = vld [vmem:[%s0 + $0x20] sm:$0xf]
  %v24 = vld [vmem:[%s0 + $0x24] sm:$0xf]
  %v25 = vld [vmem:[%s0 + $0x28] sm:$0xf]
  %v26 = vld [vmem:[%s0 + $0x2c] sm:$0xf]
  %v27 = vld [vmem:[%s0 + $0x30] sm:$0xf]
  %v28 = vld [vmem:[%s0 + $0x34] sm:$0xf]
  %v29 = vld [vmem:[%s0 + $0x38] sm:$0xf]
  %v30 = vld [vmem:[%s0 + $0x3c] sm:$0xf]
  %v31 = vld [vmem:[%s0 + $0x40] sm:$0xf]
  %v32 = vld [vmem:[%s0 + $0x44] sm:$0xf]
  %v33 = vld [vmem:[%s0 + $0x48] sm:$0xf]
  %v34 = vld [vmem:[%s0 + $0x4c] sm:$0xf]
  %v35 = vld [vmem:[%s0 + $0x50] sm:$0xf]
  %v36 = vld [vmem:[%s0 + $0x54] sm:$0xf]
  %v37 = vld [vmem:[%s0 + $0x58] sm:$0xf]
  %v38 = vld [vmem:[%s0 + $0x5c] sm:$0xf]
  %v39 = vld [vmem:[%s0 + $0x60] sm:$0xf]
  %v40 = vld [vmem:[%s0 + $0x64] sm:$0xf]
  %v41 = vld [vmem:[%s0 + $0x68] sm:$0xf]
  %v42 = vld [vmem:[%s0 + $0x6c] sm:$0xf]
  %v43 = vld [vmem:[%s0 + $0x70] sm:$0xf]
  %v44 = vld [vmem:[%s0 + $0x74] sm:$0xf]
  %v45 = vld [vmem:[%s0 + $0x78] sm:$0xf]
  %v46 = vld [vmem:[%s0 + $0x7c] sm:$0xf]
  %v47 = vld [vmem:[%s0 + $0x80] sm:$0xf]
  %v48 = vld [vmem:[%s0 + $0x84] sm:$0xf]
  %v49 = vld [vmem:[%s0 + $0x88] sm:$0xf]
  %v50 = vld [vmem:[%s0 + $0x8c] sm:$0xf]
  %v51 = vld [vmem:[%s0 + $0x90] sm:$0xf]
  %v52 = vld [vmem:[%s0 + $0x94] sm:$0xf]
  %v53 = vld [vmem:[%s0 + $0x98] sm:$0xf]
  %v54 = vld [vmem:[%s0 + $0x9c] sm:$0xf]
  %v55 = vld [vmem:[%s0 + $0xa0] sm:$0xf]
  %v56 = vld [vmem:[%s0 + $0xa4] sm:$0xf]
  %v57 = vld [vmem:[%s0 + $0xa8] sm:$0xf]
  %v58 = vld [vmem:[%s0 + $0xac] sm:$0xf]
  %v59 = vld [vmem:[%s0 + $0xb0] sm:$0xf]
  %v60 = vld [vmem:[%s0 + $0xb4] sm:$0xf]
  %v61 = vld [vmem:[%s0 + $0xb8] sm:$0xf]
  %v62 = vld [vmem:[%s0 + $0xbc] sm:$0xf]
  %v63 = vld [vmem:[%s0 + $0xc0] sm:$0xf]
  %v64 = vld [vmem:[%s0 + $0xc4] sm:$0xf]
  %v65 = vld [vmem:[%s0 + $0xc8] sm:$0xf]
  %v66 = vld [vmem:[%s0 + $0xcc] sm:$0xf]
  %v67 = vld [vmem:[%s0 + $0xd0] sm:$0xf]
  %v68 = vld [vmem:[%s0 + $0xd4] sm:$0xf]
  %v69 = vld [vmem:[%s0 + $0xd8] sm:$0xf]
  %v70 = vld [vmem:[%s0 + $0xdc] sm:$0xf]
  %v71 = vld [vmem:[%s0 + $0xe0] sm:$0xf]
  %v72 = vld [vmem:[%s0 + $0xe4] sm:$0xf]
  %v73 = vld [vmem:[%s0 + $0xe8] sm:$0xf]
  %v74 = vld [vmem:[%s0 + $0xec] sm:$0xf]
  %v75 = vld [vmem:[%s0 + $0xf0] sm:$0xf]
  %v76 = vld [vmem:[%s0 + $0xf4] sm:$0xf]
  %v77 = vld [vmem:[%s0 + $0xf8] sm:$0xf]
  %v78 = vld [vmem:[%s0 + $0xfc] sm:$0xf]
  %v79 = vld [vmem:[%s1] sm:$0xf]
  %v80 = vld [vmem:[%s1 + $0x4] sm:$0xf]
  %v81 = vld [vmem:[%s1 + $0x8] sm:$0xf]
  %v82 = vld [vmem:[%s1 + $0xc] sm:$0xf]
  %v83 = vld [vmem:[%s1 + $0x10] sm:$0xf]
  %v84 = vld [vmem:[%s1 + $0x14] sm:$0xf]
  %v85 = vld [vmem:[%s1 + $0x18] sm:$0xf]
  %v86 = vld [vmem:[%s1 + $0x1c] sm:$0xf]
  %v87 = vld [vmem:[%s2] sm:$0x1]
  %v89 = vlaneseq
  %v90 = vshrl.u32 %v89, 7
  %v91 = vsub.s32 0, %v90
  %v92 = vrot.slane %v87, %v91
  %v158 = vunpack.c.l.b16 %v15
  %v159 = vunpack.c.l.b16 %v16
  %v160 = vunpack.c.l.b16 %v17
  %v161 = vunpack.c.l.b16 %v18
  %v162 = vunpack.c.l.b16 %v19
  %v163 = vunpack.c.l.b16 %v20
  %v164 = vunpack.c.l.b16 %v21
  %v165 = vunpack.c.l.b16 %v22
  %v166 = vunpack.c.l.b16 %v23
  %v167 = vunpack.c.l.b16 %v24
  %v168 = vunpack.c.l.b16 %v25
  %v169 = vunpack.c.l.b16 %v26
  %v170 = vunpack.c.l.b16 %v27
  %v171 = vunpack.c.l.b16 %v28
  %v172 = vunpack.c.l.b16 %v29
  %v173 = vunpack.c.l.b16 %v30
  %v174 = vunpack.c.l.b16 %v31
  %v175 = vunpack.c.l.b16 %v32
  %v176 = vunpack.c.l.b16 %v33
  %v177 = vunpack.c.l.b16 %v34
  %v178 = vunpack.c.l.b16 %v35
  %v179 = vunpack.c.l.b16 %v36
  %v180 = vunpack.c.l.b16 %v37
  %v181 = vunpack.c.l.b16 %v38
  %v182 = vunpack.c.l.b16 %v39
  %v183 = vunpack.c.l.b16 %v40
  %v184 = vunpack.c.l.b16 %v41
  %v185 = vunpack.c.l.b16 %v42
  %v186 = vunpack.c.l.b16 %v43
  %v187 = vunpack.c.l.b16 %v44
  %v188 = vunpack.c.l.b16 %v45
  %v189 = vunpack.c.l.b16 %v46
  %v190 = vunpack.c.l.b16 %v47
  %v191 = vunpack.c.l.b16 %v48
  %v192 = vunpack.c.l.b16 %v49
  %v193 = vunpack.c.l.b16 %v50
  %v194 = vunpack.c.l.b16 %v51
  %v195 = vunpack.c.l.b16 %v52
  %v196 = vunpack.c.l.b16 %v53
  %v197 = vunpack.c.l.b16 %v54
  %v198 = vunpack.c.l.b16 %v55
  %v199 = vunpack.c.l.b16 %v56
  %v200 = vunpack.c.l.b16 %v57
  %v201 = vunpack.c.l.b16 %v58
  %v202 = vunpack.c.l.b16 %v59
  %v203 = vunpack.c.l.b16 %v60
  %v204 = vunpack.c.l.b16 %v61
  %v205 = vunpack.c.l.b16 %v62
  %v206 = vunpack.c.l.b16 %v63
  %v207 = vunpack.c.l.b16 %v64
  %v208 = vunpack.c.l.b16 %v65
  %v209 = vunpack.c.l.b16 %v66
  %v210 = vunpack.c.l.b16 %v67
  %v211 = vunpack.c.l.b16 %v68
  %v212 = vunpack.c.l.b16 %v69
  %v213 = vunpack.c.l.b16 %v70
  %v214 = vunpack.c.l.b16 %v71
  %v215 = vunpack.c.l.b16 %v72
  %v216 = vunpack.c.l.b16 %v73
  %v217 = vunpack.c.l.b16 %v74
  %v218 = vunpack.c.l.b16 %v75
  %v219 = vunpack.c.l.b16 %v76
  %v220 = vunpack.c.l.b16 %v77
  %v221 = vunpack.c.l.b16 %v78
  %v222 = vpack.c.b16 %v159, %v158
  %v223 = vpack.c.b16 %v161, %v160
  %v224 = vpack.c.b16 %v163, %v162
  %v225 = vpack.c.b16 %v165, %v164
  %v226 = vpack.c.b16 %v167, %v166
  %v227 = vpack.c.b16 %v169, %v168
  %v228 = vpack.c.b16 %v171, %v170
  %v229 = vpack.c.b16 %v173, %v172
  %v230 = vpack.c.b16 %v175, %v174
  %v231 = vpack.c.b16 %v177, %v176
  %v232 = vpack.c.b16 %v179, %v178
  %v233 = vpack.c.b16 %v181, %v180
  %v234 = vpack.c.b16 %v183, %v182
  %v235 = vpack.c.b16 %v185, %v184
  %v236 = vpack.c.b16 %v187, %v186
  %v237 = vpack.c.b16 %v189, %v188
  %v238 = vpack.c.b16 %v191, %v190
  %v239 = vpack.c.b16 %v193, %v192
  %v240 = vpack.c.b16 %v195, %v194
  %v241 = vpack.c.b16 %v197, %v196
  %v242 = vpack.c.b16 %v199, %v198
  %v243 = vpack.c.b16 %v201, %v200
  %v244 = vpack.c.b16 %v203, %v202
  %v245 = vpack.c.b16 %v205, %v204
  %v246 = vpack.c.b16 %v207, %v206
  %v247 = vpack.c.b16 %v209, %v208
  %v248 = vpack.c.b16 %v211, %v210
  %v249 = vpack.c.b16 %v213, %v212
  %v250 = vpack.c.b16 %v215, %v214
  %v251 = vpack.c.b16 %v217, %v216
  %v252 = vpack.c.b16 %v219, %v218
  %v253 = vpack.c.b16 %v221, %v220
  %v262 = vunpack.c.l.b16 %v79
  %v263 = vunpack.c.l.b16 %v80
  %v264 = vunpack.c.l.b16 %v81
  %v265 = vunpack.c.l.b16 %v82
  %v266 = vunpack.c.l.b16 %v83
  %v267 = vunpack.c.l.b16 %v84
  %v268 = vunpack.c.l.b16 %v85
  %v269 = vunpack.c.l.b16 %v86
  %v270 = vpack.c.b16 %v263, %v262
  %v271 = vpack.c.b16 %v265, %v264
  %v272 = vpack.c.b16 %v267, %v266
  %v273 = vpack.c.b16 %v269, %v268
  %vm278 = vcmask 523264
  %v280 = vsel %vm278, %v222, 0
  %v283 = vsel %vm278, %v223, 0
  %v286 = vsel %vm278, %v224, 0
  %v289 = vsel %vm278, %v225, 0
  %v292 = vsel %vm278, %v226, 0
  %v295 = vsel %vm278, %v227, 0
  %v298 = vsel %vm278, %v228, 0
  %v301 = vsel %vm278, %v229, 0
  %v304 = vsel %vm278, %v230, 0
  %v307 = vsel %vm278, %v231, 0
  %v310 = vsel %vm278, %v232, 0
  %v313 = vsel %vm278, %v233, 0
  %v316 = vsel %vm278, %v234, 0
  %v319 = vsel %vm278, %v235, 0
  %v322 = vsel %vm278, %v236, 0
  %v325 = vsel %vm278, %v237, 0
  %v328 = vsel %vm278, %v238, 0
  %v331 = vsel %vm278, %v239, 0
  %v334 = vsel %vm278, %v240, 0
  %v337 = vsel %vm278, %v241, 0
  %v340 = vsel %vm278, %v242, 0
  %v343 = vsel %vm278, %v243, 0
  %v346 = vsel %vm278, %v244, 0
  %v349 = vsel %vm278, %v245, 0
  %v352 = vsel %vm278, %v246, 0
  %v355 = vsel %vm278, %v247, 0
  %v358 = vsel %vm278, %v248, 0
  %v361 = vsel %vm278, %v249, 0
  %v364 = vsel %vm278, %v250, 0
  %v367 = vsel %vm278, %v251, 0
  %v370 = vsel %vm278, %v252, 0
  %v373 = vsel %vm278, %v253, 0
  %375 = vmatprep.subr.bf16.mxu0 0
  %376 = vmatpush1.bf16.msra.mxu0 %v270
  %377 = vmatprep.subr.bf16.mxu0 0
  %378 = vmatpush1.bf16.msra.mxu0 %v271
  %379 = vmatprep.subr.bf16.mxu0 0
  %380 = vmatpush1.bf16.msra.mxu0 %v272
  %381 = vmatprep.subr.bf16.mxu0 0
  %382 = vmatpush1.bf16.msra.mxu0 %v273
  %383 = vmatprep.subr.bf16.mxu0 0
  %384 = vmatpush1.bf16.msra.mxu0 0
  %385 = vmatprep.subr.bf16.mxu0 0
  %386 = vmatpush1.bf16.msra.mxu0 0
  %387 = vmatprep.subr.bf16.mxu0 0
  %388 = vmatpush1.bf16.msra.mxu0 0
  %389 = vmatprep.subr.bf16.mxu0 0
  %390 = vmatpush1.bf16.msra.mxu0 0
  %391 = vmatprep.subr.bf16.mxu0 0
  %392 = vmatpush1.bf16.msra.mxu0 0
  %393 = vmatprep.subr.bf16.mxu0 0
  %394 = vmatpush1.bf16.msra.mxu0 0
  %395 = vmatprep.subr.bf16.mxu0 0
  %396 = vmatpush1.bf16.msra.mxu0 0
  %397 = vmatprep.subr.bf16.mxu0 0
  %398 = vmatpush1.bf16.msra.mxu0 0
  %399 = vmatprep.subr.bf16.mxu0 0
  %400 = vmatpush1.bf16.msra.mxu0 0
  %401 = vmatprep.subr.bf16.mxu0 0
  %402 = vmatpush1.bf16.msra.mxu0 0
  %403 = vmatprep.subr.bf16.mxu0 0
  %404 = vmatpush1.bf16.msra.mxu0 0
  %405 = vmatprep.subr.bf16.mxu0 0
  %406 = vmatpush1.bf16.msra.mxu0 0
  %407 = vmatprep.mubr.bf16.mxu0 0
  %408 = vmatmul.mubr.bf16.gmra.mrb[0].mxu0 %v280
  %v409 = vpop.f32.mrb[0].mxu0
  %v410 = vadd.f32 %v92, %v409
  %v411 = vpop.f32.mrb[0].mxu0
  %v412 = vpop.f32.mrb[0].mxu0
  %v413 = vadd.f32 %v92, %v412
  %v414 = vpop.f32.mrb[0].mxu0
  %415 = vmatprep.mubr.bf16.mxu0 0
  %416 = vmatmul.mubr.bf16.gmra.mrb[0].mxu0 %v283
  %v417 = vpop.f32.mrb[0].mxu0
  %v418 = vadd.f32 %v92, %v417
  %v419 = vpop.f32.mrb[0].mxu0
  %v420 = vpop.f32.mrb[0].mxu0
  %v421 = vadd.f32 %v92, %v420
  %v422 = vpop.f32.mrb[0].mxu0
  %423 = vmatprep.mubr.bf16.mxu0 0
  %424 = vmatmul.mubr.bf16.gmra.mrb[0].mxu0 %v286
  %v425 = vpop.f32.mrb[0].mxu0
  %v426 = vadd.f32 %v92, %v425
  %v427 = vpop.f32.mrb[0].mxu0
  %v428 = vpop.f32.mrb[0].mxu0
  %v429 = vadd.f32 %v92, %v428
  %v430 = vpop.f32.mrb[0].mxu0
  %431 = vmatprep.mubr.bf16.mxu0 0
  %432 = vmatmul.mubr.bf16.gmra.mrb[0].mxu0 %v289
  %v433 = vpop.f32.mrb[0].mxu0
  %v434 = vadd.f32 %v92, %v433
  %v435 = vpop.f32.mrb[0].mxu0
  %v436 = vpop.f32.mrb[0].mxu0
  %v437 = vadd.f32 %v92, %v436
  %v438 = vpop.f32.mrb[0].mxu0
  %439 = vmatprep.mubr.bf16.mxu0 0
  %440 = vmatmul.mubr.bf16.gmra.mrb[0].mxu0 %v292
  %v441 = vpop.f32.mrb[0].mxu0
  %v442 = vadd.f32 %v92, %v441
  %v443 = vpop.f32.mrb[0].mxu0
  %v444 = vpop.f32.mrb[0].mxu0
  %v445 = vadd.f32 %v92, %v444
  %v446 = vpop.f32.mrb[0].mxu0
  %447 = vmatprep.mubr.bf16.mxu0 0
  %448 = vmatmul.mubr.bf16.gmra.mrb[0].mxu0 %v295
  %v449 = vpop.f32.mrb[0].mxu0
  %v450 = vadd.f32 %v92, %v449
  %v451 = vpop.f32.mrb[0].mxu0
  %v452 = vpop.f32.mrb[0].mxu0
  %v453 = vadd.f32 %v92, %v452
  %v454 = vpop.f32.mrb[0].mxu0
  %455 = vmatprep.mubr.bf16.mxu0 0
  %456 = vmatmul.mubr.bf16.gmra.mrb[0].mxu0 %v298
  %v457 = vpop.f32.mrb[0].mxu0
  %v458 = vadd.f32 %v92, %v457
  %v459 = vpop.f32.mrb[0].mxu0
  %v460 = vpop.f32.mrb[0].mxu0
  %v461 = vadd.f32 %v92, %v460
  %v462 = vpop.f32.mrb[0].mxu0
  %463 = vmatprep.mubr.bf16.mxu0 0
  %464 = vmatmul.mubr.bf16.gmra.mrb[0].mxu0 %v301
  %v465 = vpop.f32.mrb[0].mxu0
  %v466 = vadd.f32 %v92, %v465
  %v467 = vpop.f32.mrb[0].mxu0
  %v468 = vpop.f32.mrb[0].mxu0
  %v469 = vadd.f32 %v92, %v468
  %v470 = vpop.f32.mrb[0].mxu0
  %471 = vmatprep.mubr.bf16.mxu0 0
  %472 = vmatmul.mubr.bf16.gmra.mrb[0].mxu0 %v304
  %v473 = vpop.f32.mrb[0].mxu0
  %v474 = vadd.f32 %v92, %v473
  %v475 = vpop.f32.mrb[0].mxu0
  %v476 = vpop.f32.mrb[0].mxu0
  %v477 = vadd.f32 %v92, %v476
  %v478 = vpop.f32.mrb[0].mxu0
  %479 = vmatprep.mubr.bf16.mxu0 0
  %480 = vmatmul.mubr.bf16.gmra.mrb[0].mxu0 %v307
  %v481 = vpop.f32.mrb[0].mxu0
  %v482 = vadd.f32 %v92, %v481
  %v483 = vpop.f32.mrb[0].mxu0
  %v484 = vpop.f32.mrb[0].mxu0
  %v485 = vadd.f32 %v92, %v484
  %v486 = vpop.f32.mrb[0].mxu0
  %487 = vmatprep.mubr.bf16.mxu0 0
  %488 = vmatmul.mubr.bf16.gmra.mrb[0].mxu0 %v310
  %v489 = vpop.f32.mrb[0].mxu0
  %v490 = vadd.f32 %v92, %v489
  %v491 = vpop.f32.mrb[0].mxu0
  %v492 = vpop.f32.mrb[0].mxu0
  %v493 = vadd.f32 %v92, %v492
  %v494 = vpop.f32.mrb[0].mxu0
  %495 = vmatprep.mubr.bf16.mxu0 0
  %496 = vmatmul.mubr.bf16.gmra.mrb[0].mxu0 %v313
  %v497 = vpop.f32.mrb[0].mxu0
  %v498 = vadd.f32 %v92, %v497
  %v499 = vpop.f32.mrb[0].mxu0
  %v500 = vpop.f32.mrb[0].mxu0
  %v501 = vadd.f32 %v92, %v500
  %v502 = vpop.f32.mrb[0].mxu0
  %503 = vmatprep.mubr.bf16.mxu0 0
  %504 = vmatmul.mubr.bf16.gmra.mrb[0].mxu0 %v316
  %v505 = vpop.f32.mrb[0].mxu0
  %v506 = vadd.f32 %v92, %v505
  %v507 = vpop.f32.mrb[0].mxu0
  %v508 = vpop.f32.mrb[0].mxu0
  %v509 = vadd.f32 %v92, %v508
  %v510 = vpop.f32.mrb[0].mxu0
  %511 = vmatprep.mubr.bf16.mxu0 0
  %512 = vmatmul.mubr.bf16.gmra.mrb[0].mxu0 %v319
  %v513 = vpop.f32.mrb[0].mxu0
  %v514 = vadd.f32 %v92, %v513
  %v515 = vpop.f32.mrb[0].mxu0
  %v516 = vpop.f32.mrb[0].mxu0
  %v517 = vadd.f32 %v92, %v516
  %v518 = vpop.f32.mrb[0].mxu0
  %519 = vmatprep.mubr.bf16.mxu0 0
  %520 = vmatmul.mubr.bf16.gmra.mrb[0].mxu0 %v322
  %v521 = vpop.f32.mrb[0].mxu0
  %v522 = vadd.f32 %v92, %v521
  %v523 = vpop.f32.mrb[0].mxu0
  %v524 = vpop.f32.mrb[0].mxu0
  %v525 = vadd.f32 %v92, %v524
  %v526 = vpop.f32.mrb[0].mxu0
  %527 = vmatprep.mubr.bf16.mxu0 0
  %528 = vmatmul.mubr.bf16.gmra.mrb[0].mxu0 %v325
  %v529 = vpop.f32.mrb[0].mxu0
  %v530 = vadd.f32 %v92, %v529
  %v531 = vpop.f32.mrb[0].mxu0
  %v532 = vpop.f32.mrb[0].mxu0
  %v533 = vadd.f32 %v92, %v532
  %v534 = vpop.f32.mrb[0].mxu0
  %535 = vmatprep.mubr.bf16.mxu0 0
  %536 = vmatmul.mubr.bf16.gmra.mrb[0].mxu0 %v328
  %v537 = vpop.f32.mrb[0].mxu0
  %v538 = vadd.f32 %v92, %v537
  %v539 = vpop.f32.mrb[0].mxu0
  %v540 = vpop.f32.mrb[0].mxu0
  %v541 = vadd.f32 %v92, %v540
  %v542 = vpop.f32.mrb[0].mxu0
  %543 = vmatprep.mubr.bf16.mxu0 0
  %544 = vmatmul.mubr.bf16.gmra.mrb[0].mxu0 %v331
  %v545 = vpop.f32.mrb[0].mxu0
  %v546 = vadd.f32 %v92, %v545
  %v547 = vpop.f32.mrb[0].mxu0
  %v548 = vpop.f32.mrb[0].mxu0
  %v549 = vadd.f32 %v92, %v548
  %v550 = vpop.f32.mrb[0].mxu0
  %551 = vmatprep.mubr.bf16.mxu0 0
  %552 = vmatmul.mubr.bf16.gmra.mrb[0].mxu0 %v334
  %v553 = vpop.f32.mrb[0].mxu0
  %v554 = vadd.f32 %v92, %v553
  %v555 = vpop.f32.mrb[0].mxu0
  %v556 = vpop.f32.mrb[0].mxu0
  %v557 = vadd.f32 %v92, %v556
  %v558 = vpop.f32.mrb[0].mxu0
  %559 = vmatprep.mubr.bf16.mxu0 0
  %560 = vmatmul.mubr.bf16.gmra.mrb[0].mxu0 %v337
  %v561 = vpop.f32.mrb[0].mxu0
  %v562 = vadd.f32 %v92, %v561
  %v563 = vpop.f32.mrb[0].mxu0
  %v564 = vpop.f32.mrb[0].mxu0
  %v565 = vadd.f32 %v92, %v564
  %v566 = vpop.f32.mrb[0].mxu0
  %567 = vmatprep.mubr.bf16.mxu0 0
  %568 = vmatmul.mubr.bf16.gmra.mrb[0].mxu0 %v340
  %v569 = vpop.f32.mrb[0].mxu0
  %v570 = vadd.f32 %v92, %v569
  %v571 = vpop.f32.mrb[0].mxu0
  %v572 = vpop.f32.mrb[0].mxu0
  %v573 = vadd.f32 %v92, %v572
  %v574 = vpop.f32.mrb[0].mxu0
  %575 = vmatprep.mubr.bf16.mxu0 0
  %576 = vmatmul.mubr.bf16.gmra.mrb[0].mxu0 %v343
  %v577 = vpop.f32.mrb[0].mxu0
  %v578 = vadd.f32 %v92, %v577
  %v579 = vpop.f32.mrb[0].mxu0
  %v580 = vpop.f32.mrb[0].mxu0
  %v581 = vadd.f32 %v92, %v580
  %v582 = vpop.f32.mrb[0].mxu0
  %583 = vmatprep.mubr.bf16.mxu0 0
  %584 = vmatmul.mubr.bf16.gmra.mrb[0].mxu0 %v346
  %v585 = vpop.f32.mrb[0].mxu0
  %v586 = vadd.f32 %v92, %v585
  %v587 = vpop.f32.mrb[0].mxu0
  %v588 = vpop.f32.mrb[0].mxu0
  %v589 = vadd.f32 %v92, %v588
  %v590 = vpop.f32.mrb[0].mxu0
  %591 = vmatprep.mubr.bf16.mxu0 0
  %592 = vmatmul.mubr.bf16.gmra.mrb[0].mxu0 %v349
  %v593 = vpop.f32.mrb[0].mxu0
  %v594 = vadd.f32 %v92, %v593
  %v595 = vpop.f32.mrb[0].mxu0
  %v596 = vpop.f32.mrb[0].mxu0
  %v597 = vadd.f32 %v92, %v596
  %v598 = vpop.f32.mrb[0].mxu0
  %599 = vmatprep.mubr.bf16.mxu0 0
  %600 = vmatmul.mubr.bf16.gmra.mrb[0].mxu0 %v352
  %v601 = vpop.f32.mrb[0].mxu0
  %v602 = vadd.f32 %v92, %v601
  %v603 = vpop.f32.mrb[0].mxu0
  %v604 = vpop.f32.mrb[0].mxu0
  %v605 = vadd.f32 %v92, %v604
  %v606 = vpop.f32.mrb[0].mxu0
  %607 = vmatprep.mubr.bf16.mxu0 0
  %608 = vmatmul.mubr.bf16.gmra.mrb[0].mxu0 %v355
  %v609 = vpop.f32.mrb[0].mxu0
  %v610 = vadd.f32 %v92, %v609
  %v611 = vpop.f32.mrb[0].mxu0
  %v612 = vpop.f32.mrb[0].mxu0
  %v613 = vadd.f32 %v92, %v612
  %v614 = vpop.f32.mrb[0].mxu0
  %615 = vmatprep.mubr.bf16.mxu0 0
  %616 = vmatmul.mubr.bf16.gmra.mrb[0].mxu0 %v358
  %v617 = vpop.f32.mrb[0].mxu0
  %v618 = vadd.f32 %v92, %v617
  %v619 = vpop.f32.mrb[0].mxu0
  %v620 = vpop.f32.mrb[0].mxu0
  %v621 = vadd.f32 %v92, %v620
  %v622 = vpop.f32.mrb[0].mxu0
  %623 = vmatprep.mubr.bf16.mxu0 0
  %624 = vmatmul.mubr.bf16.gmra.mrb[0].mxu0 %v361
  %v625 = vpop.f32.mrb[0].mxu0
  %v626 = vadd.f32 %v92, %v625
  %v627 = vpop.f32.mrb[0].mxu0
  %v628 = vpop.f32.mrb[0].mxu0
  %v629 = vadd.f32 %v92, %v628
  %v630 = vpop.f32.mrb[0].mxu0
  %631 = vmatprep.mubr.bf16.mxu0 0
  %632 = vmatmul.mubr.bf16.gmra.mrb[0].mxu0 %v364
  %v633 = vpop.f32.mrb[0].mxu0
  %v634 = vadd.f32 %v92, %v633
  %v635 = vpop.f32.mrb[0].mxu0
  %v636 = vpop.f32.mrb[0].mxu0
  %v637 = vadd.f32 %v92, %v636
  %v638 = vpop.f32.mrb[0].mxu0
  %639 = vmatprep.mubr.bf16.mxu0 0
  %640 = vmatmul.mubr.bf16.gmra.mrb[0].mxu0 %v367
  %v641 = vpop.f32.mrb[0].mxu0
  %v642 = vadd.f32 %v92, %v641
  %v643 = vpop.f32.mrb[0].mxu0
  %v644 = vpop.f32.mrb[0].mxu0
  %v645 = vadd.f32 %v92, %v644
  %v646 = vpop.f32.mrb[0].mxu0
  %647 = vmatprep.mubr.bf16.mxu0 0
  %648 = vmatmul.mubr.bf16.gmra.mrb[0].mxu0 %v370
  %v649 = vpop.f32.mrb[0].mxu0
  %v650 = vadd.f32 %v92, %v649
  %v651 = vpop.f32.mrb[0].mxu0
  %v652 = vpop.f32.mrb[0].mxu0
  %v653 = vadd.f32 %v92, %v652
  %v654 = vpop.f32.mrb[0].mxu0
  %655 = vmatprep.mubr.bf16.mxu0 0
  %656 = vmatmul.mubr.bf16.gmra.mrb[0].mxu0 %v373
  %v657 = vpop.f32.mrb[0].mxu0
  %v658 = vadd.f32 %v92, %v657
  %v659 = vpop.f32.mrb[0].mxu0
  %v660 = vpop.f32.mrb[0].mxu0
  %v661 = vadd.f32 %v92, %v660
  %v662 = vpop.f32.mrb[0].mxu0
  %663 = vdwg.mxu0
  %vm664 = vcmp.ge.f32.partialorder %v410, 0.0
  %vm665 = vcmp.ge.f32.partialorder %v413, 0.0
  %vm666 = vcmp.ge.f32.partialorder %v418, 0.0
  %vm667 = vcmp.ge.f32.partialorder %v421, 0.0
  %vm668 = vcmp.ge.f32.partialorder %v426, 0.0
  %vm669 = vcmp.ge.f32.partialorder %v429, 0.0
  %vm670 = vcmp.ge.f32.partialorder %v434, 0.0
  %vm671 = vcmp.ge.f32.partialorder %v437, 0.0
  %vm672 = vcmp.ge.f32.partialorder %v442, 0.0
  %vm673 = vcmp.ge.f32.partialorder %v445, 0.0
  %vm674 = vcmp.ge.f32.partialorder %v450, 0.0
  %vm675 = vcmp.ge.f32.partialorder %v453, 0.0
  %vm676 = vcmp.ge.f32.partialorder %v458, 0.0
  %vm677 = vcmp.ge.f32.partialorder %v461, 0.0
  %vm678 = vcmp.ge.f32.partialorder %v466, 0.0
  %vm679 = vcmp.ge.f32.partialorder %v469, 0.0
  %vm680 = vcmp.ge.f32.partialorder %v474, 0.0
  %vm681 = vcmp.ge.f32.partialorder %v477, 0.0
  %vm682 = vcmp.ge.f32.partialorder %v482, 0.0
  %vm683 = vcmp.ge.f32.partialorder %v485, 0.0
  %vm684 = vcmp.ge.f32.partialorder %v490, 0.0
  %vm685 = vcmp.ge.f32.partialorder %v493, 0.0
  %vm686 = vcmp.ge.f32.partialorder %v498, 0.0
  %vm687 = vcmp.ge.f32.partialorder %v501, 0.0
  %vm688 = vcmp.ge.f32.partialorder %v506, 0.0
  %vm689 = vcmp.ge.f32.partialorder %v509, 0.0
  %vm690 = vcmp.ge.f32.partialorder %v514, 0.0
  %vm691 = vcmp.ge.f32.partialorder %v517, 0.0
  %vm692 = vcmp.ge.f32.partialorder %v522, 0.0
  %vm693 = vcmp.ge.f32.partialorder %v525, 0.0
  %vm694 = vcmp.ge.f32.partialorder %v530, 0.0
  %vm695 = vcmp.ge.f32.partialorder %v533, 0.0
  %vm696 = vcmp.ge.f32.partialorder %v538, 0.0
  %vm697 = vcmp.ge.f32.partialorder %v541, 0.0
  %vm698 = vcmp.ge.f32.partialorder %v546, 0.0
  %vm699 = vcmp.ge.f32.partialorder %v549, 0.0
  %vm700 = vcmp.ge.f32.partialorder %v554, 0.0
  %vm701 = vcmp.ge.f32.partialorder %v557, 0.0
  %vm702 = vcmp.ge.f32.partialorder %v562, 0.0
  %vm703 = vcmp.ge.f32.partialorder %v565, 0.0
  %vm704 = vcmp.ge.f32.partialorder %v570, 0.0
  %vm705 = vcmp.ge.f32.partialorder %v573, 0.0
  %vm706 = vcmp.ge.f32.partialorder %v578, 0.0
  %vm707 = vcmp.ge.f32.partialorder %v581, 0.0
  %vm708 = vcmp.ge.f32.partialorder %v586, 0.0
  %vm709 = vcmp.ge.f32.partialorder %v589, 0.0
  %vm710 = vcmp.ge.f32.partialorder %v594, 0.0
  %vm711 = vcmp.ge.f32.partialorder %v597, 0.0
  %vm712 = vcmp.ge.f32.partialorder %v602, 0.0
  %vm713 = vcmp.ge.f32.partialorder %v605, 0.0
  %vm714 = vcmp.ge.f32.partialorder %v610, 0.0
  %vm715 = vcmp.ge.f32.partialorder %v613, 0.0
  %vm716 = vcmp.ge.f32.partialorder %v618, 0.0
  %vm717 = vcmp.ge.f32.partialorder %v621, 0.0
  %vm718 = vcmp.ge.f32.partialorder %v626, 0.0
  %vm719 = vcmp.ge.f32.partialorder %v629, 0.0
  %vm720 = vcmp.ge.f32.partialorder %v634, 0.0
  %vm721 = vcmp.ge.f32.partialorder %v637, 0.0
  %vm722 = vcmp.ge.f32.partialorder %v642, 0.0
  %vm723 = vcmp.ge.f32.partialorder %v645, 0.0
  %vm724 = vcmp.ge.f32.partialorder %v650, 0.0
  %vm725 = vcmp.ge.f32.partialorder %v653, 0.0
  %vm726 = vcmp.ge.f32.partialorder %v658, 0.0
  %vm727 = vcmp.ge.f32.partialorder %v661, 0.0
  %v728 = vmul.f32 %v410, 0.2
  %v729 = vmul.f32 %v413, 0.2
  %v730 = vmul.f32 %v418, 0.2
  %v731 = vmul.f32 %v421, 0.2
  %v732 = vmul.f32 %v426, 0.2
  %v733 = vmul.f32 %v429, 0.2
  %v734 = vmul.f32 %v434, 0.2
  %v735 = vmul.f32 %v437, 0.2
  %v736 = vmul.f32 %v442, 0.2
  %v737 = vmul.f32 %v445, 0.2
  %v738 = vmul.f32 %v450, 0.2
  %v739 = vmul.f32 %v453, 0.2
  %v740 = vmul.f32 %v458, 0.2
  %v741 = vmul.f32 %v461, 0.2
  %v742 = vmul.f32 %v466, 0.2
  %v743 = vmul.f32 %v469, 0.2
  %v744 = vmul.f32 %v474, 0.2
  %v745 = vmul.f32 %v477, 0.2
  %v746 = vmul.f32 %v482, 0.2
  %v747 = vmul.f32 %v485, 0.2
  %v748 = vmul.f32 %v490, 0.2
  %v749 = vmul.f32 %v493, 0.2
  %v750 = vmul.f32 %v498, 0.2
  %v751 = vmul.f32 %v501, 0.2
  %v752 = vmul.f32 %v506, 0.2
  %v753 = vmul.f32 %v509, 0.2
  %v754 = vmul.f32 %v514, 0.2
  %v755 = vmul.f32 %v517, 0.2
  %v756 = vmul.f32 %v522, 0.2
  %v757 = vmul.f32 %v525, 0.2
  %v758 = vmul.f32 %v530, 0.2
  %v759 = vmul.f32 %v533, 0.2
  %v760 = vmul.f32 %v538, 0.2
  %v761 = vmul.f32 %v541, 0.2
  %v762 = vmul.f32 %v546, 0.2
  %v763 = vmul.f32 %v549, 0.2
  %v764 = vmul.f32 %v554, 0.2
  %v765 = vmul.f32 %v557, 0.2
  %v766 = vmul.f32 %v562, 0.2
  %v767 = vmul.f32 %v565, 0.2
  %v768 = vmul.f32 %v570, 0.2
  %v769 = vmul.f32 %v573, 0.2
  %v770 = vmul.f32 %v578, 0.2
  %v771 = vmul.f32 %v581, 0.2
  %v772 = vmul.f32 %v586, 0.2
  %v773 = vmul.f32 %v589, 0.2
  %v774 = vmul.f32 %v594, 0.2
  %v775 = vmul.f32 %v597, 0.2
  %v776 = vmul.f32 %v602, 0.2
  %v777 = vmul.f32 %v605, 0.2
  %v778 = vmul.f32 %v610, 0.2
  %v779 = vmul.f32 %v613, 0.2
  %v780 = vmul.f32 %v618, 0.2
  %v781 = vmul.f32 %v621, 0.2
  %v782 = vmul.f32 %v626, 0.2
  %v783 = vmul.f32 %v629, 0.2
  %v784 = vmul.f32 %v634, 0.2
  %v785 = vmul.f32 %v637, 0.2
  %v786 = vmul.f32 %v642, 0.2
  %v787 = vmul.f32 %v645, 0.2
  %v788 = vmul.f32 %v650, 0.2
  %v789 = vmul.f32 %v653, 0.2
  %v790 = vmul.f32 %v658, 0.2
  %v791 = vmul.f32 %v661, 0.2
  %v792 = vsel %vm664, %v410, %v728
  %v793 = vsel %vm665, %v413, %v729
  %v794 = vsel %vm666, %v418, %v730
  %v795 = vsel %vm667, %v421, %v731
  %v796 = vsel %vm668, %v426, %v732
  %v797 = vsel %vm669, %v429, %v733
  %v798 = vsel %vm670, %v434, %v734
  %v799 = vsel %vm671, %v437, %v735
  %v800 = vsel %vm672, %v442, %v736
  %v801 = vsel %vm673, %v445, %v737
  %v802 = vsel %vm674, %v450, %v738
  %v803 = vsel %vm675, %v453, %v739
  %v804 = vsel %vm676, %v458, %v740
  %v805 = vsel %vm677, %v461, %v741
  %v806 = vsel %vm678, %v466, %v742
  %v807 = vsel %vm679, %v469, %v743
  %v808 = vsel %vm680, %v474, %v744
  %v809 = vsel %vm681, %v477, %v745
  %v810 = vsel %vm682, %v482, %v746
  %v811 = vsel %vm683, %v485, %v747
  %v812 = vsel %vm684, %v490, %v748
  %v813 = vsel %vm685, %v493, %v749
  %v814 = vsel %vm686, %v498, %v750
  %v815 = vsel %vm687, %v501, %v751
  %v816 = vsel %vm688, %v506, %v752
  %v817 = vsel %vm689, %v509, %v753
  %v818 = vsel %vm690, %v514, %v754
  %v819 = vsel %vm691, %v517, %v755
  %v820 = vsel %vm692, %v522, %v756
  %v821 = vsel %vm693, %v525, %v757
  %v822 = vsel %vm694, %v530, %v758
  %v823 = vsel %vm695, %v533, %v759
  %v824 = vsel %vm696, %v538, %v760
  %v825 = vsel %vm697, %v541, %v761
  %v826 = vsel %vm698, %v546, %v762
  %v827 = vsel %vm699, %v549, %v763
  %v828 = vsel %vm700, %v554, %v764
  %v829 = vsel %vm701, %v557, %v765
  %v830 = vsel %vm702, %v562, %v766
  %v831 = vsel %vm703, %v565, %v767
  %v832 = vsel %vm704, %v570, %v768
  %v833 = vsel %vm705, %v573, %v769
  %v834 = vsel %vm706, %v578, %v770
  %v835 = vsel %vm707, %v581, %v771
  %v836 = vsel %vm708, %v586, %v772
  %v837 = vsel %vm709, %v589, %v773
  %v838 = vsel %vm710, %v594, %v774
  %v839 = vsel %vm711, %v597, %v775
  %v840 = vsel %vm712, %v602, %v776
  %v841 = vsel %vm713, %v605, %v777
  %v842 = vsel %vm714, %v610, %v778
  %v843 = vsel %vm715, %v613, %v779
  %v844 = vsel %vm716, %v618, %v780
  %v845 = vsel %vm717, %v621, %v781
  %v846 = vsel %vm718, %v626, %v782
  %v847 = vsel %vm719, %v629, %v783
  %v848 = vsel %vm720, %v634, %v784
  %v849 = vsel %vm721, %v637, %v785
  %v850 = vsel %vm722, %v642, %v786
  %v851 = vsel %vm723, %v645, %v787
  %v852 = vsel %vm724, %v650, %v788
  %v853 = vsel %vm725, %v653, %v789
  %v854 = vsel %vm726, %v658, %v790
  %v855 = vsel %vm727, %v661, %v791
  %v856 = vpack.c.bf16 %v793, %v792
  %v857 = vpack.c.bf16 %v795, %v794
  %v858 = vpack.c.bf16 %v797, %v796
  %v859 = vpack.c.bf16 %v799, %v798
  %v860 = vpack.c.bf16 %v801, %v800
  %v861 = vpack.c.bf16 %v803, %v802
  %v862 = vpack.c.bf16 %v805, %v804
  %v863 = vpack.c.bf16 %v807, %v806
  %v864 = vpack.c.bf16 %v809, %v808
  %v865 = vpack.c.bf16 %v811, %v810
  %v866 = vpack.c.bf16 %v813, %v812
  %v867 = vpack.c.bf16 %v815, %v814
  %v868 = vpack.c.bf16 %v817, %v816
  %v869 = vpack.c.bf16 %v819, %v818
  %v870 = vpack.c.bf16 %v821, %v820
  %v871 = vpack.c.bf16 %v823, %v822
  %v872 = vpack.c.bf16 %v825, %v824
  %v873 = vpack.c.bf16 %v827, %v826
  %v874 = vpack.c.bf16 %v829, %v828
  %v875 = vpack.c.bf16 %v831, %v830
  %v876 = vpack.c.bf16 %v833, %v832
  %v877 = vpack.c.bf16 %v835, %v834
  %v878 = vpack.c.bf16 %v837, %v836
  %v879 = vpack.c.bf16 %v839, %v838
  %v880 = vpack.c.bf16 %v841, %v840
  %v881 = vpack.c.bf16 %v843, %v842
  %v882 = vpack.c.bf16 %v845, %v844
  %v883 = vpack.c.bf16 %v847, %v846
  %v884 = vpack.c.bf16 %v849, %v848
  %v885 = vpack.c.bf16 %v851, %v850
  %v886 = vpack.c.bf16 %v853, %v852
  %v887 = vpack.c.bf16 %v855, %v854
  %v920 = vunpack.c.l.b16 %v856
  %v921 = vunpack.c.h.b16 %v856
  %v922 = vunpack.c.l.b16 %v857
  %v923 = vunpack.c.h.b16 %v857
  %v924 = vunpack.c.l.b16 %v858
  %v925 = vunpack.c.h.b16 %v858
  %v926 = vunpack.c.l.b16 %v859
  %v927 = vunpack.c.h.b16 %v859
  %v928 = vunpack.c.l.b16 %v860
  %v929 = vunpack.c.h.b16 %v860
  %v930 = vunpack.c.l.b16 %v861
  %v931 = vunpack.c.h.b16 %v861
  %v932 = vunpack.c.l.b16 %v862
  %v933 = vunpack.c.h.b16 %v862
  %v934 = vunpack.c.l.b16 %v863
  %v935 = vunpack.c.h.b16 %v863
  %v936 = vunpack.c.l.b16 %v864
  %v937 = vunpack.c.h.b16 %v864
  %v938 = vunpack.c.l.b16 %v865
  %v939 = vunpack.c.h.b16 %v865
  %v940 = vunpack.c.l.b16 %v866
  %v941 = vunpack.c.h.b16 %v866
  %v942 = vunpack.c.l.b16 %v867
  %v943 = vunpack.c.h.b16 %v867
  %v944 = vunpack.c.l.b16 %v868
  %v945 = vunpack.c.h.b16 %v868
  %v946 = vunpack.c.l.b16 %v869
  %v947 = vunpack.c.h.b16 %v869
  %v948 = vunpack.c.l.b16 %v870
  %v949 = vunpack.c.h.b16 %v870
  %v950 = vunpack.c.l.b16 %v871
  %v951 = vunpack.c.h.b16 %v871
  %v952 = vunpack.c.l.b16 %v872
  %v953 = vunpack.c.h.b16 %v872
  %v954 = vunpack.c.l.b16 %v873
  %v955 = vunpack.c.h.b16 %v873
  %v956 = vunpack.c.l.b16 %v874
  %v957 = vunpack.c.h.b16 %v874
  %v958 = vunpack.c.l.b16 %v875
  %v959 = vunpack.c.h.b16 %v875
  %v960 = vunpack.c.l.b16 %v876
  %v961 = vunpack.c.h.b16 %v876
  %v962 = vunpack.c.l.b16 %v877
  %v963 = vunpack.c.h.b16 %v877
  %v964 = vunpack.c.l.b16 %v878
  %v965 = vunpack.c.h.b16 %v878
  %v966 = vunpack.c.l.b16 %v879
  %v967 = vunpack.c.h.b16 %v879
  %v968 = vunpack.c.l.b16 %v880
  %v969 = vunpack.c.h.b16 %v880
  %v970 = vunpack.c.l.b16 %v881
  %v971 = vunpack.c.h.b16 %v881
  %v972 = vunpack.c.l.b16 %v882
  %v973 = vunpack.c.h.b16 %v882
  %v974 = vunpack.c.l.b16 %v883
  %v975 = vunpack.c.h.b16 %v883
  %v976 = vunpack.c.l.b16 %v884
  %v977 = vunpack.c.h.b16 %v884
  %v978 = vunpack.c.l.b16 %v885
  %v979 = vunpack.c.h.b16 %v885
  %v980 = vunpack.c.l.b16 %v886
  %v981 = vunpack.c.h.b16 %v886
  %v982 = vunpack.c.l.b16 %v887
  %v983 = vunpack.c.h.b16 %v887
  %v984 = vpack.c.b16 %v920, %v920
  %v985 = vpack.c.b16 %v921, %v921
  %v986 = vpack.c.b16 %v922, %v922
  %v987 = vpack.c.b16 %v923, %v923
  %v988 = vpack.c.b16 %v924, %v924
  %v989 = vpack.c.b16 %v925, %v925
  %v990 = vpack.c.b16 %v926, %v926
  %v991 = vpack.c.b16 %v927, %v927
  %v992 = vpack.c.b16 %v928, %v928
  %v993 = vpack.c.b16 %v929, %v929
  %v994 = vpack.c.b16 %v930, %v930
  %v995 = vpack.c.b16 %v931, %v931
  %v996 = vpack.c.b16 %v932, %v932
  %v997 = vpack.c.b16 %v933, %v933
  %v998 = vpack.c.b16 %v934, %v934
  %v999 = vpack.c.b16 %v935, %v935
  %v1000 = vpack.c.b16 %v936, %v936
  %v1001 = vpack.c.b16 %v937, %v937
  %v1002 = vpack.c.b16 %v938, %v938
  %v1003 = vpack.c.b16 %v939, %v939
  %v1004 = vpack.c.b16 %v940, %v940
  %v1005 = vpack.c.b16 %v941, %v941
  %v1006 = vpack.c.b16 %v942, %v942
  %v1007 = vpack.c.b16 %v943, %v943
  %v1008 = vpack.c.b16 %v944, %v944
  %v1009 = vpack.c.b16 %v945, %v945
  %v1010 = vpack.c.b16 %v946, %v946
  %v1011 = vpack.c.b16 %v947, %v947
  %v1012 = vpack.c.b16 %v948, %v948
  %v1013 = vpack.c.b16 %v949, %v949
  %v1014 = vpack.c.b16 %v950, %v950
  %v1015 = vpack.c.b16 %v951, %v951
  %v1016 = vpack.c.b16 %v952, %v952
  %v1017 = vpack.c.b16 %v953, %v953
  %v1018 = vpack.c.b16 %v954, %v954
  %v1019 = vpack.c.b16 %v955, %v955
  %v1020 = vpack.c.b16 %v956, %v956
  %v1021 = vpack.c.b16 %v957, %v957
  %v1022 = vpack.c.b16 %v958, %v958
  %v1023 = vpack.c.b16 %v959, %v959
  %v1024 = vpack.c.b16 %v960, %v960
  %v1025 = vpack.c.b16 %v961, %v961
  %v1026 = vpack.c.b16 %v962, %v962
  %v1027 = vpack.c.b16 %v963, %v963
  %v1028 = vpack.c.b16 %v964, %v964
  %v1029 = vpack.c.b16 %v965, %v965
  %v1030 = vpack.c.b16 %v966, %v966
  %v1031 = vpack.c.b16 %v967, %v967
  %v1032 = vpack.c.b16 %v968, %v968
  %v1033 = vpack.c.b16 %v969, %v969
  %v1034 = vpack.c.b16 %v970, %v970
  %v1035 = vpack.c.b16 %v971, %v971
  %v1036 = vpack.c.b16 %v972, %v972
  %v1037 = vpack.c.b16 %v973, %v973
  %v1038 = vpack.c.b16 %v974, %v974
  %v1039 = vpack.c.b16 %v975, %v975
  %v1040 = vpack.c.b16 %v976, %v976
  %v1041 = vpack.c.b16 %v977, %v977
  %v1042 = vpack.c.b16 %v978, %v978
  %v1043 = vpack.c.b16 %v979, %v979
  %v1044 = vpack.c.b16 %v980, %v980
  %v1045 = vpack.c.b16 %v981, %v981
  %v1046 = vpack.c.b16 %v982, %v982
  %v1047 = vpack.c.b16 %v983, %v983
  %1112 = vst [vmem:[%s3] sm:$0xf] %v984
  %1113 = vst [vmem:[%s3 + $0x4] sm:$0xf] %v985
  %1114 = vst [vmem:[%s3 + $0x8] sm:$0xf] %v986
  %1115 = vst [vmem:[%s3 + $0xc] sm:$0xf] %v987
  %1116 = vst [vmem:[%s3 + $0x10] sm:$0xf] %v988
  %1117 = vst [vmem:[%s3 + $0x14] sm:$0xf] %v989
  %1118 = vst [vmem:[%s3 + $0x18] sm:$0xf] %v990
  %1119 = vst [vmem:[%s3 + $0x1c] sm:$0xf] %v991
  %1120 = vst [vmem:[%s3 + $0x20] sm:$0xf] %v992
  %1121 = vst [vmem:[%s3 + $0x24] sm:$0xf] %v993
  %1122 = vst [vmem:[%s3 + $0x28] sm:$0xf] %v994
  %1123 = vst [vmem:[%s3 + $0x2c] sm:$0xf] %v995
  %1124 = vst [vmem:[%s3 + $0x30] sm:$0xf] %v996
  %1125 = vst [vmem:[%s3 + $0x34] sm:$0xf] %v997
  %1126 = vst [vmem:[%s3 + $0x38] sm:$0xf] %v998
  %1127 = vst [vmem:[%s3 + $0x3c] sm:$0xf] %v999
  %1128 = vst [vmem:[%s3 + $0x40] sm:$0xf] %v1000
  %1129 = vst [vmem:[%s3 + $0x44] sm:$0xf] %v1001
  %1130 = vst [vmem:[%s3 + $0x48] sm:$0xf] %v1002
  %1131 = vst [vmem:[%s3 + $0x4c] sm:$0xf] %v1003
  %1132 = vst [vmem:[%s3 + $0x50] sm:$0xf] %v1004
  %1133 = vst [vmem:[%s3 + $0x54] sm:$0xf] %v1005
  %1134 = vst [vmem:[%s3 + $0x58] sm:$0xf] %v1006
  %1135 = vst [vmem:[%s3 + $0x5c] sm:$0xf] %v1007
  %1136 = vst [vmem:[%s3 + $0x60] sm:$0xf] %v1008
  %1137 = vst [vmem:[%s3 + $0x64] sm:$0xf] %v1009
  %1138 = vst [vmem:[%s3 + $0x68] sm:$0xf] %v1010
  %1139 = vst [vmem:[%s3 + $0x6c] sm:$0xf] %v1011
  %1140 = vst [vmem:[%s3 + $0x70] sm:$0xf] %v1012
  %1141 = vst [vmem:[%s3 + $0x74] sm:$0xf] %v1013
  %1142 = vst [vmem:[%s3 + $0x78] sm:$0xf] %v1014
  %1143 = vst [vmem:[%s3 + $0x7c] sm:$0xf] %v1015
  %1144 = vst [vmem:[%s3 + $0x80] sm:$0xf] %v1016
  %1145 = vst [vmem:[%s3 + $0x84] sm:$0xf] %v1017
  %1146 = vst [vmem:[%s3 + $0x88] sm:$0xf] %v1018
  %1147 = vst [vmem:[%s3 + $0x8c] sm:$0xf] %v1019
  %1148 = vst [vmem:[%s3 + $0x90] sm:$0xf] %v1020
  %1149 = vst [vmem:[%s3 + $0x94] sm:$0xf] %v1021
  %1150 = vst [vmem:[%s3 + $0x98] sm:$0xf] %v1022
  %1151 = vst [vmem:[%s3 + $0x9c] sm:$0xf] %v1023
  %1152 = vst [vmem:[%s3 + $0xa0] sm:$0xf] %v1024
  %1153 = vst [vmem:[%s3 + $0xa4] sm:$0xf] %v1025
  %1154 = vst [vmem:[%s3 + $0xa8] sm:$0xf] %v1026
  %1155 = vst [vmem:[%s3 + $0xac] sm:$0xf] %v1027
  %1156 = vst [vmem:[%s3 + $0xb0] sm:$0xf] %v1028
  %1157 = vst [vmem:[%s3 + $0xb4] sm:$0xf] %v1029
  %1158 = vst [vmem:[%s3 + $0xb8] sm:$0xf] %v1030
  %1159 = vst [vmem:[%s3 + $0xbc] sm:$0xf] %v1031
  %1160 = vst [vmem:[%s3 + $0xc0] sm:$0xf] %v1032
  %1161 = vst [vmem:[%s3 + $0xc4] sm:$0xf] %v1033
  %1162 = vst [vmem:[%s3 + $0xc8] sm:$0xf] %v1034
  %1163 = vst [vmem:[%s3 + $0xcc] sm:$0xf] %v1035
  %1164 = vst [vmem:[%s3 + $0xd0] sm:$0xf] %v1036
  %1165 = vst [vmem:[%s3 + $0xd4] sm:$0xf] %v1037
  %1166 = vst [vmem:[%s3 + $0xd8] sm:$0xf] %v1038
  %1167 = vst [vmem:[%s3 + $0xdc] sm:$0xf] %v1039
  %1168 = vst [vmem:[%s3 + $0xe0] sm:$0xf] %v1040
  %1169 = vst [vmem:[%s3 + $0xe4] sm:$0xf] %v1041
  %1170 = vst [vmem:[%s3 + $0xe8] sm:$0xf] %v1042
  %1171 = vst [vmem:[%s3 + $0xec] sm:$0xf] %v1043
  %1172 = vst [vmem:[%s3 + $0xf0] sm:$0xf] %v1044
  %1173 = vst [vmem:[%s3 + $0xf4] sm:$0xf] %v1045
  %1174 = vst [vmem:[%s3 + $0xf8] sm:$0xf] %v1046
  %1175 = vst [vmem:[%s3 + $0xfc] sm:$0xf] %v1047
  // Predicated region
  $region14: #{netd_forward.5} parent=0 // pred_check
    _
  $region15: #{netd_forward.5} parent=0 // pred_check_branch
    %1177 = sbr.rel (0) target = $region17
  $region16: #{netd_forward.5} parent=0 // pred_region
    _
  $region17: #{netd_forward.5} parent=0 // pred_fallthru
    _
  // Predicated region
  $region18: #{netd_forward.5} parent=0 // pred_check
    _
  $region19: #{netd_forward.5} parent=0 // pred_check_branch
    %1179 = sbr.rel (0) target = $region21
  $region20: #{netd_forward.5} parent=0 // pred_region
    _
  $region21: #{netd_forward.5} parent=0 // pred_fallthru
    _

// kernel: netd_forward.6
$region0: #{netd_forward.6}
  #allocation0 [shape = 'u32[]', space=smem, size = 0x4, offset = 0x4, fixed_abs, tag = 'smem constant byte address 0x4 - core index']
  #allocation1 [shape = 'u32[144,128]{1,0:T(1,128)}', space=vmem, size = 0x12000, scoped, tag = 'internal scratch']
  %s0 = inlined_call_operand.vmem [shape: bf16[128,256], index: 0, kind: input, shape index: {}]
  %s1 = inlined_call_operand.vmem [shape: bf16[256,128], index: 1, kind: input, shape index: {}]
  %s2 = inlined_call_operand.vmem [shape: f32[1,128], index: 2, kind: input, shape index: {}]
  %s3 = inlined_call_operand.vmem [shape: f32[1,128], index: 3, kind: input, shape index: {}]
  %s4 = inlined_call_operand.vmem [shape: bf16[128,128], index: 4, kind: output, shape index: {}]
  %s5 = sld [smem:[#allocation0]]
  $region26: #{netd_forward.6} parent=0
    _
  %s7 = ssub.s32 1, %s5
  %s8 = scalar_select 0, %s7, %s5
  // Predicated region
  $region2: #{netd_forward.6} parent=0 // pred_check
    _
  $region3: #{netd_forward.6} parent=0 // pred_check_branch
    %10 = sbr.rel (0) target = $region5
  $region4: #{netd_forward.6} parent=0 // pred_region
    _
  $region5: #{netd_forward.6} parent=0 // pred_fallthru
    _
  // Predicated region
  $region6: #{netd_forward.6} parent=0 // pred_check
    _
  $region7: #{netd_forward.6} parent=0 // pred_check_branch
    %12 = sbr.rel (0) target = $region9
  $region8: #{netd_forward.6} parent=0 // pred_region
    _
  $region9: #{netd_forward.6} parent=0 // pred_fallthru
    _
  // Predicated region
  $region10: #{netd_forward.6} parent=0 // pred_check
    _
  $region11: #{netd_forward.6} parent=0 // pred_check_branch
    %14 = sbr.rel (0) target = $region13
  $region12: #{netd_forward.6} parent=0 // pred_region
    _
  $region13: #{netd_forward.6} parent=0 // pred_fallthru
    _
  // Predicated region
  $region14: #{netd_forward.6} parent=0 // pred_check
    _
  $region15: #{netd_forward.6} parent=0 // pred_check_branch
    %16 = sbr.rel (0) target = $region17
  $region16: #{netd_forward.6} parent=0 // pred_region
    _
  $region17: #{netd_forward.6} parent=0 // pred_fallthru
    _
  %v18 = vld [vmem:[%s0] sm:$0xff]
  %v19 = vld [vmem:[%s0 + $0x8] sm:$0xff]
  %v20 = vld [vmem:[%s0 + $0x10] sm:$0xff]
  %v21 = vld [vmem:[%s0 + $0x18] sm:$0xff]
  %v22 = vld [vmem:[%s0 + $0x20] sm:$0xff]
  %v23 = vld [vmem:[%s0 + $0x28] sm:$0xff]
  %v24 = vld [vmem:[%s0 + $0x30] sm:$0xff]
  %v25 = vld [vmem:[%s0 + $0x38] sm:$0xff]
  %v26 = vld [vmem:[%s0 + $0x40] sm:$0xff]
  %v27 = vld [vmem:[%s0 + $0x48] sm:$0xff]
  %v28 = vld [vmem:[%s0 + $0x50] sm:$0xff]
  %v29 = vld [vmem:[%s0 + $0x58] sm:$0xff]
  %v30 = vld [vmem:[%s0 + $0x60] sm:$0xff]
  %v31 = vld [vmem:[%s0 + $0x68] sm:$0xff]
  %v32 = vld [vmem:[%s0 + $0x70] sm:$0xff]
  %v33 = vld [vmem:[%s0 + $0x78] sm:$0xff]
  %v34 = vld [vmem:[%s1] sm:$0xf]
  %v35 = vld [vmem:[%s1 + $0x4] sm:$0xf]
  %v36 = vld [vmem:[%s1 + $0x8] sm:$0xf]
  %v37 = vld [vmem:[%s1 + $0xc] sm:$0xf]
  %v38 = vld [vmem:[%s1 + $0x10] sm:$0xf]
  %v39 = vld [vmem:[%s1 + $0x14] sm:$0xf]
  %v40 = vld [vmem:[%s1 + $0x18] sm:$0xf]
  %v41 = vld [vmem:[%s1 + $0x1c] sm:$0xf]
  %v42 = vld [vmem:[%s1 + $0x20] sm:$0xf]
  %v43 = vld [vmem:[%s1 + $0x24] sm:$0xf]
  %v44 = vld [vmem:[%s1 + $0x28] sm:$0xf]
  %v45 = vld [vmem:[%s1 + $0x2c] sm:$0xf]
  %v46 = vld [vmem:[%s1 + $0x30] sm:$0xf]
  %v47 = vld [vmem:[%s1 + $0x34] sm:$0xf]
  %v48 = vld [vmem:[%s1 + $0x38] sm:$0xf]
  %v49 = vld [vmem:[%s1 + $0x3c] sm:$0xf]
  %v50 = vld [vmem:[%s1 + $0x40] sm:$0xf]
  %v51 = vld [vmem:[%s1 + $0x44] sm:$0xf]
  %v52 = vld [vmem:[%s1 + $0x48] sm:$0xf]
  %v53 = vld [vmem:[%s1 + $0x4c] sm:$0xf]
  %v54 = vld [vmem:[%s1 + $0x50] sm:$0xf]
  %v55 = vld [vmem:[%s1 + $0x54] sm:$0xf]
  %v56 = vld [vmem:[%s1 + $0x58] sm:$0xf]
  %v57 = vld [vmem:[%s1 + $0x5c] sm:$0xf]
  %v58 = vld [vmem:[%s1 + $0x60] sm:$0xf]
  %v59 = vld [vmem:[%s1 + $0x64] sm:$0xf]
  %v60 = vld [vmem:[%s1 + $0x68] sm:$0xf]
  %v61 = vld [vmem:[%s1 + $0x6c] sm:$0xf]
  %v62 = vld [vmem:[%s1 + $0x70] sm:$0xf]
  %v63 = vld [vmem:[%s1 + $0x74] sm:$0xf]
  %v64 = vld [vmem:[%s1 + $0x78] sm:$0xf]
  %v65 = vld [vmem:[%s1 + $0x7c] sm:$0xf]
  %v82 = vunpack.c.l.b16 %v18
  %v83 = vunpack.c.h.b16 %v18
  %v84 = vunpack.c.l.b16 %v19
  %v85 = vunpack.c.h.b16 %v19
  %v86 = vunpack.c.l.b16 %v20
  %v87 = vunpack.c.h.b16 %v20
  %v88 = vunpack.c.l.b16 %v21
  %v89 = vunpack.c.h.b16 %v21
  %v90 = vunpack.c.l.b16 %v22
  %v91 = vunpack.c.h.b16 %v22
  %v92 = vunpack.c.l.b16 %v23
  %v93 = vunpack.c.h.b16 %v23
  %v94 = vunpack.c.l.b16 %v24
  %v95 = vunpack.c.h.b16 %v24
  %v96 = vunpack.c.l.b16 %v25
  %v97 = vunpack.c.h.b16 %v25
  %v98 = vunpack.c.l.b16 %v26
  %v99 = vunpack.c.h.b16 %v26
  %v100 = vunpack.c.l.b16 %v27
  %v101 = vunpack.c.h.b16 %v27
  %v102 = vunpack.c.l.b16 %v28
  %v103 = vunpack.c.h.b16 %v28
  %v104 = vunpack.c.l.b16 %v29
  %v105 = vunpack.c.h.b16 %v29
  %v106 = vunpack.c.l.b16 %v30
  %v107 = vunpack.c.h.b16 %v30
  %v108 = vunpack.c.l.b16 %v31
  %v109 = vunpack.c.h.b16 %v31
  %v110 = vunpack.c.l.b16 %v32
  %v111 = vunpack.c.h.b16 %v32
  %v112 = vunpack.c.l.b16 %v33
  %v113 = vunpack.c.h.b16 %v33
  %v114 = vpack.c.b16 %v84, %v82
  %v115 = vpack.c.b16 %v85, %v83
  %v116 = vpack.c.b16 %v88, %v86
  %v117 = vpack.c.b16 %v89, %v87
  %v118 = vpack.c.b16 %v92, %v90
  %v119 = vpack.c.b16 %v93, %v91
  %v120 = vpack.c.b16 %v96, %v94
  %v121 = vpack.c.b16 %v97, %v95
  %v122 = vpack.c.b16 %v100, %v98
  %v123 = vpack.c.b16 %v101, %v99
  %v124 = vpack.c.b16 %v104, %v102
  %v125 = vpack.c.b16 %v105, %v103
  %v126 = vpack.c.b16 %v108, %v106
  %v127 = vpack.c.b16 %v109, %v107
  %v128 = vpack.c.b16 %v112, %v110
  %v129 = vpack.c.b16 %v113, %v111
  %v178 = vunpack.c.l.b16 %v34
  %v179 = vunpack.c.l.b16 %v35
  %v180 = vunpack.c.l.b16 %v36
  %v181 = vunpack.c.l.b16 %v37
  %v182 = vunpack.c.l.b16 %v38
  %v183 = vunpack.c.l.b16 %v39
  %v184 = vunpack.c.l.b16 %v40
  %v185 = vunpack.c.l.b16 %v41
  %v186 = vunpack.c.l.b16 %v42
  %v187 = vunpack.c.l.b16 %v43
  %v188 = vunpack.c.l.b16 %v44
  %v189 = vunpack.c.l.b16 %v45
  %v190 = vunpack.c.l.b16 %v46
  %v191 = vunpack.c.l.b16 %v47
  %v192 = vunpack.c.l.b16 %v48
  %v193 = vunpack.c.l.b16 %v49
  %v194 = vunpack.c.l.b16 %v50
  %v195 = vunpack.c.l.b16 %v51
  %v196 = vunpack.c.l.b16 %v52
  %v197 = vunpack.c.l.b16 %v53
  %v198 = vunpack.c.l.b16 %v54
  %v199 = vunpack.c.l.b16 %v55
  %v200 = vunpack.c.l.b16 %v56
  %v201 = vunpack.c.l.b16 %v57
  %v202 = vunpack.c.l.b16 %v58
  %v203 = vunpack.c.l.b16 %v59
  %v204 = vunpack.c.l.b16 %v60
  %v205 = vunpack.c.l.b16 %v61
  %v206 = vunpack.c.l.b16 %v62
  %v207 = vunpack.c.l.b16 %v63
  %v208 = vunpack.c.l.b16 %v64
  %v209 = vunpack.c.l.b16 %v65
  %v210 = vpack.c.b16 %v179, %v178
  %v211 = vpack.c.b16 %v181, %v180
  %v212 = vpack.c.b16 %v183, %v182
  %v213 = vpack.c.b16 %v185, %v184
  %v214 = vpack.c.b16 %v187, %v186
  %v215 = vpack.c.b16 %v189, %v188
  %v216 = vpack.c.b16 %v191, %v190
  %v217 = vpack.c.b16 %v193, %v192
  %v218 = vpack.c.b16 %v195, %v194
  %v219 = vpack.c.b16 %v197, %v196
  %v220 = vpack.c.b16 %v199, %v198
  %v221 = vpack.c.b16 %v201, %v200
  %v222 = vpack.c.b16 %v203, %v202
  %v223 = vpack.c.b16 %v205, %v204
  %v224 = vpack.c.b16 %v207, %v206
  %v225 = vpack.c.b16 %v209, %v208
  %242 = vmatprep.subr.bf16.mxu0 0
  %243 = vmatpush1.bf16.msra.mxu0 %v210
  %244 = vmatprep.subr.bf16.mxu0 0
  %245 = vmatpush1.bf16.msra.mxu0 %v211
  %246 = vmatprep.subr.bf16.mxu0 0
  %247 = vmatpush1.bf16.msra.mxu0 %v212
  %248 = vmatprep.subr.bf16.mxu0 0
  %249 = vmatpush1.bf16.msra.mxu0 %v213
  %250 = vmatprep.subr.bf16.mxu0 0
  %251 = vmatpush1.bf16.msra.mxu0 %v214
  %252 = vmatprep.subr.bf16.mxu0 0
  %253 = vmatpush1.bf16.msra.mxu0 %v215
  %254 = vmatprep.subr.bf16.mxu0 0
  %255 = vmatpush1.bf16.msra.mxu0 %v216
  %256 = vmatprep.subr.bf16.mxu0 0
  %257 = vmatpush1.bf16.msra.mxu0 %v217
  %258 = vmatprep.subr.bf16.mxu0 0
  %259 = vmatpush1.bf16.msra.mxu0 %v218
  %260 = vmatprep.subr.bf16.mxu0 0
  %261 = vmatpush1.bf16.msra.mxu0 %v219
  %262 = vmatprep.subr.bf16.mxu0 0
  %263 = vmatpush1.bf16.msra.mxu0 %v220
  %264 = vmatprep.subr.bf16.mxu0 0
  %265 = vmatpush1.bf16.msra.mxu0 %v221
  %266 = vmatprep.subr.bf16.mxu0 0
  %267 = vmatpush1.bf16.msra.mxu0 %v222
  %268 = vmatprep.subr.bf16.mxu0 0
  %269 = vmatpush1.bf16.msra.mxu0 %v223
  %270 = vmatprep.subr.bf16.mxu0 0
  %271 = vmatpush1.bf16.msra.mxu0 %v224
  %272 = vmatprep.subr.bf16.mxu0 0
  %273 = vmatpush1.bf16.msra.mxu0 %v225
  %274 = vmatprep.mubr.bf16.mxu0 %v115
  %275 = vmatmul.mubr.bf16.gmra.mrb[0].mxu0 %v114
  %v276 = vpop.f32.mrb[0].mxu0
  %v277 = vadd.f32 0.0, %v276
  %v278 = vpop.f32.mrb[0].mxu0
  %v279 = vpop.f32.mrb[0].mxu0
  %v280 = vadd.f32 0.0, %v279
  %v281 = vpop.f32.mrb[0].mxu0
  %282 = vmatprep.mubr.bf16.mxu0 %v117
  %283 = vmatmul.mubr.bf16.gmra.mrb[0].mxu0 %v116
  %v284 = vpop.f32.mrb[0].mxu0
  %v285 = vadd.f32 0.0, %v284
  %v286 = vpop.f32.mrb[0].mxu0
  %v287 = vpop.f32.mrb[0].mxu0
  %v288 = vadd.f32 0.0, %v287
  %v289 = vpop.f32.mrb[0].mxu0
  %290 = vmatprep.mubr.bf16.mxu0 %v119
  %291 = vmatmul.mubr.bf16.gmra.mrb[0].mxu0 %v118
  %v292 = vpop.f32.mrb[0].mxu0
  %v293 = vadd.f32 0.0, %v292
  %v294 = vpop.f32.mrb[0].mxu0
  %v295 = vpop.f32.mrb[0].mxu0
  %v296 = vadd.f32 0.0, %v295
  %v297 = vpop.f32.mrb[0].mxu0
  %298 = vmatprep.mubr.bf16.mxu0 %v121
  %299 = vmatmul.mubr.bf16.gmra.mrb[0].mxu0 %v120
  %v300 = vpop.f32.mrb[0].mxu0
  %v301 = vadd.f32 0.0, %v300
  %v302 = vpop.f32.mrb[0].mxu0
  %v303 = vpop.f32.mrb[0].mxu0
  %v304 = vadd.f32 0.0, %v303
  %v305 = vpop.f32.mrb[0].mxu0
  %306 = vmatprep.mubr.bf16.mxu0 %v123
  %307 = vmatmul.mubr.bf16.gmra.mrb[0].mxu0 %v122
  %v308 = vpop.f32.mrb[0].mxu0
  %v309 = vadd.f32 0.0, %v308
  %v310 = vpop.f32.mrb[0].mxu0
  %v311 = vpop.f32.mrb[0].mxu0
  %v312 = vadd.f32 0.0, %v311
  %v313 = vpop.f32.mrb[0].mxu0
  %314 = vmatprep.mubr.bf16.mxu0 %v125
  %315 = vmatmul.mubr.bf16.gmra.mrb[0].mxu0 %v124
  %v316 = vpop.f32.mrb[0].mxu0
  %v317 = vadd.f32 0.0, %v316
  %v318 = vpop.f32.mrb[0].mxu0
  %v319 = vpop.f32.mrb[0].mxu0
  %v320 = vadd.f32 0.0, %v319
  %v321 = vpop.f32.mrb[0].mxu0
  %322 = vmatprep.mubr.bf16.mxu0 %v127
  %323 = vmatmul.mubr.bf16.gmra.mrb[0].mxu0 %v126
  %v324 = vpop.f32.mrb[0].mxu0
  %v325 = vadd.f32 0.0, %v324
  %v326 = vpop.f32.mrb[0].mxu0
  %v327 = vpop.f32.mrb[0].mxu0
  %v328 = vadd.f32 0.0, %v327
  %v329 = vpop.f32.mrb[0].mxu0
  %330 = vmatprep.mubr.bf16.mxu0 %v129
  %331 = vmatmul.mubr.bf16.gmra.mrb[0].mxu0 %v128
  %v332 = vpop.f32.mrb[0].mxu0
  %v333 = vadd.f32 0.0, %v332
  %v334 = vpop.f32.mrb[0].mxu0
  %v335 = vpop.f32.mrb[0].mxu0
  %v336 = vadd.f32 0.0, %v335
  %v337 = vpop.f32.mrb[0].mxu0
  %338 = vdwg.mxu0
  %v339 = vadd.f32 %v277, %v280
  %v340 = vadd.f32 %v339, %v285
  %v341 = vadd.f32 %v340, %v288
  %v342 = vadd.f32 %v341, %v293
  %v343 = vadd.f32 %v342, %v296
  %v344 = vadd.f32 %v343, %v301
  %v345 = vadd.f32 %v344, %v304
  %v346 = vadd.f32 %v345, %v309
  %v347 = vadd.f32 %v346, %v312
  %v348 = vadd.f32 %v347, %v317
  %v349 = vadd.f32 %v348, %v320
  %v350 = vadd.f32 %v349, %v325
  %v351 = vadd.f32 %v350, %v328
  %v352 = vadd.f32 %v351, %v333
  %v353 = vadd.f32 %v352, %v336
  %v354 = vrot.slane %v353, 4
  %v355 = vadd.f32 %v353, %v354
  %v356 = vrot.slane %v355, 2
  %v357 = vadd.f32 %v355, %v356
  %v358 = vrot.slane %v357, 1
  %v359 = vadd.f32 %v357, %v358
  %v360 = vmul.f32 %v359, 0.0078125
  %v361 = vmul.f32 %v277, %v277
  %v362 = vmul.f32 %v280, %v280
  %v363 = vmul.f32 %v285, %v285
  %v364 = vmul.f32 %v288, %v288
  %v365 = vmul.f32 %v293, %v293
  %v366 = vmul.f32 %v296, %v296
  %v367 = vmul.f32 %v301, %v301
  %v368 = vmul.f32 %v304, %v304
  %v369 = vmul.f32 %v309, %v309
  %v370 = vmul.f32 %v312, %v312
  %v371 = vmul.f32 %v317, %v317
  %v372 = vmul.f32 %v320, %v320
  %v373 = vmul.f32 %v325, %v325
  %v374 = vmul.f32 %v328, %v328
  %v375 = vmul.f32 %v333, %v333
  %v376 = vmul.f32 %v336, %v336
  %v377 = vadd.f32 %v361, %v362
  %v378 = vadd.f32 %v377, %v363
  %v379 = vadd.f32 %v378, %v364
  %v380 = vadd.f32 %v379, %v365
  %v381 = vadd.f32 %v380, %v366
  %v382 = vadd.f32 %v381, %v367
  %v383 = vadd.f32 %v382, %v368
  %v384 = vadd.f32 %v383, %v369
  %v385 = vadd.f32 %v384, %v370
  %v386 = vadd.f32 %v385, %v371
  %v387 = vadd.f32 %v386, %v372
  %v388 = vadd.f32 %v387, %v373
  %v389 = vadd.f32 %v388, %v374
  %v390 = vadd.f32 %v389, %v375
  %v391 = vadd.f32 %v390, %v376
  %v392 = vrot.slane %v391, 4
  %v393 = vadd.f32 %v391, %v392
  %v394 = vrot.slane %v393, 2
  %v395 = vadd.f32 %v393, %v394
  %v396 = vrot.slane %v395, 1
  %v397 = vadd.f32 %v395, %v396
  %v398 = vmul.f32 %v397, 0.0078125
  %v399 = vmul.f32 %v360, %v360
  %v400 = vsub.f32 %v398, %v399
  %v401 = vmax.f32 %v400, 0.0
  %v402 = vld [vmem:[%s2] sm:$0x1]
  %v403 = vadd.f32 %v401, 1e-05
  %v404 = vrsqrt.pop %v403
  %v405 = vmul.f32 %v402, %v404
  %v406 = vld [vmem:[%s3] sm:$0x1]
  %v407 = vmul.f32 %v360, %v405
  %v408 = vsub.f32 %v406, %v407
  %v410 = vlaneseq
  %v411 = vshrl.u32 %v410, 7
  %v412 = vsub.s32 0, %v411
  %v413 = vrot.slane %v405, %v412
  %v415 = vmul.f32 %v277, %v413
  %v416 = vmul.f32 %v280, %v413
  %v417 = vmul.f32 %v285, %v413
  %v418 = vmul.f32 %v288, %v413
  %v419 = vmul.f32 %v293, %v413
  %v420 = vmul.f32 %v296, %v413
  %v421 = vmul.f32 %v301, %v413
  %v422 = vmul.f32 %v304, %v413
  %v423 = vmul.f32 %v309, %v413
  %v424 = vmul.f32 %v312, %v413
  %v425 = vmul.f32 %v317, %v413
  %v426 = vmul.f32 %v320, %v413
  %v427 = vmul.f32 %v325, %v413
  %v428 = vmul.f32 %v328, %v413
  %v429 = vmul.f32 %v333, %v413
  %v430 = vmul.f32 %v336, %v413
  %v432 = vlaneseq
  %v433 = vshrl.u32 %v432, 7
  %v434 = vsub.s32 0, %v433
  %v435 = vrot.slane %v408, %v434
  %v437 = vadd.f32 %v415, %v435
  %v438 = vadd.f32 %v416, %v435
  %v439 = vadd.f32 %v417, %v435
  %v440 = vadd.f32 %v418, %v435
  %v441 = vadd.f32 %v419, %v435
  %v442 = vadd.f32 %v420, %v435
  %v443 = vadd.f32 %v421, %v435
  %v444 = vadd.f32 %v422, %v435
  %v445 = vadd.f32 %v423, %v435
  %v446 = vadd.f32 %v424, %v435
  %v447 = vadd.f32 %v425, %v435
  %v448 = vadd.f32 %v426, %v435
  %v449 = vadd.f32 %v427, %v435
  %v450 = vadd.f32 %v428, %v435
  %v451 = vadd.f32 %v429, %v435
  %v452 = vadd.f32 %v430, %v435
  %vm453 = vcmp.ge.f32.partialorder %v437, 0.0
  %vm454 = vcmp.ge.f32.partialorder %v438, 0.0
  %vm455 = vcmp.ge.f32.partialorder %v439, 0.0
  %vm456 = vcmp.ge.f32.partialorder %v440, 0.0
  %vm457 = vcmp.ge.f32.partialorder %v441, 0.0
  %vm458 = vcmp.ge.f32.partialorder %v442, 0.0
  %vm459 = vcmp.ge.f32.partialorder %v443, 0.0
  %vm460 = vcmp.ge.f32.partialorder %v444, 0.0
  %vm461 = vcmp.ge.f32.partialorder %v445, 0.0
  %vm462 = vcmp.ge.f32.partialorder %v446, 0.0
  %vm463 = vcmp.ge.f32.partialorder %v447, 0.0
  %vm464 = vcmp.ge.f32.partialorder %v448, 0.0
  %vm465 = vcmp.ge.f32.partialorder %v449, 0.0
  %vm466 = vcmp.ge.f32.partialorder %v450, 0.0
  %vm467 = vcmp.ge.f32.partialorder %v451, 0.0
  %vm468 = vcmp.ge.f32.partialorder %v452, 0.0
  %v469 = vmul.f32 %v437, 0.2
  %v470 = vmul.f32 %v438, 0.2
  %v471 = vmul.f32 %v439, 0.2
  %v472 = vmul.f32 %v440, 0.2
  %v473 = vmul.f32 %v441, 0.2
  %v474 = vmul.f32 %v442, 0.2
  %v475 = vmul.f32 %v443, 0.2
  %v476 = vmul.f32 %v444, 0.2
  %v477 = vmul.f32 %v445, 0.2
  %v478 = vmul.f32 %v446, 0.2
  %v479 = vmul.f32 %v447, 0.2
  %v480 = vmul.f32 %v448, 0.2
  %v481 = vmul.f32 %v449, 0.2
  %v482 = vmul.f32 %v450, 0.2
  %v483 = vmul.f32 %v451, 0.2
  %v484 = vmul.f32 %v452, 0.2
  %v485 = vsel %vm453, %v437, %v469
  %v486 = vsel %vm454, %v438, %v470
  %v487 = vsel %vm455, %v439, %v471
  %v488 = vsel %vm456, %v440, %v472
  %v489 = vsel %vm457, %v441, %v473
  %v490 = vsel %vm458, %v442, %v474
  %v491 = vsel %vm459, %v443, %v475
  %v492 = vsel %vm460, %v444, %v476
  %v493 = vsel %vm461, %v445, %v477
  %v494 = vsel %vm462, %v446, %v478
  %v495 = vsel %vm463, %v447, %v479
  %v496 = vsel %vm464, %v448, %v480
  %v497 = vsel %vm465, %v449, %v481
  %v498 = vsel %vm466, %v450, %v482
  %v499 = vsel %vm467, %v451, %v483
  %v500 = vsel %vm468, %v452, %v484
  %v501 = vpack.c.bf16 %v486, %v485
  %v502 = vpack.c.bf16 %v488, %v487
  %v503 = vpack.c.bf16 %v490, %v489
  %v504 = vpack.c.bf16 %v492, %v491
  %v505 = vpack.c.bf16 %v494, %v493
  %v506 = vpack.c.bf16 %v496, %v495
  %v507 = vpack.c.bf16 %v498, %v497
  %v508 = vpack.c.bf16 %v500, %v499
  %v517 = vunpack.c.l.b16 %v501
  %v518 = vunpack.c.h.b16 %v501
  %v519 = vunpack.c.l.b16 %v502
  %v520 = vunpack.c.h.b16 %v502
  %v521 = vunpack.c.l.b16 %v503
  %v522 = vunpack.c.h.b16 %v503
  %v523 = vunpack.c.l.b16 %v504
  %v524 = vunpack.c.h.b16 %v504
  %v525 = vunpack.c.l.b16 %v505
  %v526 = vunpack.c.h.b16 %v505
  %v527 = vunpack.c.l.b16 %v506
  %v528 = vunpack.c.h.b16 %v506
  %v529 = vunpack.c.l.b16 %v507
  %v530 = vunpack.c.h.b16 %v507
  %v531 = vunpack.c.l.b16 %v508
  %v532 = vunpack.c.h.b16 %v508
  %v533 = vpack.c.b16 %v517, %v517
  %v534 = vpack.c.b16 %v518, %v518
  %v535 = vpack.c.b16 %v519, %v519
  %v536 = vpack.c.b16 %v520, %v520
  %v537 = vpack.c.b16 %v521, %v521
  %v538 = vpack.c.b16 %v522, %v522
  %v539 = vpack.c.b16 %v523, %v523
  %v540 = vpack.c.b16 %v524, %v524
  %v541 = vpack.c.b16 %v525, %v525
  %v542 = vpack.c.b16 %v526, %v526
  %v543 = vpack.c.b16 %v527, %v527
  %v544 = vpack.c.b16 %v528, %v528
  %v545 = vpack.c.b16 %v529, %v529
  %v546 = vpack.c.b16 %v530, %v530
  %v547 = vpack.c.b16 %v531, %v531
  %v548 = vpack.c.b16 %v532, %v532
  %565 = vst [vmem:[%s4] sm:$0xf] %v533
  %566 = vst [vmem:[%s4 + $0x4] sm:$0xf] %v534
  %567 = vst [vmem:[%s4 + $0x8] sm:$0xf] %v535
  %568 = vst [vmem:[%s4 + $0xc] sm:$0xf] %v536
  %569 = vst [vmem:[%s4 + $0x10] sm:$0xf] %v537
  %570 = vst [vmem:[%s4 + $0x14] sm:$0xf] %v538
  %571 = vst [vmem:[%s4 + $0x18] sm:$0xf] %v539
  %572 = vst [vmem:[%s4 + $0x1c] sm:$0xf] %v540
  %573 = vst [vmem:[%s4 + $0x20] sm:$0xf] %v541
  %574 = vst [vmem:[%s4 + $0x24] sm:$0xf] %v542
  %575 = vst [vmem:[%s4 + $0x28] sm:$0xf] %v543
  %576 = vst [vmem:[%s4 + $0x2c] sm:$0xf] %v544
  %577 = vst [vmem:[%s4 + $0x30] sm:$0xf] %v545
  %578 = vst [vmem:[%s4 + $0x34] sm:$0xf] %v546
  %579 = vst [vmem:[%s4 + $0x38] sm:$0xf] %v547
  %580 = vst [vmem:[%s4 + $0x3c] sm:$0xf] %v548
  // Predicated region
  $region18: #{netd_forward.6} parent=0 // pred_check
    _
  $region19: #{netd_forward.6} parent=0 // pred_check_branch
    %582 = sbr.rel (0) target = $region21
  $region20: #{netd_forward.6} parent=0 // pred_region
    _
  $region21: #{netd_forward.6} parent=0 // pred_fallthru
    _
  // Predicated region
  $region22: #{netd_forward.6} parent=0 // pred_check
    _
  $region23: #{netd_forward.6} parent=0 // pred_check_branch
    %584 = sbr.rel (0) target = $region25
  $region24: #{netd_forward.6} parent=0 // pred_region
    _
  $region25: #{netd_forward.6} parent=0 // pred_fallthru
    _

// kernel: netd_forward.7
$region0: #{netd_forward.7}
  #allocation0 [shape = 'u32[]', space=smem, size = 0x4, offset = 0x4, fixed_abs, tag = 'smem constant byte address 0x4 - core index']
  #allocation1 [shape = 'u32[144,128]{1,0:T(1,128)}', space=vmem, size = 0x12000, scoped, tag = 'internal scratch']
  %s0 = inlined_call_operand.vmem [shape: bf16[32,512], index: 0, kind: input, shape index: {}]
  %s1 = inlined_call_operand.vmem [shape: bf16[512,128], index: 1, kind: input, shape index: {}]
  %s2 = inlined_call_operand.vmem [shape: f32[1,128], index: 2, kind: input, shape index: {}]
  %s3 = inlined_call_operand.vmem [shape: f32[1,128], index: 3, kind: input, shape index: {}]
  %s4 = inlined_call_operand.vmem [shape: bf16[32,128], index: 4, kind: output, shape index: {}]
  %s5 = sld [smem:[#allocation0]]
  $region26: #{netd_forward.7} parent=0
    _
  %s7 = ssub.s32 1, %s5
  %s8 = scalar_select 0, %s7, %s5
  // Predicated region
  $region2: #{netd_forward.7} parent=0 // pred_check
    _
  $region3: #{netd_forward.7} parent=0 // pred_check_branch
    %10 = sbr.rel (0) target = $region5
  $region4: #{netd_forward.7} parent=0 // pred_region
    _
  $region5: #{netd_forward.7} parent=0 // pred_fallthru
    _
  // Predicated region
  $region6: #{netd_forward.7} parent=0 // pred_check
    _
  $region7: #{netd_forward.7} parent=0 // pred_check_branch
    %12 = sbr.rel (0) target = $region9
  $region8: #{netd_forward.7} parent=0 // pred_region
    _
  $region9: #{netd_forward.7} parent=0 // pred_fallthru
    _
  // Predicated region
  $region10: #{netd_forward.7} parent=0 // pred_check
    _
  $region11: #{netd_forward.7} parent=0 // pred_check_branch
    %14 = sbr.rel (0) target = $region13
  $region12: #{netd_forward.7} parent=0 // pred_region
    _
  $region13: #{netd_forward.7} parent=0 // pred_fallthru
    _
  // Predicated region
  $region14: #{netd_forward.7} parent=0 // pred_check
    _
  $region15: #{netd_forward.7} parent=0 // pred_check_branch
    %16 = sbr.rel (0) target = $region17
  $region16: #{netd_forward.7} parent=0 // pred_region
    _
  $region17: #{netd_forward.7} parent=0 // pred_fallthru
    _
  %v18 = vld [vmem:[%s0] sm:$0xff]
  %v19 = vld [vmem:[%s0 + $0x8] sm:$0xff]
  %v20 = vld [vmem:[%s0 + $0x10] sm:$0xff]
  %v21 = vld [vmem:[%s0 + $0x18] sm:$0xff]
  %v22 = vld [vmem:[%s0 + $0x20] sm:$0xff]
  %v23 = vld [vmem:[%s0 + $0x28] sm:$0xff]
  %v24 = vld [vmem:[%s0 + $0x30] sm:$0xff]
  %v25 = vld [vmem:[%s0 + $0x38] sm:$0xff]
  %v26 = vld [vmem:[%s1] sm:$0xf]
  %v27 = vld [vmem:[%s1 + $0x4] sm:$0xf]
  %v28 = vld [vmem:[%s1 + $0x8] sm:$0xf]
  %v29 = vld [vmem:[%s1 + $0xc] sm:$0xf]
  %v30 = vld [vmem:[%s1 + $0x10] sm:$0xf]
  %v31 = vld [vmem:[%s1 + $0x14] sm:$0xf]
  %v32 = vld [vmem:[%s1 + $0x18] sm:$0xf]
  %v33 = vld [vmem:[%s1 + $0x1c] sm:$0xf]
  %v34 = vld [vmem:[%s1 + $0x20] sm:$0xf]
  %v35 = vld [vmem:[%s1 + $0x24] sm:$0xf]
  %v36 = vld [vmem:[%s1 + $0x28] sm:$0xf]
  %v37 = vld [vmem:[%s1 + $0x2c] sm:$0xf]
  %v38 = vld [vmem:[%s1 + $0x30] sm:$0xf]
  %v39 = vld [vmem:[%s1 + $0x34] sm:$0xf]
  %v40 = vld [vmem:[%s1 + $0x38] sm:$0xf]
  %v41 = vld [vmem:[%s1 + $0x3c] sm:$0xf]
  %v42 = vld [vmem:[%s1 + $0x40] sm:$0xf]
  %v43 = vld [vmem:[%s1 + $0x44] sm:$0xf]
  %v44 = vld [vmem:[%s1 + $0x48] sm:$0xf]
  %v45 = vld [vmem:[%s1 + $0x4c] sm:$0xf]
  %v46 = vld [vmem:[%s1 + $0x50] sm:$0xf]
  %v47 = vld [vmem:[%s1 + $0x54] sm:$0xf]
  %v48 = vld [vmem:[%s1 + $0x58] sm:$0xf]
  %v49 = vld [vmem:[%s1 + $0x5c] sm:$0xf]
  %v50 = vld [vmem:[%s1 + $0x60] sm:$0xf]
  %v51 = vld [vmem:[%s1 + $0x64] sm:$0xf]
  %v52 = vld [vmem:[%s1 + $0x68] sm:$0xf]
  %v53 = vld [vmem:[%s1 + $0x6c] sm:$0xf]
  %v54 = vld [vmem:[%s1 + $0x70] sm:$0xf]
  %v55 = vld [vmem:[%s1 + $0x74] sm:$0xf]
  %v56 = vld [vmem:[%s1 + $0x78] sm:$0xf]
  %v57 = vld [vmem:[%s1 + $0x7c] sm:$0xf]
  %v58 = vld [vmem:[%s1 + $0x80] sm:$0xf]
  %v59 = vld [vmem:[%s1 + $0x84] sm:$0xf]
  %v60 = vld [vmem:[%s1 + $0x88] sm:$0xf]
  %v61 = vld [vmem:[%s1 + $0x8c] sm:$0xf]
  %v62 = vld [vmem:[%s1 + $0x90] sm:$0xf]
  %v63 = vld [vmem:[%s1 + $0x94] sm:$0xf]
  %v64 = vld [vmem:[%s1 + $0x98] sm:$0xf]
  %v65 = vld [vmem:[%s1 + $0x9c] sm:$0xf]
  %v66 = vld [vmem:[%s1 + $0xa0] sm:$0xf]
  %v67 = vld [vmem:[%s1 + $0xa4] sm:$0xf]
  %v68 = vld [vmem:[%s1 + $0xa8] sm:$0xf]
  %v69 = vld [vmem:[%s1 + $0xac] sm:$0xf]
  %v70 = vld [vmem:[%s1 + $0xb0] sm:$0xf]
  %v71 = vld [vmem:[%s1 + $0xb4] sm:$0xf]
  %v72 = vld [vmem:[%s1 + $0xb8] sm:$0xf]
  %v73 = vld [vmem:[%s1 + $0xbc] sm:$0xf]
  %v74 = vld [vmem:[%s1 + $0xc0] sm:$0xf]
  %v75 = vld [vmem:[%s1 + $0xc4] sm:$0xf]
  %v76 = vld [vmem:[%s1 + $0xc8] sm:$0xf]
  %v77 = vld [vmem:[%s1 + $0xcc] sm:$0xf]
  %v78 = vld [vmem:[%s1 + $0xd0] sm:$0xf]
  %v79 = vld [vmem:[%s1 + $0xd4] sm:$0xf]
  %v80 = vld [vmem:[%s1 + $0xd8] sm:$0xf]
  %v81 = vld [vmem:[%s1 + $0xdc] sm:$0xf]
  %v82 = vld [vmem:[%s1 + $0xe0] sm:$0xf]
  %v83 = vld [vmem:[%s1 + $0xe4] sm:$0xf]
  %v84 = vld [vmem:[%s1 + $0xe8] sm:$0xf]
  %v85 = vld [vmem:[%s1 + $0xec] sm:$0xf]
  %v86 = vld [vmem:[%s1 + $0xf0] sm:$0xf]
  %v87 = vld [vmem:[%s1 + $0xf4] sm:$0xf]
  %v88 = vld [vmem:[%s1 + $0xf8] sm:$0xf]
  %v89 = vld [vmem:[%s1 + $0xfc] sm:$0xf]
  %v98 = vunpack.c.l.b16 %v18
  %v99 = vunpack.c.h.b16 %v18
  %v100 = vunpack.c.l.b16 %v19
  %v101 = vunpack.c.h.b16 %v19
  %v102 = vunpack.c.l.b16 %v20
  %v103 = vunpack.c.h.b16 %v20
  %v104 = vunpack.c.l.b16 %v21
  %v105 = vunpack.c.h.b16 %v21
  %v106 = vunpack.c.l.b16 %v22
  %v107 = vunpack.c.h.b16 %v22
  %v108 = vunpack.c.l.b16 %v23
  %v109 = vunpack.c.h.b16 %v23
  %v110 = vunpack.c.l.b16 %v24
  %v111 = vunpack.c.h.b16 %v24
  %v112 = vunpack.c.l.b16 %v25
  %v113 = vunpack.c.h.b16 %v25
  %v114 = vpack.c.b16 %v102, %v98
  %v115 = vpack.c.b16 %v103, %v99
  %v116 = vpack.c.b16 %v104, %v100
  %v117 = vpack.c.b16 %v105, %v101
  %v118 = vpack.c.b16 %v110, %v106
  %v119 = vpack.c.b16 %v111, %v107
  %v120 = vpack.c.b16 %v112, %v108
  %v121 = vpack.c.b16 %v113, %v109
  %v194 = vunpack.c.l.b16 %v26
  %v195 = vunpack.c.l.b16 %v27
  %v196 = vunpack.c.l.b16 %v28
  %v197 = vunpack.c.l.b16 %v29
  %v198 = vunpack.c.l.b16 %v30
  %v199 = vunpack.c.l.b16 %v31
  %v200 = vunpack.c.l.b16 %v32
  %v201 = vunpack.c.l.b16 %v33
  %v202 = vunpack.c.l.b16 %v34
  %v203 = vunpack.c.l.b16 %v35
  %v204 = vunpack.c.l.b16 %v36
  %v205 = vunpack.c.l.b16 %v37
  %v206 = vunpack.c.l.b16 %v38
  %v207 = vunpack.c.l.b16 %v39
  %v208 = vunpack.c.l.b16 %v40
  %v209 = vunpack.c.l.b16 %v41
  %v210 = vunpack.c.l.b16 %v42
  %v211 = vunpack.c.l.b16 %v43
  %v212 = vunpack.c.l.b16 %v44
  %v213 = vunpack.c.l.b16 %v45
  %v214 = vunpack.c.l.b16 %v46
  %v215 = vunpack.c.l.b16 %v47
  %v216 = vunpack.c.l.b16 %v48
  %v217 = vunpack.c.l.b16 %v49
  %v218 = vunpack.c.l.b16 %v50
  %v219 = vunpack.c.l.b16 %v51
  %v220 = vunpack.c.l.b16 %v52
  %v221 = vunpack.c.l.b16 %v53
  %v222 = vunpack.c.l.b16 %v54
  %v223 = vunpack.c.l.b16 %v55
  %v224 = vunpack.c.l.b16 %v56
  %v225 = vunpack.c.l.b16 %v57
  %v226 = vunpack.c.l.b16 %v58
  %v227 = vunpack.c.l.b16 %v59
  %v228 = vunpack.c.l.b16 %v60
  %v229 = vunpack.c.l.b16 %v61
  %v230 = vunpack.c.l.b16 %v62
  %v231 = vunpack.c.l.b16 %v63
  %v232 = vunpack.c.l.b16 %v64
  %v233 = vunpack.c.l.b16 %v65
  %v234 = vunpack.c.l.b16 %v66
  %v235 = vunpack.c.l.b16 %v67
  %v236 = vunpack.c.l.b16 %v68
  %v237 = vunpack.c.l.b16 %v69
  %v238 = vunpack.c.l.b16 %v70
  %v239 = vunpack.c.l.b16 %v71
  %v240 = vunpack.c.l.b16 %v72
  %v241 = vunpack.c.l.b16 %v73
  %v242 = vunpack.c.l.b16 %v74
  %v243 = vunpack.c.l.b16 %v75
  %v244 = vunpack.c.l.b16 %v76
  %v245 = vunpack.c.l.b16 %v77
  %v246 = vunpack.c.l.b16 %v78
  %v247 = vunpack.c.l.b16 %v79
  %v248 = vunpack.c.l.b16 %v80
  %v249 = vunpack.c.l.b16 %v81
  %v250 = vunpack.c.l.b16 %v82
  %v251 = vunpack.c.l.b16 %v83
  %v252 = vunpack.c.l.b16 %v84
  %v253 = vunpack.c.l.b16 %v85
  %v254 = vunpack.c.l.b16 %v86
  %v255 = vunpack.c.l.b16 %v87
  %v256 = vunpack.c.l.b16 %v88
  %v257 = vunpack.c.l.b16 %v89
  %v258 = vpack.c.b16 %v195, %v194
  %v259 = vpack.c.b16 %v197, %v196
  %v260 = vpack.c.b16 %v199, %v198
  %v261 = vpack.c.b16 %v201, %v200
  %v262 = vpack.c.b16 %v203, %v202
  %v263 = vpack.c.b16 %v205, %v204
  %v264 = vpack.c.b16 %v207, %v206
  %v265 = vpack.c.b16 %v209, %v208
  %v266 = vpack.c.b16 %v211, %v210
  %v267 = vpack.c.b16 %v213, %v212
  %v268 = vpack.c.b16 %v215, %v214
  %v269 = vpack.c.b16 %v217, %v216
  %v270 = vpack.c.b16 %v219, %v218
  %v271 = vpack.c.b16 %v221, %v220
  %v272 = vpack.c.b16 %v223, %v222
  %v273 = vpack.c.b16 %v225, %v224
  %v274 = vpack.c.b16 %v227, %v226
  %v275 = vpack.c.b16 %v229, %v228
  %v276 = vpack.c.b16 %v231, %v230
  %v277 = vpack.c.b16 %v233, %v232
  %v278 = vpack.c.b16 %v235, %v234
  %v279 = vpack.c.b16 %v237, %v236
  %v280 = vpack.c.b16 %v239, %v238
  %v281 = vpack.c.b16 %v241, %v240
  %v282 = vpack.c.b16 %v243, %v242
  %v283 = vpack.c.b16 %v245, %v244
  %v284 = vpack.c.b16 %v247, %v246
  %v285 = vpack.c.b16 %v249, %v248
  %v286 = vpack.c.b16 %v251, %v250
  %v287 = vpack.c.b16 %v253, %v252
  %v288 = vpack.c.b16 %v255, %v254
  %v289 = vpack.c.b16 %v257, %v256
  %322 = vmatprep.subr.bf16.mxu0 0
  %323 = vmatpush1.bf16.msra.mxu0 %v258
  %324 = vmatprep.subr.bf16.mxu0 0
  %325 = vmatpush1.bf16.msra.mxu0 %v259
  %326 = vmatprep.subr.bf16.mxu0 0
  %327 = vmatpush1.bf16.msra.mxu0 %v260
  %328 = vmatprep.subr.bf16.mxu0 0
  %329 = vmatpush1.bf16.msra.mxu0 %v261
  %330 = vmatprep.subr.bf16.mxu0 0
  %331 = vmatpush1.bf16.msra.mxu0 %v262
  %332 = vmatprep.subr.bf16.mxu0 0
  %333 = vmatpush1.bf16.msra.mxu0 %v263
  %334 = vmatprep.subr.bf16.mxu0 0
  %335 = vmatpush1.bf16.msra.mxu0 %v264
  %336 = vmatprep.subr.bf16.mxu0 0
  %337 = vmatpush1.bf16.msra.mxu0 %v265
  %338 = vmatprep.subr.bf16.mxu0 0
  %339 = vmatpush1.bf16.msra.mxu0 %v266
  %340 = vmatprep.subr.bf16.mxu0 0
  %341 = vmatpush1.bf16.msra.mxu0 %v267
  %342 = vmatprep.subr.bf16.mxu0 0
  %343 = vmatpush1.bf16.msra.mxu0 %v268
  %344 = vmatprep.subr.bf16.mxu0 0
  %345 = vmatpush1.bf16.msra.mxu0 %v269
  %346 = vmatprep.subr.bf16.mxu0 0
  %347 = vmatpush1.bf16.msra.mxu0 %v270
  %348 = vmatprep.subr.bf16.mxu0 0
  %349 = vmatpush1.bf16.msra.mxu0 %v271
  %350 = vmatprep.subr.bf16.mxu0 0
  %351 = vmatpush1.bf16.msra.mxu0 %v272
  %352 = vmatprep.subr.bf16.mxu0 0
  %353 = vmatpush1.bf16.msra.mxu0 %v273
  %354 = vmatprep.mubr.bf16.mxu0 %v115
  %355 = vmatmul.mubr.bf16.gmra.mrb[0].mxu0 %v114
  %v356 = vpop.f32.mrb[0].mxu0
  %v357 = vadd.f32 0.0, %v356
  %v358 = vpop.f32.mrb[0].mxu0
  %v359 = vpop.f32.mrb[0].mxu0
  %v360 = vadd.f32 0.0, %v359
  %v361 = vpop.f32.mrb[0].mxu0
  %362 = vmatprep.mubr.bf16.mxu0 %v119
  %363 = vmatmul.mubr.bf16.gmra.mrb[0].mxu0 %v118
  %v364 = vpop.f32.mrb[0].mxu0
  %v365 = vadd.f32 0.0, %v364
  %v366 = vpop.f32.mrb[0].mxu0
  %v367 = vpop.f32.mrb[0].mxu0
  %v368 = vadd.f32 0.0, %v367
  %v369 = vpop.f32.mrb[0].mxu0
  %370 = vdwg.mxu0
  %371 = vmatprep.subr.bf16.mxu0 0
  %372 = vmatpush1.bf16.msra.mxu0 %v274
  %373 = vmatprep.subr.bf16.mxu0 0
  %374 = vmatpush1.bf16.msra.mxu0 %v275
  %375 = vmatprep.subr.bf16.mxu0 0
  %376 = vmatpush1.bf16.msra.mxu0 %v276
  %377 = vmatprep.subr.bf16.mxu0 0
  %378 = vmatpush1.bf16.msra.mxu0 %v277
  %379 = vmatprep.subr.bf16.mxu0 0
  %380 = vmatpush1.bf16.msra.mxu0 %v278
  %381 = vmatprep.subr.bf16.mxu0 0
  %382 = vmatpush1.bf16.msra.mxu0 %v279
  %383 = vmatprep.subr.bf16.mxu0 0
  %384 = vmatpush1.bf16.msra.mxu0 %v280
  %385 = vmatprep.subr.bf16.mxu0 0
  %386 = vmatpush1.bf16.msra.mxu0 %v281
  %387 = vmatprep.subr.bf16.mxu0 0
  %388 = vmatpush1.bf16.msra.mxu0 %v282
  %389 = vmatprep.subr.bf16.mxu0 0
  %390 = vmatpush1.bf16.msra.mxu0 %v283
  %391 = vmatprep.subr.bf16.mxu0 0
  %392 = vmatpush1.bf16.msra.mxu0 %v284
  %393 = vmatprep.subr.bf16.mxu0 0
  %394 = vmatpush1.bf16.msra.mxu0 %v285
  %395 = vmatprep.subr.bf16.mxu0 0
  %396 = vmatpush1.bf16.msra.mxu0 %v286
  %397 = vmatprep.subr.bf16.mxu0 0
  %398 = vmatpush1.bf16.msra.mxu0 %v287
  %399 = vmatprep.subr.bf16.mxu0 0
  %400 = vmatpush1.bf16.msra.mxu0 %v288
  %401 = vmatprep.subr.bf16.mxu0 0
  %402 = vmatpush1.bf16.msra.mxu0 %v289
  %403 = vmatprep.mubr.bf16.mxu0 %v117
  %404 = vmatmul.mubr.bf16.gmra.mrb[0].mxu0 %v116
  %v405 = vpop.f32.mrb[0].mxu0
  %v406 = vadd.f32 %v357, %v405
  %v407 = vpop.f32.mrb[0].mxu0
  %v408 = vpop.f32.mrb[0].mxu0
  %v409 = vadd.f32 %v360, %v408
  %v410 = vpop.f32.mrb[0].mxu0
  %411 = vmatprep.mubr.bf16.mxu0 %v121
  %412 = vmatmul.mubr.bf16.gmra.mrb[0].mxu0 %v120
  %v413 = vpop.f32.mrb[0].mxu0
  %v414 = vadd.f32 %v365, %v413
  %v415 = vpop.f32.mrb[0].mxu0
  %v416 = vpop.f32.mrb[0].mxu0
  %v417 = vadd.f32 %v368, %v416
  %v418 = vpop.f32.mrb[0].mxu0
  %419 = vdwg.mxu0
  %v420 = vadd.f32 %v406, %v409
  %v421 = vadd.f32 %v420, %v414
  %v422 = vadd.f32 %v421, %v417
  %v423 = vrot.slane %v422, 4
  %v424 = vadd.f32 %v422, %v423
  %v425 = vrot.slane %v424, 2
  %v426 = vadd.f32 %v424, %v425
  %v427 = vrot.slane %v426, 1
  %v428 = vadd.f32 %v426, %v427
  %v429 = vmul.f32 %v428, 0.03125
  %v430 = vmul.f32 %v406, %v406
  %v431 = vmul.f32 %v409, %v409
  %v432 = vmul.f32 %v414, %v414
  %v433 = vmul.f32 %v417, %v417
  %v434 = vadd.f32 %v430, %v431
  %v435 = vadd.f32 %v434, %v432
  %v436 = vadd.f32 %v435, %v433
  %v437 = vrot.slane %v436, 4
  %v438 = vadd.f32 %v436, %v437
  %v439 = vrot.slane %v438, 2
  %v440 = vadd.f32 %v438, %v439
  %v441 = vrot.slane %v440, 1
  %v442 = vadd.f32 %v440, %v441
  %v443 = vmul.f32 %v442, 0.03125
  %v444 = vmul.f32 %v429, %v429
  %v445 = vsub.f32 %v443, %v444
  %v446 = vmax.f32 %v445, 0.0
  %v447 = vld [vmem:[%s2] sm:$0x1]
  %v448 = vadd.f32 %v446, 1e-05
  %v449 = vrsqrt.pop %v448
  %v450 = vmul.f32 %v447, %v449
  %v451 = vld [vmem:[%s3] sm:$0x1]
  %v452 = vmul.f32 %v429, %v450
  %v453 = vsub.f32 %v451, %v452
  %v455 = vlaneseq
  %v456 = vshrl.u32 %v455, 7
  %v457 = vsub.s32 0, %v456
  %v458 = vrot.slane %v450, %v457
  %v460 = vmul.f32 %v406, %v458
  %v461 = vmul.f32 %v409, %v458
  %v462 = vmul.f32 %v414, %v458
  %v463 = vmul.f32 %v417, %v458
  %v465 = vlaneseq
  %v466 = vshrl.u32 %v465, 7
  %v467 = vsub.s32 0, %v466
  %v468 = vrot.slane %v453, %v467
  %v470 = vadd.f32 %v460, %v468
  %v471 = vadd.f32 %v461, %v468
  %v472 = vadd.f32 %v462, %v468
  %v473 = vadd.f32 %v463, %v468
  %vm474 = vcmp.ge.f32.partialorder %v470, 0.0
  %vm475 = vcmp.ge.f32.partialorder %v471, 0.0
  %vm476 = vcmp.ge.f32.partialorder %v472, 0.0
  %vm477 = vcmp.ge.f32.partialorder %v473, 0.0
  %v478 = vmul.f32 %v470, 0.2
  %v479 = vmul.f32 %v471, 0.2
  %v480 = vmul.f32 %v472, 0.2
  %v481 = vmul.f32 %v473, 0.2
  %v482 = vsel %vm474, %v470, %v478
  %v483 = vsel %vm475, %v471, %v479
  %v484 = vsel %vm476, %v472, %v480
  %v485 = vsel %vm477, %v473, %v481
  %v486 = vpack.c.bf16 %v483, %v482
  %v487 = vpack.c.bf16 %v485, %v484
  %v490 = vunpack.c.l.b16 %v486
  %v491 = vunpack.c.h.b16 %v486
  %v492 = vunpack.c.l.b16 %v487
  %v493 = vunpack.c.h.b16 %v487
  %v494 = vpack.c.b16 %v490, %v490
  %v495 = vpack.c.b16 %v491, %v491
  %v496 = vpack.c.b16 %v492, %v492
  %v497 = vpack.c.b16 %v493, %v493
  %502 = vst [vmem:[%s4] sm:$0xf] %v494
  %503 = vst [vmem:[%s4 + $0x4] sm:$0xf] %v495
  %504 = vst [vmem:[%s4 + $0x8] sm:$0xf] %v496
  %505 = vst [vmem:[%s4 + $0xc] sm:$0xf] %v497
  // Predicated region
  $region18: #{netd_forward.7} parent=0 // pred_check
    _
  $region19: #{netd_forward.7} parent=0 // pred_check_branch
    %507 = sbr.rel (0) target = $region21
  $region20: #{netd_forward.7} parent=0 // pred_region
    _
  $region21: #{netd_forward.7} parent=0 // pred_fallthru
    _
  // Predicated region
  $region22: #{netd_forward.7} parent=0 // pred_check
    _
  $region23: #{netd_forward.7} parent=0 // pred_check_branch
    %509 = sbr.rel (0) target = $region25
  $region24: #{netd_forward.7} parent=0 // pred_region
    _
  $region25: #{netd_forward.7} parent=0 // pred_fallthru
    _

// kernel: netd_forward.8
$region0: #{netd_forward.8}
  #allocation0 [shape = 'u32[]', space=smem, size = 0x4, offset = 0x4, fixed_abs, tag = 'smem constant byte address 0x4 - core index']
  #allocation1 [shape = 'u32[144,128]{1,0:T(1,128)}', space=vmem, size = 0x12000, scoped, tag = 'internal scratch']
  %s0 = inlined_call_operand.vmem [shape: bf16[32,1024], index: 0, kind: input, shape index: {}]
  %s1 = inlined_call_operand.vmem [shape: bf16[1024,128], index: 1, kind: input, shape index: {}]
  %s2 = inlined_call_operand.vmem [shape: f32[1,128], index: 2, kind: input, shape index: {}]
  %s3 = inlined_call_operand.vmem [shape: f32[1,128], index: 3, kind: input, shape index: {}]
  %s4 = inlined_call_operand.vmem [shape: bf16[32,128], index: 4, kind: output, shape index: {}]
  %s5 = sld [smem:[#allocation0]]
  $region26: #{netd_forward.8} parent=0
    _
  %s7 = ssub.s32 1, %s5
  %s8 = scalar_select 0, %s7, %s5
  // Predicated region
  $region2: #{netd_forward.8} parent=0 // pred_check
    _
  $region3: #{netd_forward.8} parent=0 // pred_check_branch
    %10 = sbr.rel (0) target = $region5
  $region4: #{netd_forward.8} parent=0 // pred_region
    _
  $region5: #{netd_forward.8} parent=0 // pred_fallthru
    _
  // Predicated region
  $region6: #{netd_forward.8} parent=0 // pred_check
    _
  $region7: #{netd_forward.8} parent=0 // pred_check_branch
    %12 = sbr.rel (0) target = $region9
  $region8: #{netd_forward.8} parent=0 // pred_region
    _
  $region9: #{netd_forward.8} parent=0 // pred_fallthru
    _
  // Predicated region
  $region10: #{netd_forward.8} parent=0 // pred_check
    _
  $region11: #{netd_forward.8} parent=0 // pred_check_branch
    %14 = sbr.rel (0) target = $region13
  $region12: #{netd_forward.8} parent=0 // pred_region
    _
  $region13: #{netd_forward.8} parent=0 // pred_fallthru
    _
  // Predicated region
  $region14: #{netd_forward.8} parent=0 // pred_check
    _
  $region15: #{netd_forward.8} parent=0 // pred_check_branch
    %16 = sbr.rel (0) target = $region17
  $region16: #{netd_forward.8} parent=0 // pred_region
    _
  $region17: #{netd_forward.8} parent=0 // pred_fallthru
    _
  %v18 = vld [vmem:[%s0] sm:$0xff]
  %v19 = vld [vmem:[%s0 + $0x8] sm:$0xff]
  %v20 = vld [vmem:[%s0 + $0x10] sm:$0xff]
  %v21 = vld [vmem:[%s0 + $0x18] sm:$0xff]
  %v22 = vld [vmem:[%s0 + $0x20] sm:$0xff]
  %v23 = vld [vmem:[%s0 + $0x28] sm:$0xff]
  %v24 = vld [vmem:[%s0 + $0x30] sm:$0xff]
  %v25 = vld [vmem:[%s0 + $0x38] sm:$0xff]
  %v26 = vld [vmem:[%s0 + $0x40] sm:$0xff]
  %v27 = vld [vmem:[%s0 + $0x48] sm:$0xff]
  %v28 = vld [vmem:[%s0 + $0x50] sm:$0xff]
  %v29 = vld [vmem:[%s0 + $0x58] sm:$0xff]
  %v30 = vld [vmem:[%s0 + $0x60] sm:$0xff]
  %v31 = vld [vmem:[%s0 + $0x68] sm:$0xff]
  %v32 = vld [vmem:[%s0 + $0x70] sm:$0xff]
  %v33 = vld [vmem:[%s0 + $0x78] sm:$0xff]
  %v34 = vld [vmem:[%s1] sm:$0xf]
  %v35 = vld [vmem:[%s1 + $0x4] sm:$0xf]
  %v36 = vld [vmem:[%s1 + $0x8] sm:$0xf]
  %v37 = vld [vmem:[%s1 + $0xc] sm:$0xf]
  %v38 = vld [vmem:[%s1 + $0x10] sm:$0xf]
  %v39 = vld [vmem:[%s1 + $0x14] sm:$0xf]
  %v40 = vld [vmem:[%s1 + $0x18] sm:$0xf]
  %v41 = vld [vmem:[%s1 + $0x1c] sm:$0xf]
  %v42 = vld [vmem:[%s1 + $0x20] sm:$0xf]
  %v43 = vld [vmem:[%s1 + $0x24] sm:$0xf]
  %v44 = vld [vmem:[%s1 + $0x28] sm:$0xf]
  %v45 = vld [vmem:[%s1 + $0x2c] sm:$0xf]
  %v46 = vld [vmem:[%s1 + $0x30] sm:$0xf]
  %v47 = vld [vmem:[%s1 + $0x34] sm:$0xf]
  %v48 = vld [vmem:[%s1 + $0x38] sm:$0xf]
  %v49 = vld [vmem:[%s1 + $0x3c] sm:$0xf]
  %v50 = vld [vmem:[%s1 + $0x40] sm:$0xf]
  %v51 = vld [vmem:[%s1 + $0x44] sm:$0xf]
  %v52 = vld [vmem:[%s1 + $0x48] sm:$0xf]
  %v53 = vld [vmem:[%s1 + $0x4c] sm:$0xf]
  %v54 = vld [vmem:[%s1 + $0x50] sm:$0xf]
  %v55 = vld [vmem:[%s1 + $0x54] sm:$0xf]
  %v56 = vld [vmem:[%s1 + $0x58] sm:$0xf]
  %v57 = vld [vmem:[%s1 + $0x5c] sm:$0xf]
  %v58 = vld [vmem:[%s1 + $0x60] sm:$0xf]
  %v59 = vld [vmem:[%s1 + $0x64] sm:$0xf]
  %v60 = vld [vmem:[%s1 + $0x68] sm:$0xf]
  %v61 = vld [vmem:[%s1 + $0x6c] sm:$0xf]
  %v62 = vld [vmem:[%s1 + $0x70] sm:$0xf]
  %v63 = vld [vmem:[%s1 + $0x74] sm:$0xf]
  %v64 = vld [vmem:[%s1 + $0x78] sm:$0xf]
  %v65 = vld [vmem:[%s1 + $0x7c] sm:$0xf]
  %v66 = vld [vmem:[%s1 + $0x80] sm:$0xf]
  %v67 = vld [vmem:[%s1 + $0x84] sm:$0xf]
  %v68 = vld [vmem:[%s1 + $0x88] sm:$0xf]
  %v69 = vld [vmem:[%s1 + $0x8c] sm:$0xf]
  %v70 = vld [vmem:[%s1 + $0x90] sm:$0xf]
  %v71 = vld [vmem:[%s1 + $0x94] sm:$0xf]
  %v72 = vld [vmem:[%s1 + $0x98] sm:$0xf]
  %v73 = vld [vmem:[%s1 + $0x9c] sm:$0xf]
  %v74 = vld [vmem:[%s1 + $0xa0] sm:$0xf]
  %v75 = vld [vmem:[%s1 + $0xa4] sm:$0xf]
  %v76 = vld [vmem:[%s1 + $0xa8] sm:$0xf]
  %v77 = vld [vmem:[%s1 + $0xac] sm:$0xf]
  %v78 = vld [vmem:[%s1 + $0xb0] sm:$0xf]
  %v79 = vld [vmem:[%s1 + $0xb4] sm:$0xf]
  %v80 = vld [vmem:[%s1 + $0xb8] sm:$0xf]
  %v81 = vld [vmem:[%s1 + $0xbc] sm:$0xf]
  %v82 = vld [vmem:[%s1 + $0xc0] sm:$0xf]
  %v83 = vld [vmem:[%s1 + $0xc4] sm:$0xf]
  %v84 = vld [vmem:[%s1 + $0xc8] sm:$0xf]
  %v85 = vld [vmem:[%s1 + $0xcc] sm:$0xf]
  %v86 = vld [vmem:[%s1 + $0xd0] sm:$0xf]
  %v87 = vld [vmem:[%s1 + $0xd4] sm:$0xf]
  %v88 = vld [vmem:[%s1 + $0xd8] sm:$0xf]
  %v89 = vld [vmem:[%s1 + $0xdc] sm:$0xf]
  %v90 = vld [vmem:[%s1 + $0xe0] sm:$0xf]
  %v91 = vld [vmem:[%s1 + $0xe4] sm:$0xf]
  %v92 = vld [vmem:[%s1 + $0xe8] sm:$0xf]
  %v93 = vld [vmem:[%s1 + $0xec] sm:$0xf]
  %v94 = vld [vmem:[%s1 + $0xf0] sm:$0xf]
  %v95 = vld [vmem:[%s1 + $0xf4] sm:$0xf]
  %v96 = vld [vmem:[%s1 + $0xf8] sm:$0xf]
  %v97 = vld [vmem:[%s1 + $0xfc] sm:$0xf]
  %v98 = vld [vmem:[%s1 + $0x100] sm:$0xf]
  %v99 = vld [vmem:[%s1 + $0x104] sm:$0xf]
  %v100 = vld [vmem:[%s1 + $0x108] sm:$0xf]
  %v101 = vld [vmem:[%s1 + $0x10c] sm:$0xf]
  %v102 = vld [vmem:[%s1 + $0x110] sm:$0xf]
  %v103 = vld [vmem:[%s1 + $0x114] sm:$0xf]
  %v104 = vld [vmem:[%s1 + $0x118] sm:$0xf]
  %v105 = vld [vmem:[%s1 + $0x11c] sm:$0xf]
  %v106 = vld [vmem:[%s1 + $0x120] sm:$0xf]
  %v107 = vld [vmem:[%s1 + $0x124] sm:$0xf]
  %v108 = vld [vmem:[%s1 + $0x128] sm:$0xf]
  %v109 = vld [vmem:[%s1 + $0x12c] sm:$0xf]
  %v110 = vld [vmem:[%s1 + $0x130] sm:$0xf]
  %v111 = vld [vmem:[%s1 + $0x134] sm:$0xf]
  %v112 = vld [vmem:[%s1 + $0x138] sm:$0xf]
  %v113 = vld [vmem:[%s1 + $0x13c] sm:$0xf]
  %v114 = vld [vmem:[%s1 + $0x140] sm:$0xf]
  %v115 = vld [vmem:[%s1 + $0x144] sm:$0xf]
  %v116 = vld [vmem:[%s1 + $0x148] sm:$0xf]
  %v117 = vld [vmem:[%s1 + $0x14c] sm:$0xf]
  %v118 = vld [vmem:[%s1 + $0x150] sm:$0xf]
  %v119 = vld [vmem:[%s1 + $0x154] sm:$0xf]
  %v120 = vld [vmem:[%s1 + $0x158] sm:$0xf]
  %v121 = vld [vmem:[%s1 + $0x15c] sm:$0xf]
  %v122 = vld [vmem:[%s1 + $0x160] sm:$0xf]
  %v123 = vld [vmem:[%s1 + $0x164] sm:$0xf]
  %v124 = vld [vmem:[%s1 + $0x168] sm:$0xf]
  %v125 = vld [vmem:[%s1 + $0x16c] sm:$0xf]
  %v126 = vld [vmem:[%s1 + $0x170] sm:$0xf]
  %v127 = vld [vmem:[%s1 + $0x174] sm:$0xf]
  %v128 = vld [vmem:[%s1 + $0x178] sm:$0xf]
  %v129 = vld [vmem:[%s1 + $0x17c] sm:$0xf]
  %v130 = vld [vmem:[%s1 + $0x180] sm:$0xf]
  %v131 = vld [vmem:[%s1 + $0x184] sm:$0xf]
  %v132 = vld [vmem:[%s1 + $0x188] sm:$0xf]
  %v133 = vld [vmem:[%s1 + $0x18c] sm:$0xf]
  %v134 = vld [vmem:[%s1 + $0x190] sm:$0xf]
  %v135 = vld [vmem:[%s1 + $0x194] sm:$0xf]
  %v136 = vld [vmem:[%s1 + $0x198] sm:$0xf]
  %v137 = vld [vmem:[%s1 + $0x19c] sm:$0xf]
  %v138 = vld [vmem:[%s1 + $0x1a0] sm:$0xf]
  %v139 = vld [vmem:[%s1 + $0x1a4] sm:$0xf]
  %v140 = vld [vmem:[%s1 + $0x1a8] sm:$0xf]
  %v141 = vld [vmem:[%s1 + $0x1ac] sm:$0xf]
  %v142 = vld [vmem:[%s1 + $0x1b0] sm:$0xf]
  %v143 = vld [vmem:[%s1 + $0x1b4] sm:$0xf]
  %v144 = vld [vmem:[%s1 + $0x1b8] sm:$0xf]
  %v145 = vld [vmem:[%s1 + $0x1bc] sm:$0xf]
  %v146 = vld [vmem:[%s1 + $0x1c0] sm:$0xf]
  %v147 = vld [vmem:[%s1 + $0x1c4] sm:$0xf]
  %v148 = vld [vmem:[%s1 + $0x1c8] sm:$0xf]
  %v149 = vld [vmem:[%s1 + $0x1cc] sm:$0xf]
  %v150 = vld [vmem:[%s1 + $0x1d0] sm:$0xf]
  %v151 = vld [vmem:[%s1 + $0x1d4] sm:$0xf]
  %v152 = vld [vmem:[%s1 + $0x1d8] sm:$0xf]
  %v153 = vld [vmem:[%s1 + $0x1dc] sm:$0xf]
  %v154 = vld [vmem:[%s1 + $0x1e0] sm:$0xf]
  %v155 = vld [vmem:[%s1 + $0x1e4] sm:$0xf]
  %v156 = vld [vmem:[%s1 + $0x1e8] sm:$0xf]
  %v157 = vld [vmem:[%s1 + $0x1ec] sm:$0xf]
  %v158 = vld [vmem:[%s1 + $0x1f0] sm:$0xf]
  %v159 = vld [vmem:[%s1 + $0x1f4] sm:$0xf]
  %v160 = vld [vmem:[%s1 + $0x1f8] sm:$0xf]
  %v161 = vld [vmem:[%s1 + $0x1fc] sm:$0xf]
  %v178 = vunpack.c.l.b16 %v18
  %v179 = vunpack.c.h.b16 %v18
  %v180 = vunpack.c.l.b16 %v19
  %v181 = vunpack.c.h.b16 %v19
  %v182 = vunpack.c.l.b16 %v20
  %v183 = vunpack.c.h.b16 %v20
  %v184 = vunpack.c.l.b16 %v21
  %v185 = vunpack.c.h.b16 %v21
  %v186 = vunpack.c.l.b16 %v22
  %v187 = vunpack.c.h.b16 %v22
  %v188 = vunpack.c.l.b16 %v23
  %v189 = vunpack.c.h.b16 %v23
  %v190 = vunpack.c.l.b16 %v24
  %v191 = vunpack.c.h.b16 %v24
  %v192 = vunpack.c.l.b16 %v25
  %v193 = vunpack.c.h.b16 %v25
  %v194 = vunpack.c.l.b16 %v26
  %v195 = vunpack.c.h.b16 %v26
  %v196 = vunpack.c.l.b16 %v27
  %v197 = vunpack.c.h.b16 %v27
  %v198 = vunpack.c.l.b16 %v28
  %v199 = vunpack.c.h.b16 %v28
  %v200 = vunpack.c.l.b16 %v29
  %v201 = vunpack.c.h.b16 %v29
  %v202 = vunpack.c.l.b16 %v30
  %v203 = vunpack.c.h.b16 %v30
  %v204 = vunpack.c.l.b16 %v31
  %v205 = vunpack.c.h.b16 %v31
  %v206 = vunpack.c.l.b16 %v32
  %v207 = vunpack.c.h.b16 %v32
  %v208 = vunpack.c.l.b16 %v33
  %v209 = vunpack.c.h.b16 %v33
  %v210 = vpack.c.b16 %v186, %v178
  %v211 = vpack.c.b16 %v187, %v179
  %v212 = vpack.c.b16 %v188, %v180
  %v213 = vpack.c.b16 %v189, %v181
  %v214 = vpack.c.b16 %v190, %v182
  %v215 = vpack.c.b16 %v191, %v183
  %v216 = vpack.c.b16 %v192, %v184
  %v217 = vpack.c.b16 %v193, %v185
  %v218 = vpack.c.b16 %v202, %v194
  %v219 = vpack.c.b16 %v203, %v195
  %v220 = vpack.c.b16 %v204, %v196
  %v221 = vpack.c.b16 %v205, %v197
  %v222 = vpack.c.b16 %v206, %v198
  %v223 = vpack.c.b16 %v207, %v199
  %v224 = vpack.c.b16 %v208, %v200
  %v225 = vpack.c.b16 %v209, %v201
  %v370 = vunpack.c.l.b16 %v34
  %v371 = vunpack.c.l.b16 %v35
  %v372 = vunpack.c.l.b16 %v36
  %v373 = vunpack.c.l.b16 %v37
  %v374 = vunpack.c.l.b16 %v38
  %v375 = vunpack.c.l.b16 %v39
  %v376 = vunpack.c.l.b16 %v40
  %v377 = vunpack.c.l.b16 %v41
  %v378 = vunpack.c.l.b16 %v42
  %v379 = vunpack.c.l.b16 %v43
  %v380 = vunpack.c.l.b16 %v44
  %v381 = vunpack.c.l.b16 %v45
  %v382 = vunpack.c.l.b16 %v46
  %v383 = vunpack.c.l.b16 %v47
  %v384 = vunpack.c.l.b16 %v48
  %v385 = vunpack.c.l.b16 %v49
  %v386 = vunpack.c.l.b16 %v50
  %v387 = vunpack.c.l.b16 %v51
  %v388 = vunpack.c.l.b16 %v52
  %v389 = vunpack.c.l.b16 %v53
  %v390 = vunpack.c.l.b16 %v54
  %v391 = vunpack.c.l.b16 %v55
  %v392 = vunpack.c.l.b16 %v56
  %v393 = vunpack.c.l.b16 %v57
  %v394 = vunpack.c.l.b16 %v58
  %v395 = vunpack.c.l.b16 %v59
  %v396 = vunpack.c.l.b16 %v60
  %v397 = vunpack.c.l.b16 %v61
  %v398 = vunpack.c.l.b16 %v62
  %v399 = vunpack.c.l.b16 %v63
  %v400 = vunpack.c.l.b16 %v64
  %v401 = vunpack.c.l.b16 %v65
  %v402 = vunpack.c.l.b16 %v66
  %v403 = vunpack.c.l.b16 %v67
  %v404 = vunpack.c.l.b16 %v68
  %v405 = vunpack.c.l.b16 %v69
  %v406 = vunpack.c.l.b16 %v70
  %v407 = vunpack.c.l.b16 %v71
  %v408 = vunpack.c.l.b16 %v72
  %v409 = vunpack.c.l.b16 %v73
  %v410 = vunpack.c.l.b16 %v74
  %v411 = vunpack.c.l.b16 %v75
  %v412 = vunpack.c.l.b16 %v76
  %v413 = vunpack.c.l.b16 %v77
  %v414 = vunpack.c.l.b16 %v78
  %v415 = vunpack.c.l.b16 %v79
  %v416 = vunpack.c.l.b16 %v80
  %v417 = vunpack.c.l.b16 %v81
  %v418 = vunpack.c.l.b16 %v82
  %v419 = vunpack.c.l.b16 %v83
  %v420 = vunpack.c.l.b16 %v84
  %v421 = vunpack.c.l.b16 %v85
  %v422 = vunpack.c.l.b16 %v86
  %v423 = vunpack.c.l.b16 %v87
  %v424 = vunpack.c.l.b16 %v88
  %v425 = vunpack.c.l.b16 %v89
  %v426 = vunpack.c.l.b16 %v90
  %v427 = vunpack.c.l.b16 %v91
  %v428 = vunpack.c.l.b16 %v92
  %v429 = vunpack.c.l.b16 %v93
  %v430 = vunpack.c.l.b16 %v94
  %v431 = vunpack.c.l.b16 %v95
  %v432 = vunpack.c.l.b16 %v96
  %v433 = vunpack.c.l.b16 %v97
  %v434 = vunpack.c.l.b16 %v98
  %v435 = vunpack.c.l.b16 %v99
  %v436 = vunpack.c.l.b16 %v100
  %v437 = vunpack.c.l.b16 %v101
  %v438 = vunpack.c.l.b16 %v102
  %v439 = vunpack.c.l.b16 %v103
  %v440 = vunpack.c.l.b16 %v104
  %v441 = vunpack.c.l.b16 %v105
  %v442 = vunpack.c.l.b16 %v106
  %v443 = vunpack.c.l.b16 %v107
  %v444 = vunpack.c.l.b16 %v108
  %v445 = vunpack.c.l.b16 %v109
  %v446 = vunpack.c.l.b16 %v110
  %v447 = vunpack.c.l.b16 %v111
  %v448 = vunpack.c.l.b16 %v112
  %v449 = vunpack.c.l.b16 %v113
  %v450 = vunpack.c.l.b16 %v114
  %v451 = vunpack.c.l.b16 %v115
  %v452 = vunpack.c.l.b16 %v116
  %v453 = vunpack.c.l.b16 %v117
  %v454 = vunpack.c.l.b16 %v118
  %v455 = vunpack.c.l.b16 %v119
  %v456 = vunpack.c.l.b16 %v120
  %v457 = vunpack.c.l.b16 %v121
  %v458 = vunpack.c.l.b16 %v122
  %v459 = vunpack.c.l.b16 %v123
  %v460 = vunpack.c.l.b16 %v124
  %v461 = vunpack.c.l.b16 %v125
  %v462 = vunpack.c.l.b16 %v126
  %v463 = vunpack.c.l.b16 %v127
  %v464 = vunpack.c.l.b16 %v128
  %v465 = vunpack.c.l.b16 %v129
  %v466 = vunpack.c.l.b16 %v130
  %v467 = vunpack.c.l.b16 %v131
  %v468 = vunpack.c.l.b16 %v132
  %v469 = vunpack.c.l.b16 %v133
  %v470 = vunpack.c.l.b16 %v134
  %v471 = vunpack.c.l.b16 %v135
  %v472 = vunpack.c.l.b16 %v136
  %v473 = vunpack.c.l.b16 %v137
  %v474 = vunpack.c.l.b16 %v138
  %v475 = vunpack.c.l.b16 %v139
  %v476 = vunpack.c.l.b16 %v140
  %v477 = vunpack.c.l.b16 %v141
  %v478 = vunpack.c.l.b16 %v142
  %v479 = vunpack.c.l.b16 %v143
  %v480 = vunpack.c.l.b16 %v144
  %v481 = vunpack.c.l.b16 %v145
  %v482 = vunpack.c.l.b16 %v146
  %v483 = vunpack.c.l.b16 %v147
  %v484 = vunpack.c.l.b16 %v148
  %v485 = vunpack.c.l.b16 %v149
  %v486 = vunpack.c.l.b16 %v150
  %v487 = vunpack.c.l.b16 %v151
  %v488 = vunpack.c.l.b16 %v152
  %v489 = vunpack.c.l.b16 %v153
  %v490 = vunpack.c.l.b16 %v154
  %v491 = vunpack.c.l.b16 %v155
  %v492 = vunpack.c.l.b16 %v156
  %v493 = vunpack.c.l.b16 %v157
  %v494 = vunpack.c.l.b16 %v158
  %v495 = vunpack.c.l.b16 %v159
  %v496 = vunpack.c.l.b16 %v160
  %v497 = vunpack.c.l.b16 %v161
  %v498 = vpack.c.b16 %v371, %v370
  %v499 = vpack.c.b16 %v373, %v372
  %v500 = vpack.c.b16 %v375, %v374
  %v501 = vpack.c.b16 %v377, %v376
  %v502 = vpack.c.b16 %v379, %v378
  %v503 = vpack.c.b16 %v381, %v380
  %v504 = vpack.c.b16 %v383, %v382
  %v505 = vpack.c.b16 %v385, %v384
  %v506 = vpack.c.b16 %v387, %v386
  %v507 = vpack.c.b16 %v389, %v388
  %v508 = vpack.c.b16 %v391, %v390
  %v509 = vpack.c.b16 %v393, %v392
  %v510 = vpack.c.b16 %v395, %v394
  %v511 = vpack.c.b16 %v397, %v396
  %v512 = vpack.c.b16 %v399, %v398
  %v513 = vpack.c.b16 %v401, %v400
  %v514 = vpack.c.b16 %v403, %v402
  %v515 = vpack.c.b16 %v405, %v404
  %v516 = vpack.c.b16 %v407, %v406
  %v517 = vpack.c.b16 %v409, %v408
  %v518 = vpack.c.b16 %v411, %v410
  %v519 = vpack.c.b16 %v413, %v412
  %v520 = vpack.c.b16 %v415, %v414
  %v521 = vpack.c.b16 %v417, %v416
  %v522 = vpack.c.b16 %v419, %v418
  %v523 = vpack.c.b16 %v421, %v420
  %v524 = vpack.c.b16 %v423, %v422
  %v525 = vpack.c.b16 %v425, %v424
  %v526 = vpack.c.b16 %v427, %v426
  %v527 = vpack.c.b16 %v429, %v428
  %v528 = vpack.c.b16 %v431, %v430
  %v529 = vpack.c.b16 %v433, %v432
  %v530 = vpack.c.b16 %v435, %v434
  %v531 = vpack.c.b16 %v437, %v436
  %v532 = vpack.c.b16 %v439, %v438
  %v533 = vpack.c.b16 %v441, %v440
  %v534 = vpack.c.b16 %v443, %v442
  %v535 = vpack.c.b16 %v445, %v444
  %v536 = vpack.c.b16 %v447, %v446
  %v537 = vpack.c.b16 %v449, %v448
  %v538 = vpack.c.b16 %v451, %v450
  %v539 = vpack.c.b16 %v453, %v452
  %v540 = vpack.c.b16 %v455, %v454
  %v541 = vpack.c.b16 %v457, %v456
  %v542 = vpack.c.b16 %v459, %v458
  %v543 = vpack.c.b16 %v461, %v460
  %v544 = vpack.c.b16 %v463, %v462
  %v545 = vpack.c.b16 %v465, %v464
  %v546 = vpack.c.b16 %v467, %v466
  %v547 = vpack.c.b16 %v469, %v468
  %v548 = vpack.c.b16 %v471, %v470
  %v549 = vpack.c.b16 %v473, %v472
  %v550 = vpack.c.b16 %v475, %v474
  %v551 = vpack.c.b16 %v477, %v476
  %v552 = vpack.c.b16 %v479, %v478
  %v553 = vpack.c.b16 %v481, %v480
  %v554 = vpack.c.b16 %v483, %v482
  %v555 = vpack.c.b16 %v485, %v484
  %v556 = vpack.c.b16 %v487, %v486
  %v557 = vpack.c.b16 %v489, %v488
  %v558 = vpack.c.b16 %v491, %v490
  %v559 = vpack.c.b16 %v493, %v492
  %v560 = vpack.c.b16 %v495, %v494
  %v561 = vpack.c.b16 %v497, %v496
  %626 = vmatprep.subr.bf16.mxu0 0
  %627 = vmatpush1.bf16.msra.mxu0 %v498
  %628 = vmatprep.subr.bf16.mxu0 0
  %629 = vmatpush1.bf16.msra.mxu0 %v499
  %630 = vmatprep.subr.bf16.mxu0 0
  %631 = vmatpush1.bf16.msra.mxu0 %v500
  %632 = vmatprep.subr.bf16.mxu0 0
  %633 = vmatpush1.bf16.msra.mxu0 %v501
  %634 = vmatprep.subr.bf16.mxu0 0
  %635 = vmatpush1.bf16.msra.mxu0 %v502
  %636 = vmatprep.subr.bf16.mxu0 0
  %637 = vmatpush1.bf16.msra.mxu0 %v503
  %638 = vmatprep.subr.bf16.mxu0 0
  %639 = vmatpush1.bf16.msra.mxu0 %v504
  %640 = vmatprep.subr.bf16.mxu0 0
  %641 = vmatpush1.bf16.msra.mxu0 %v505
  %642 = vmatprep.subr.bf16.mxu0 0
  %643 = vmatpush1.bf16.msra.mxu0 %v506
  %644 = vmatprep.subr.bf16.mxu0 0
  %645 = vmatpush1.bf16.msra.mxu0 %v507
  %646 = vmatprep.subr.bf16.mxu0 0
  %647 = vmatpush1.bf16.msra.mxu0 %v508
  %648 = vmatprep.subr.bf16.mxu0 0
  %649 = vmatpush1.bf16.msra.mxu0 %v509
  %650 = vmatprep.subr.bf16.mxu0 0
  %651 = vmatpush1.bf16.msra.mxu0 %v510
  %652 = vmatprep.subr.bf16.mxu0 0
  %653 = vmatpush1.bf16.msra.mxu0 %v511
  %654 = vmatprep.subr.bf16.mxu0 0
  %655 = vmatpush1.bf16.msra.mxu0 %v512
  %656 = vmatprep.subr.bf16.mxu0 0
  %657 = vmatpush1.bf16.msra.mxu0 %v513
  %658 = vmatprep.mubr.bf16.mxu0 %v211
  %659 = vmatmul.mubr.bf16.gmra.mrb[0].mxu0 %v210
  %v660 = vpop.f32.mrb[0].mxu0
  %v661 = vadd.f32 0.0, %v660
  %v662 = vpop.f32.mrb[0].mxu0
  %v663 = vpop.f32.mrb[0].mxu0
  %v664 = vadd.f32 0.0, %v663
  %v665 = vpop.f32.mrb[0].mxu0
  %666 = vmatprep.mubr.bf16.mxu0 %v219
  %667 = vmatmul.mubr.bf16.gmra.mrb[0].mxu0 %v218
  %v668 = vpop.f32.mrb[0].mxu0
  %v669 = vadd.f32 0.0, %v668
  %v670 = vpop.f32.mrb[0].mxu0
  %v671 = vpop.f32.mrb[0].mxu0
  %v672 = vadd.f32 0.0, %v671
  %v673 = vpop.f32.mrb[0].mxu0
  %674 = vdwg.mxu0
  %675 = vmatprep.subr.bf16.mxu0 0
  %676 = vmatpush1.bf16.msra.mxu0 %v514
  %677 = vmatprep.subr.bf16.mxu0 0
  %678 = vmatpush1.bf16.msra.mxu0 %v515
  %679 = vmatprep.subr.bf16.mxu0 0
  %680 = vmatpush1.bf16.msra.mxu0 %v516
  %681 = vmatprep.subr.bf16.mxu0 0
  %682 = vmatpush1.bf16.msra.mxu0 %v517
  %683 = vmatprep.subr.bf16.mxu0 0
  %684 = vmatpush1.bf16.msra.mxu0 %v518
  %685 = vmatprep.subr.bf16.mxu0 0
  %686 = vmatpush1.bf16.msra.mxu0 %v519
  %687 = vmatprep.subr.bf16.mxu0 0
  %688 = vmatpush1.bf16.msra.mxu0 %v520
  %689 = vmatprep.subr.bf16.mxu0 0
  %690 = vmatpush1.bf16.msra.mxu0 %v521
  %691 = vmatprep.subr.bf16.mxu0 0
  %692 = vmatpush1.bf16.msra.mxu0 %v522
  %693 = vmatprep.subr.bf16.mxu0 0
  %694 = vmatpush1.bf16.msra.mxu0 %v523
  %695 = vmatprep.subr.bf16.mxu0 0
  %696 = vmatpush1.bf16.msra.mxu0 %v524
  %697 = vmatprep.subr.bf16.mxu0 0
  %698 = vmatpush1.bf16.msra.mxu0 %v525
  %699 = vmatprep.subr.bf16.mxu0 0
  %700 = vmatpush1.bf16.msra.mxu0 %v526
  %701 = vmatprep.subr.bf16.mxu0 0
  %702 = vmatpush1.bf16.msra.mxu0 %v527
  %703 = vmatprep.subr.bf16.mxu0 0
  %704 = vmatpush1.bf16.msra.mxu0 %v528
  %705 = vmatprep.subr.bf16.mxu0 0
  %706 = vmatpush1.bf16.msra.mxu0 %v529
  %707 = vmatprep.mubr.bf16.mxu0 %v213
  %708 = vmatmul.mubr.bf16.gmra.mrb[0].mxu0 %v212
  %v709 = vpop.f32.mrb[0].mxu0
  %v710 = vadd.f32 %v661, %v709
  %v711 = vpop.f32.mrb[0].mxu0
  %v712 = vpop.f32.mrb[0].mxu0
  %v713 = vadd.f32 %v664, %v712
  %v714 = vpop.f32.mrb[0].mxu0
  %715 = vmatprep.mubr.bf16.mxu0 %v221
  %716 = vmatmul.mubr.bf16.gmra.mrb[0].mxu0 %v220
  %v717 = vpop.f32.mrb[0].mxu0
  %v718 = vadd.f32 %v669, %v717
  %v719 = vpop.f32.mrb[0].mxu0
  %v720 = vpop.f32.mrb[0].mxu0
  %v721 = vadd.f32 %v672, %v720
  %v722 = vpop.f32.mrb[0].mxu0
  %723 = vdwg.mxu0
  %724 = vmatprep.subr.bf16.mxu0 0
  %725 = vmatpush1.bf16.msra.mxu0 %v530
  %726 = vmatprep.subr.bf16.mxu0 0
  %727 = vmatpush1.bf16.msra.mxu0 %v531
  %728 = vmatprep.subr.bf16.mxu0 0
  %729 = vmatpush1.bf16.msra.mxu0 %v532
  %730 = vmatprep.subr.bf16.mxu0 0
  %731 = vmatpush1.bf16.msra.mxu0 %v533
  %732 = vmatprep.subr.bf16.mxu0 0
  %733 = vmatpush1.bf16.msra.mxu0 %v534
  %734 = vmatprep.subr.bf16.mxu0 0
  %735 = vmatpush1.bf16.msra.mxu0 %v535
  %736 = vmatprep.subr.bf16.mxu0 0
  %737 = vmatpush1.bf16.msra.mxu0 %v536
  %738 = vmatprep.subr.bf16.mxu0 0
  %739 = vmatpush1.bf16.msra.mxu0 %v537
  %740 = vmatprep.subr.bf16.mxu0 0
  %741 = vmatpush1.bf16.msra.mxu0 %v538
  %742 = vmatprep.subr.bf16.mxu0 0
  %743 = vmatpush1.bf16.msra.mxu0 %v539
  %744 = vmatprep.subr.bf16.mxu0 0
  %745 = vmatpush1.bf16.msra.mxu0 %v540
  %746 = vmatprep.subr.bf16.mxu0 0
  %747 = vmatpush1.bf16.msra.mxu0 %v541
  %748 = vmatprep.subr.bf16.mxu0 0
  %749 = vmatpush1.bf16.msra.mxu0 %v542
  %750 = vmatprep.subr.bf16.mxu0 0
  %751 = vmatpush1.bf16.msra.mxu0 %v543
  %752 = vmatprep.subr.bf16.mxu0 0
  %753 = vmatpush1.bf16.msra.mxu0 %v544
  %754 = vmatprep.subr.bf16.mxu0 0
  %755 = vmatpush1.bf16.msra.mxu0 %v545
  %756 = vmatprep.mubr.bf16.mxu0 %v215
  %757 = vmatmul.mubr.bf16.gmra.mrb[0].mxu0 %v214
  %v758 = vpop.f32.mrb[0].mxu0
  %v759 = vadd.f32 %v710, %v758
  %v760 = vpop.f32.mrb[0].mxu0
  %v761 = vpop.f32.mrb[0].mxu0
  %v762 = vadd.f32 %v713, %v761
  %v763 = vpop.f32.mrb[0].mxu0
  %764 = vmatprep.mubr.bf16.mxu0 %v223
  %765 = vmatmul.mubr.bf16.gmra.mrb[0].mxu0 %v222
  %v766 = vpop.f32.mrb[0].mxu0
  %v767 = vadd.f32 %v718, %v766
  %v768 = vpop.f32.mrb[0].mxu0
  %v769 = vpop.f32.mrb[0].mxu0
  %v770 = vadd.f32 %v721, %v769
  %v771 = vpop.f32.mrb[0].mxu0
  %772 = vdwg.mxu0
  %773 = vmatprep.subr.bf16.mxu0 0
  %774 = vmatpush1.bf16.msra.mxu0 %v546
  %775 = vmatprep.subr.bf16.mxu0 0
  %776 = vmatpush1.bf16.msra.mxu0 %v547
  %777 = vmatprep.subr.bf16.mxu0 0
  %778 = vmatpush1.bf16.msra.mxu0 %v548
  %779 = vmatprep.subr.bf16.mxu0 0
  %780 = vmatpush1.bf16.msra.mxu0 %v549
  %781 = vmatprep.subr.bf16.mxu0 0
  %782 = vmatpush1.bf16.msra.mxu0 %v550
  %783 = vmatprep.subr.bf16.mxu0 0
  %784 = vmatpush1.bf16.msra.mxu0 %v551
  %785 = vmatprep.subr.bf16.mxu0 0
  %786 = vmatpush1.bf16.msra.mxu0 %v552
  %787 = vmatprep.subr.bf16.mxu0 0
  %788 = vmatpush1.bf16.msra.mxu0 %v553
  %789 = vmatprep.subr.bf16.mxu0 0
  %790 = vmatpush1.bf16.msra.mxu0 %v554
  %791 = vmatprep.subr.bf16.mxu0 0
  %792 = vmatpush1.bf16.msra.mxu0 %v555
  %793 = vmatprep.subr.bf16.mxu0 0
  %794 = vmatpush1.bf16.msra.mxu0 %v556
  %795 = vmatprep.subr.bf16.mxu0 0
  %796 = vmatpush1.bf16.msra.mxu0 %v557
  %797 = vmatprep.subr.bf16.mxu0 0
  %798 = vmatpush1.bf16.msra.mxu0 %v558
  %799 = vmatprep.subr.bf16.mxu0 0
  %800 = vmatpush1.bf16.msra.mxu0 %v559
  %801 = vmatprep.subr.bf16.mxu0 0
  %802 = vmatpush1.bf16.msra.mxu0 %v560
  %803 = vmatprep.subr.bf16.mxu0 0
  %804 = vmatpush1.bf16.msra.mxu0 %v561
  %805 = vmatprep.mubr.bf16.mxu0 %v217
  %806 = vmatmul.mubr.bf16.gmra.mrb[0].mxu0 %v216
  %v807 = vpop.f32.mrb[0].mxu0
  %v808 = vadd.f32 %v759, %v807
  %v809 = vpop.f32.mrb[0].mxu0
  %v810 = vpop.f32.mrb[0].mxu0
  %v811 = vadd.f32 %v762, %v810
  %v812 = vpop.f32.mrb[0].mxu0
  %813 = vmatprep.mubr.bf16.mxu0 %v225
  %814 = vmatmul.mubr.bf16.gmra.mrb[0].mxu0 %v224
  %v815 = vpop.f32.mrb[0].mxu0
  %v816 = vadd.f32 %v767, %v815
  %v817 = vpop.f32.mrb[0].mxu0
  %v818 = vpop.f32.mrb[0].mxu0
  %v819 = vadd.f32 %v770, %v818
  %v820 = vpop.f32.mrb[0].mxu0
  %821 = vdwg.mxu0
  %v822 = vadd.f32 %v808, %v811
  %v823 = vadd.f32 %v822, %v816
  %v824 = vadd.f32 %v823, %v819
  %v825 = vrot.slane %v824, 4
  %v826 = vadd.f32 %v824, %v825
  %v827 = vrot.slane %v826, 2
  %v828 = vadd.f32 %v826, %v827
  %v829 = vrot.slane %v828, 1
  %v830 = vadd.f32 %v828, %v829
  %v831 = vmul.f32 %v830, 0.055555556
  %v832 = vmul.f32 %v808, %v808
  %v833 = vmul.f32 %v811, %v811
  %v834 = vmul.f32 %v816, %v816
  %v835 = vmul.f32 %v819, %v819
  %v836 = vadd.f32 %v832, %v833
  %v837 = vadd.f32 %v836, %v834
  %v838 = vadd.f32 %v837, %v835
  %v839 = vrot.slane %v838, 4
  %v840 = vadd.f32 %v838, %v839
  %v841 = vrot.slane %v840, 2
  %v842 = vadd.f32 %v840, %v841
  %v843 = vrot.slane %v842, 1
  %v844 = vadd.f32 %v842, %v843
  %v845 = vmul.f32 %v844, 0.055555556
  %v846 = vmul.f32 %v831, %v831
  %v847 = vsub.f32 %v845, %v846
  %v848 = vmax.f32 %v847, 0.0
  %v849 = vld [vmem:[%s2] sm:$0x1]
  %v850 = vadd.f32 %v848, 1e-05
  %v851 = vrsqrt.pop %v850
  %v852 = vmul.f32 %v849, %v851
  %v853 = vld [vmem:[%s3] sm:$0x1]
  %v854 = vmul.f32 %v831, %v852
  %v855 = vsub.f32 %v853, %v854
  %v857 = vlaneseq
  %v858 = vshrl.u32 %v857, 7
  %v859 = vsub.s32 0, %v858
  %v860 = vrot.slane %v852, %v859
  %v862 = vmul.f32 %v808, %v860
  %v863 = vmul.f32 %v811, %v860
  %v864 = vmul.f32 %v816, %v860
  %v865 = vmul.f32 %v819, %v860
  %v867 = vlaneseq
  %v868 = vshrl.u32 %v867, 7
  %v869 = vsub.s32 0, %v868
  %v870 = vrot.slane %v855, %v869
  %v872 = vadd.f32 %v862, %v870
  %v873 = vadd.f32 %v863, %v870
  %v874 = vadd.f32 %v864, %v870
  %v875 = vadd.f32 %v865, %v870
  %vm876 = vcmp.ge.f32.partialorder %v872, 0.0
  %vm877 = vcmp.ge.f32.partialorder %v873, 0.0
  %vm878 = vcmp.ge.f32.partialorder %v874, 0.0
  %vm879 = vcmp.ge.f32.partialorder %v875, 0.0
  %v880 = vmul.f32 %v872, 0.2
  %v881 = vmul.f32 %v873, 0.2
  %v882 = vmul.f32 %v874, 0.2
  %v883 = vmul.f32 %v875, 0.2
  %v884 = vsel %vm876, %v872, %v880
  %v885 = vsel %vm877, %v873, %v881
  %v886 = vsel %vm878, %v874, %v882
  %v887 = vsel %vm879, %v875, %v883
  %v888 = vpack.c.bf16 %v885, %v884
  %v889 = vpack.c.bf16 %v887, %v886
  %v892 = vunpack.c.l.b16 %v888
  %v893 = vunpack.c.h.b16 %v888
  %v894 = vunpack.c.l.b16 %v889
  %v895 = vunpack.c.h.b16 %v889
  %v896 = vpack.c.b16 %v892, %v892
  %v897 = vpack.c.b16 %v893, %v893
  %v898 = vpack.c.b16 %v894, %v894
  %v899 = vpack.c.b16 %v895, %v895
  %904 = vst [vmem:[%s4] sm:$0xf] %v896
  %905 = vst [vmem:[%s4 + $0x4] sm:$0xf] %v897
  %906 = vst [vmem:[%s4 + $0x8] sm:$0xf] %v898
  %907 = vst [vmem:[%s4 + $0xc] sm:$0xf] %v899
  // Predicated region
  $region18: #{netd_forward.8} parent=0 // pred_check
    _
  $region19: #{netd_forward.8} parent=0 // pred_check_branch
    %909 = sbr.rel (0) target = $region21
  $region20: #{netd_forward.8} parent=0 // pred_region
    _
  $region21: #{netd_forward.8} parent=0 // pred_fallthru
    _
  // Predicated region
  $region22: #{netd_forward.8} parent=0 // pred_check
    _
  $region23: #{netd_forward.8} parent=0 // pred_check_branch
    %911 = sbr.rel (0) target = $region25
  $region24: #{netd_forward.8} parent=0 // pred_region
    _
  $region25: #{netd_forward.8} parent=0 // pred_fallthru
    _

// kernel: netd_forward.9
$region0: #{netd_forward.9}
  #allocation0 [shape = 'u32[]', space=smem, size = 0x4, offset = 0x4, fixed_abs, tag = 'smem constant byte address 0x4 - core index']
  #allocation1 [shape = 'u32[144,128]{1,0:T(1,128)}', space=vmem, size = 0x12000, scoped, tag = 'internal scratch']
  #allocation2 [shape = 'f32[1,1]{1,0:T(1,128)S(1)}', space=vmem, size = 0x200, scoped, tag = 'scoped memory for netd_forward.9']
  %s0 = inlined_call_operand.vmem [shape: bf16[16,2048], index: 0, kind: input, shape index: {}]
  %s1 = inlined_call_operand.vmem [shape: f32[1,2048], index: 1, kind: input, shape index: {}]
  %s2 = inlined_call_operand.<no memory space> [shape: f32[1,1], index: 2, kind: input, shape index: {}]
  %s3 = inlined_call_operand.vmem [shape: f32[16,1], index: 3, kind: output, shape index: {}]
  %s4 = sld [smem:[#allocation0]]
  $region22: #{netd_forward.9} parent=0
    _
  %s6 = ssub.s32 1, %s4
  %s7 = scalar_select 0, %s6, %s4
  %v8 = vstv %s2
  %9 = vst [vmem:[#allocation2] sm:$0x1] %v8
  // Predicated region
  $region2: #{netd_forward.9} parent=0 // pred_check
    _
  $region3: #{netd_forward.9} parent=0 // pred_check_branch
    %11 = sbr.rel (0) target = $region5
  $region4: #{netd_forward.9} parent=0 // pred_region
    _
  $region5: #{netd_forward.9} parent=0 // pred_fallthru
    _
  // Predicated region
  $region6: #{netd_forward.9} parent=0 // pred_check
    _
  $region7: #{netd_forward.9} parent=0 // pred_check_branch
    %13 = sbr.rel (0) target = $region9
  $region8: #{netd_forward.9} parent=0 // pred_region
    _
  $region9: #{netd_forward.9} parent=0 // pred_fallthru
    _
  // Predicated region
  $region10: #{netd_forward.9} parent=0 // pred_check
    _
  $region11: #{netd_forward.9} parent=0 // pred_check_branch
    %15 = sbr.rel (0) target = $region13
  $region12: #{netd_forward.9} parent=0 // pred_region
    _
  $region13: #{netd_forward.9} parent=0 // pred_fallthru
    _
  %v16 = vld [vmem:[%s0] sm:$0xff]
  %v17 = vld [vmem:[%s0 + $0x8] sm:$0xff]
  %v18 = vld [vmem:[%s0 + $0x10] sm:$0xff]
  %v19 = vld [vmem:[%s0 + $0x18] sm:$0xff]
  %v20 = vld [vmem:[%s0 + $0x20] sm:$0xff]
  %v21 = vld [vmem:[%s0 + $0x28] sm:$0xff]
  %v22 = vld [vmem:[%s0 + $0x30] sm:$0xff]
  %v23 = vld [vmem:[%s0 + $0x38] sm:$0xff]
  %v24 = vld [vmem:[%s0 + $0x40] sm:$0xff]
  %v25 = vld [vmem:[%s0 + $0x48] sm:$0xff]
  %v26 = vld [vmem:[%s0 + $0x50] sm:$0xff]
  %v27 = vld [vmem:[%s0 + $0x58] sm:$0xff]
  %v28 = vld [vmem:[%s0 + $0x60] sm:$0xff]
  %v29 = vld [vmem:[%s0 + $0x68] sm:$0xff]
  %v30 = vld [vmem:[%s0 + $0x70] sm:$0xff]
  %v31 = vld [vmem:[%s0 + $0x78] sm:$0xff]
  %v32 = vunpack.c.l.bf16 %v16
  %v33 = vunpack.c.h.bf16 %v16
  %v34 = vunpack.c.l.bf16 %v17
  %v35 = vunpack.c.h.bf16 %v17
  %v36 = vunpack.c.l.bf16 %v18
  %v37 = vunpack.c.h.bf16 %v18
  %v38 = vunpack.c.l.bf16 %v19
  %v39 = vunpack.c.h.bf16 %v19
  %v40 = vunpack.c.l.bf16 %v20
  %v41 = vunpack.c.h.bf16 %v20
  %v42 = vunpack.c.l.bf16 %v21
  %v43 = vunpack.c.h.bf16 %v21
  %v44 = vunpack.c.l.bf16 %v22
  %v45 = vunpack.c.h.bf16 %v22
  %v46 = vunpack.c.l.bf16 %v23
  %v47 = vunpack.c.h.bf16 %v23
  %v48 = vunpack.c.l.bf16 %v24
  %v49 = vunpack.c.h.bf16 %v24
  %v50 = vunpack.c.l.bf16 %v25
  %v51 = vunpack.c.h.bf16 %v25
  %v52 = vunpack.c.l.bf16 %v26
  %v53 = vunpack.c.h.bf16 %v26
  %v54 = vunpack.c.l.bf16 %v27
  %v55 = vunpack.c.h.bf16 %v27
  %v56 = vunpack.c.l.bf16 %v28
  %v57 = vunpack.c.h.bf16 %v28
  %v58 = vunpack.c.l.bf16 %v29
  %v59 = vunpack.c.h.bf16 %v29
  %v60 = vunpack.c.l.bf16 %v30
  %v61 = vunpack.c.h.bf16 %v30
  %v62 = vunpack.c.l.bf16 %v31
  %v63 = vunpack.c.h.bf16 %v31
  %v64 = vld [vmem:[%s1] sm:$0xff]
  %v65 = vld [vmem:[%s1 + $0x8] sm:$0xff]
  %v68 = vlaneseq
  %v69 = vshrl.u32 %v68, 7
  %v70 = vsub.s32 0, %v69
  %v71 = vrot.slane %v64, %v70
  %v72 = vlaneseq
  %v73 = vshrl.u32 %v72, 7
  %v74 = vsub.s32 1, %v73
  %v75 = vrot.slane %v64, %v74
  %v76 = vlaneseq
  %v77 = vshrl.u32 %v76, 7
  %v78 = vsub.s32 2, %v77
  %v79 = vrot.slane %v64, %v78
  %v80 = vlaneseq
  %v81 = vshrl.u32 %v80, 7
  %v82 = vsub.s32 3, %v81
  %v83 = vrot.slane %v64, %v82
  %v84 = vlaneseq
  %v85 = vshrl.u32 %v84, 7
  %v86 = vsub.s32 4, %v85
  %v87 = vrot.slane %v64, %v86
  %v88 = vlaneseq
  %v89 = vshrl.u32 %v88, 7
  %v90 = vsub.s32 5, %v89
  %v91 = vrot.slane %v64, %v90
  %v92 = vlaneseq
  %v93 = vshrl.u32 %v92, 7
  %v94 = vsub.s32 6, %v93
  %v95 = vrot.slane %v64, %v94
  %v96 = vlaneseq
  %v97 = vshrl.u32 %v96, 7
  %v98 = vsub.s32 7, %v97
  %v99 = vrot.slane %v64, %v98
  %v100 = vlaneseq
  %v101 = vshrl.u32 %v100, 7
  %v102 = vsub.s32 0, %v101
  %v103 = vrot.slane %v65, %v102
  %v104 = vlaneseq
  %v105 = vshrl.u32 %v104, 7
  %v106 = vsub.s32 1, %v105
  %v107 = vrot.slane %v65, %v106
  %v108 = vlaneseq
  %v109 = vshrl.u32 %v108, 7
  %v110 = vsub.s32 2, %v109
  %v111 = vrot.slane %v65, %v110
  %v112 = vlaneseq
  %v113 = vshrl.u32 %v112, 7
  %v114 = vsub.s32 3, %v113
  %v115 = vrot.slane %v65, %v114
  %v116 = vlaneseq
  %v117 = vshrl.u32 %v116, 7
  %v118 = vsub.s32 4, %v117
  %v119 = vrot.slane %v65, %v118
  %v120 = vlaneseq
  %v121 = vshrl.u32 %v120, 7
  %v122 = vsub.s32 5, %v121
  %v123 = vrot.slane %v65, %v122
  %v124 = vlaneseq
  %v125 = vshrl.u32 %v124, 7
  %v126 = vsub.s32 6, %v125
  %v127 = vrot.slane %v65, %v126
  %v128 = vlaneseq
  %v129 = vshrl.u32 %v128, 7
  %v130 = vsub.s32 7, %v129
  %v131 = vrot.slane %v65, %v130
  %v148 = vmul.f32 %v32, %v71
  %v149 = vmul.f32 %v33, %v75
  %v150 = vmul.f32 %v34, %v79
  %v151 = vmul.f32 %v35, %v83
  %v152 = vmul.f32 %v36, %v87
  %v153 = vmul.f32 %v37, %v91
  %v154 = vmul.f32 %v38, %v95
  %v155 = vmul.f32 %v39, %v99
  %v156 = vmul.f32 %v40, %v103
  %v157 = vmul.f32 %v41, %v107
  %v158 = vmul.f32 %v42, %v111
  %v159 = vmul.f32 %v43, %v115
  %v160 = vmul.f32 %v44, %v119
  %v161 = vmul.f32 %v45, %v123
  %v162 = vmul.f32 %v46, %v127
  %v163 = vmul.f32 %v47, %v131
  %v164 = vmul.f32 %v48, %v71
  %v165 = vmul.f32 %v49, %v75
  %v166 = vmul.f32 %v50, %v79
  %v167 = vmul.f32 %v51, %v83
  %v168 = vmul.f32 %v52, %v87
  %v169 = vmul.f32 %v53, %v91
  %v170 = vmul.f32 %v54, %v95
  %v171 = vmul.f32 %v55, %v99
  %v172 = vmul.f32 %v56, %v103
  %v173 = vmul.f32 %v57, %v107
  %v174 = vmul.f32 %v58, %v111
  %v175 = vmul.f32 %v59, %v115
  %v176 = vmul.f32 %v60, %v119
  %v177 = vmul.f32 %v61, %v123
  %v178 = vmul.f32 %v62, %v127
  %v179 = vmul.f32 %v63, %v131
  %v180 = vadd.f32 %v148, %v149
  %v181 = vadd.f32 %v180, %v150
  %v182 = vadd.f32 %v181, %v151
  %v183 = vadd.f32 %v182, %v152
  %v184 = vadd.f32 %v183, %v153
  %v185 = vadd.f32 %v184, %v154
  %v186 = vadd.f32 %v185, %v155
  %v187 = vadd.f32 %v186, %v156
  %v188 = vadd.f32 %v187, %v157
  %v189 = vadd.f32 %v188, %v158
  %v190 = vadd.f32 %v189, %v159
  %v191 = vadd.f32 %v190, %v160
  %v192 = vadd.f32 %v191, %v161
  %v193 = vadd.f32 %v192, %v162
  %v194 = vadd.f32 %v193, %v163
  %195 = vadd.xlane.f32.xlu0 %v194
  %v196 = vpop.xlane.xlu0 %195
  %v197 = vadd.f32 %v164, %v165
  %v198 = vadd.f32 %v197, %v166
  %v199 = vadd.f32 %v198, %v167
  %v200 = vadd.f32 %v199, %v168
  %v201 = vadd.f32 %v200, %v169
  %v202 = vadd.f32 %v201, %v170
  %v203 = vadd.f32 %v202, %v171
  %v204 = vadd.f32 %v203, %v172
  %v205 = vadd.f32 %v204, %v173
  %v206 = vadd.f32 %v205, %v174
  %v207 = vadd.f32 %v206, %v175
  %v208 = vadd.f32 %v207, %v176
  %v209 = vadd.f32 %v208, %v177
  %v210 = vadd.f32 %v209, %v178
  %v211 = vadd.f32 %v210, %v179
  %212 = vadd.xlane.f32.xlu0 %v211
  %v213 = vpop.xlane.xlu0 %212
  %v214 = vld [vmem:[#allocation2] sm:$0x1]
  %v216 = vlaneseq
  %v217 = vshrl.u32 %v216, 7
  %v218 = vsub.s32 0, %v217
  %v219 = vrot.slane %v214, %v218
  %v221 = vadd.f32 %v196, %v219
  %v222 = vadd.f32 %v213, %v219
  %vm223 = vcmask 7168
  %224 = vst.msk [vmem:[%s3] sm:$0xff] %vm223, %v221
  %225 = vst.msk [vmem:[%s3 + $0x8] sm:$0xff] %vm223, %v222
  // Predicated region
  $region14: #{netd_forward.9} parent=0 // pred_check
    _
  $region15: #{netd_forward.9} parent=0 // pred_check_branch
    %227 = sbr.rel (0) target = $region17
  $region16: #{netd_forward.9} parent=0 // pred_region
    _
  $region17: #{netd_forward.9} parent=0 // pred_fallthru
    _
  // Predicated region
  $region18: #{netd_forward.9} parent=0 // pred_check
    _
  $region19: #{netd_forward.9} parent=0 // pred_check_branch
    %229 = sbr.rel (0) target = $region21
  $region20: #{netd_forward.9} parent=0 // pred_region
    _
  $region21: #{netd_forward.9} parent=0 // pred_fallthru
    _

</llo_original>
